<compile_context>
chip_gen: v7x
topology: tpu7x:2x2x1
jax: 0.10.0
libtpu: 0.0.40
codegen_flags: <defaults>
</compile_context>

<pallas_src>
import functools

import jax
import jax.numpy as jnp
from jax import lax
from jax.experimental import pallas as pl
from jax.experimental.pallas import tpu as pltpu

F32 = jnp.float32
BF16 = jnp.bfloat16
NEG_INF = -1e30


# ----------------------------------------------------------------------------
# tiling helpers
# ----------------------------------------------------------------------------
def _row_block(n, target=512):
    """Largest row tile <= target that divides n and is a multiple of 8 (else n)."""
    if n <= target:
        return n
    r = (target // 8) * 8
    while r >= 8:
        if n % r == 0:
            return r
        r -= 8
    return n


def _batch_block(b, target):
    """Largest batch tile <= target that divides b and is a multiple of 8 (else b)."""
    if b <= target:
        return b
    c = (target // 8) * 8
    while c >= 8:
        if b % c == 0:
            return c
        c -= 8
    return b


# ----------------------------------------------------------------------------
# Pallas kernels
# ----------------------------------------------------------------------------
def _linear_kernel(x_ref, wT_ref, b_ref, o_ref):
    x = x_ref[...].astype(wT_ref.dtype)                      # bf16 MXU operands
    o_ref[...] = (jnp.dot(x, wT_ref[...], preferred_element_type=F32)
                  + b_ref[...])                              # f32 accumulate


def pallas_linear_rows(x, wT, b):
    """x: (N, K) f32; wT: (K, M) bf16; b: (1, M) f32 -> (N, M) f32. Row-tiled."""
    n, k = x.shape
    m = wT.shape[1]
    r = _row_block(n)
    return pl.pallas_call(
        _linear_kernel,
        out_shape=jax.ShapeDtypeStruct((n, m), F32),
        grid=(n // r,),
        in_specs=[pl.BlockSpec((r, k), lambda i: (i, 0)),
                  pl.BlockSpec((k, m), lambda i: (0, 0)),
                  pl.BlockSpec((1, m), lambda i: (0, 0))],
        out_specs=pl.BlockSpec((r, m), lambda i: (i, 0)),
        compiler_params=pltpu.CompilerParams(dimension_semantics=("parallel",)),
    )(x, wT, b)


def _emb_proj_hwy_kernel(x_ref, pw_ref, wt0_ref, bt0_ref, wg0_ref, bg0_ref,
                         wt1_ref, bt1_ref, wg1_ref, bg1_ref, o_ref):
    # fused: projection (no bias) + two highway layers
    x = jnp.dot(x_ref[...].astype(pw_ref.dtype), pw_ref[...],
                preferred_element_type=F32)
    for wt, bt, wg, bg in ((wt0_ref, bt0_ref, wg0_ref, bg0_ref),
                           (wt1_ref, bt1_ref, wg1_ref, bg1_ref)):
        xb = x.astype(wt.dtype)
        t = jnp.maximum(jnp.dot(xb, wt[...], preferred_element_type=F32)
                        + bt[...], 0.0)
        g = jax.nn.sigmoid(jnp.dot(xb, wg[...], preferred_element_type=F32)
                           + bg[...])
        x = g * t + (1.0 - g) * x
    o_ref[...] = x


def pallas_emb_proj_hwy(x, p):
    n, e = x.shape
    h = p["proj_wT"].shape[1]
    r = _row_block(n)
    hw0, hw1 = p["hwy"]
    const = lambda shape: pl.BlockSpec(shape, lambda i: (0, 0))
    return pl.pallas_call(
        _emb_proj_hwy_kernel,
        out_shape=jax.ShapeDtypeStruct((n, h), F32),
        grid=(n // r,),
        in_specs=[pl.BlockSpec((r, e), lambda i: (i, 0)),
                  const((e, h)),
                  const((h, h)), const((1, h)), const((h, h)), const((1, h)),
                  const((h, h)), const((1, h)), const((h, h)), const((1, h))],
        out_specs=pl.BlockSpec((r, h), lambda i: (i, 0)),
        compiler_params=pltpu.CompilerParams(dimension_semantics=("parallel",)),
    )(x, p["proj_wT"],
      hw0["wtT"], hw0["bt"], hw0["wgT"], hw0["bg"],
      hw1["wtT"], hw1["bt"], hw1["wgT"], hw1["bg"])


def _bilstm_kernel(xg_ref, whh_ref, mask_ref, dirm_ref, halfm_ref, of_ref, ob_ref):
    # xg_ref:    (T, B, 8H) f32 gate pre-activations (incl. both biases),
    #            per-gate interleaved columns [i_f i_b f_f f_b g_f g_b o_f o_b]
    # whh_ref:   (2H, 8H) bf16 block-structured so [h_f | h_b] @ whh matches layout
    # mask_ref:  (T, B, 1) f32, 1 = valid token
    # dirm_ref:  (1, 8H)   f32, 1 on forward-direction columns
    # halfm_ref: (1, 2H)   f32, 1 on forward half of the state
    T, B, G = xg_ref.shape
    H = G // 8
    whh = whh_ref[...]
    dirm = dirm_ref[...]
    halfm = halfm_ref[...]

    def step(s, carry):
        h, c = carry                                         # (B, 2H) f32
        tr = T - 1 - s
        # forward direction consumes time s, backward consumes time T-1-s
        g_in = dirm * xg_ref[s] + (1.0 - dirm) * xg_ref[tr]  # (B, 8H)
        gates = g_in + jnp.dot(h.astype(whh.dtype), whh,
                               preferred_element_type=F32)
        i = jax.nn.sigmoid(gates[:, 0 * H:2 * H])
        f = jax.nn.sigmoid(gates[:, 2 * H:4 * H])
        g = jnp.tanh(gates[:, 4 * H:6 * H])
        o = jax.nn.sigmoid(gates[:, 6 * H:8 * H])
        c_new = f * c + i * g
        h_new = o * jnp.tanh(c_new)
        vf = mask_ref[s]                                     # (B, 1)
        vb = mask_ref[tr]                                    # (B, 1)
        v = halfm * vf + (1.0 - halfm) * vb                  # (B, 2H)
        of_ref[s] = vf * h_new[:, :H]                        # padded steps -> 0
        ob_ref[tr] = vb * h_new[:, H:]
        return v * h_new + (1.0 - v) * h, v * c_new + (1.0 - v) * c

    z = jnp.zeros((B, 2 * H), F32)
    lax.fori_loop(0, T, step, (z, z))


def pallas_bilstm(xg_tbg, w_hh_T, mask_tb1):
    """Fused bidirectional LSTM scan.  xg_tbg: (T, B, 8H); returns two (T, B, H)."""
    T, B, G = xg_tbg.shape
    H = G // 8
    dir_mask = jnp.tile(
        jnp.concatenate([jnp.ones((1, H), F32), jnp.zeros((1, H), F32)], axis=1),
        (1, 4))                                              # (1, 8H)
    half_mask = jnp.concatenate(
        [jnp.ones((1, H), F32), jnp.zeros((1, H), F32)], axis=1)  # (1, 2H)
    # TODO(synk): for very long sequences chunk the time axis with a grid and
    # carry h/c in VMEM scratch so the whole gate tensor need not sit in VMEM.
    return pl.pallas_call(
        _bilstm_kernel,
        out_shape=(jax.ShapeDtypeStruct((T, B, H), F32),
                   jax.ShapeDtypeStruct((T, B, H), F32)),
    )(xg_tbg, w_hh_T, mask_tb1, dir_mask, half_mask)


def _attention_kernel(c_ref, q_ref, cm_ref, qm_ref, cw_ref, qw_ref, cqw_ref,
                      b_ref, o_ref):
    c = c_ref[...]                                           # (bb, Lc, D) f32
    q = q_ref[...]                                           # (bb, Lq, D) f32
    cm = cm_ref[...]                                         # (bb, Lc, 1)
    qm = qm_ref[...]                                         # (bb, 1, Lq)
    D = c.shape[-1]
    cb = c.astype(BF16)
    qb = q.astype(BF16)

    # similarity matrix: width-1 matmuls replaced by VPU reductions
    s0 = jnp.sum(c * cw_ref[...][None], axis=-1, keepdims=True)      # (bb, Lc, 1)
    s1 = jnp.sum(q * qw_ref[...][None], axis=-1)[:, None, :]         # (bb, 1, Lq)
    s2 = jnp.einsum('bcd,bqd->bcq', (c * cqw_ref[...][None]).astype(BF16), qb,
                    preferred_element_type=F32)                      # (bb, Lc, Lq)
    s = s0 + s1 + s2 + b_ref[...]

    # masked softmax over the question axis (torch dim=2), all f32
    l1 = qm * s + (1.0 - qm) * NEG_INF
    p1 = jnp.exp(l1 - jnp.max(l1, axis=2, keepdims=True))
    p1 = p1 * pl.reciprocal(jnp.sum(p1, axis=2, keepdims=True), approx=True)

    # masked softmax over the context axis (torch dim=1)
    l2 = cm * s + (1.0 - cm) * NEG_INF
    p2 = jnp.exp(l2 - jnp.max(l2, axis=1, keepdims=True))
    p2 = p2 * pl.reciprocal(jnp.sum(p2, axis=1, keepdims=True), approx=True)

    p1b = p1.astype(BF16)
    a = jnp.einsum('bcq,bqd->bcd', p1b, qb, preferred_element_type=F32)
    ss = jnp.einsum('bcq,bkq->bck', p1b, p2.astype(BF16),
                    preferred_element_type=F32)
    bm = jnp.einsum('bck,bkd->bcd', ss.astype(BF16), cb,
                    preferred_element_type=F32)

    # fused torch.cat([c, a, c*a, c*b], dim=2)
    o_ref[:, :, 0 * D:1 * D] = c
    o_ref[:, :, 1 * D:2 * D] = a
    o_ref[:, :, 2 * D:3 * D] = c * a
    o_ref[:, :, 3 * D:4 * D] = c * bm


def pallas_bidaf_attention(c, q, c_mask, q_mask, ap):
    B, Lc, D = c.shape
    Lq = q.shape[1]
    bb = _batch_block(B, 4)
    cm = c_mask.astype(F32).reshape(B, Lc, 1)
    qm = q_mask.astype(F32).reshape(B, 1, Lq)
    return pl.pallas_call(
        _attention_kernel,
        out_shape=jax.ShapeDtypeStruct((B, Lc, 4 * D), F32),
        grid=(B // bb,),
        in_specs=[
            pl.BlockSpec((bb, Lc, D), lambda i: (i, 0, 0)),
            pl.BlockSpec((bb, Lq, D), lambda i: (i, 0, 0)),
            pl.BlockSpec((bb, Lc, 1), lambda i: (i, 0, 0)),
            pl.BlockSpec((bb, 1, Lq), lambda i: (i, 0, 0)),
            pl.BlockSpec((1, D), lambda i: (0, 0)),
            pl.BlockSpec((1, D), lambda i: (0, 0)),
            pl.BlockSpec((1, D), lambda i: (0, 0)),
            pl.BlockSpec((1, 1), lambda i: (0, 0)),
        ],
        out_specs=pl.BlockSpec((bb, Lc, 4 * D), lambda i: (i, 0, 0)),
        compiler_params=pltpu.CompilerParams(dimension_semantics=("parallel",)),
    )(c, q, cm, qm, ap["c_w"], ap["q_w"], ap["cq_w"], ap["bias"])


def _pointer_kernel(att_ref, mod_ref, wa_ref, wm_ref, b_ref, m_ref, o_ref):
    # lane-dense (bb, Lc) logits via VPU reductions (no width-1 matmuls),
    # fused with the masked log-softmax over the context axis.
    logits = (jnp.sum(att_ref[...] * wa_ref[...][None], axis=-1)
              + jnp.sum(mod_ref[...] * wm_ref[...][None], axis=-1)
              + b_ref[...])                                   # (bb, Lc)
    mask = m_ref[...]
    x = mask * logits + (1.0 - mask) * NEG_INF
    mx = jnp.max(x, axis=-1, keepdims=True)
    lse = jnp.log(jnp.sum(jnp.exp(x - mx), axis=-1, keepdims=True)) + mx
    o_ref[...] = x - lse


def pallas_pointer(att, mod, w_att, w_mod, bias, maskf):
    B, Lc, A = att.shape
    M = mod.shape[2]
    bb = _batch_block(B, 8)
    return pl.pallas_call(
        _pointer_kernel,
        out_shape=jax.ShapeDtypeStruct((B, Lc), F32),
        grid=(B // bb,),
        in_specs=[
            pl.BlockSpec((bb, Lc, A), lambda i: (i, 0, 0)),
            pl.BlockSpec((bb, Lc, M), lambda i: (i, 0, 0)),
            pl.BlockSpec((1, A), lambda i: (0, 0)),
            pl.BlockSpec((1, M), lambda i: (0, 0)),
            pl.BlockSpec((1, 1), lambda i: (0, 0)),
            pl.BlockSpec((bb, Lc), lambda i: (i, 0)),
        ],
        out_specs=pl.BlockSpec((bb, Lc), lambda i: (i, 0)),
        compiler_params=pltpu.CompilerParams(dimension_semantics=("parallel",)),
    )(att, mod, w_att, w_mod, bias, maskf)


# ----------------------------------------------------------------------------
# Model composition (plain-JAX glue around the Pallas kernels)
# ----------------------------------------------------------------------------
def embedding_fwd(p, idxs):
    B, L = idxs.shape
    # TODO(synk): data-dependent embedding row gather stays in plain JAX.
    emb = jnp.take(p["word_vectors"], idxs, axis=0)          # (B, L, E)
    x = pallas_emb_proj_hwy(emb.reshape(B * L, -1), p)       # fused proj + highway
    return x.reshape(B, L, -1)


def _bilstm_layer_tm(x_tbd, mask_tb1, lp):
    """One bidirectional LSTM layer in time-major layout.  (T,B,D) -> (T,B,2H)."""
    T, B, D = x_tbd.shape
    G = lp["w_ih_T"].shape[1]                                # 8H (both directions)
    xg = pallas_linear_rows(x_tbd.reshape(T * B, D), lp["w_ih_T"], lp["b"])
    hf, hb = pallas_bilstm(xg.reshape(T, B, G), lp["w_hh_T"], mask_tb1)
    return jnp.concatenate([hf, hb], axis=-1)


def rnn_encoder(p, x_btd, lengths):
    # pack_padded/pad_packed semantics reproduced in-kernel via the mask
    B, T, _ = x_btd.shape
    mask_tb1 = (jnp.arange(T)[:, None] < lengths[None, :]).astype(F32)[:, :, None]
    h = jnp.transpose(x_btd, (1, 0, 2))                      # time-major once
    for lp in p["layers"]:
        h = _bilstm_layer_tm(h, mask_tb1, lp)
    return jnp.transpose(h, (1, 0, 2))                       # (B, T, 2H)


def bidaf_output(p, att, mod, c_mask):
    maskf = c_mask.astype(F32)
    lengths = c_mask.sum(-1).astype(jnp.int32)
    log_p1 = pallas_pointer(att, mod, p["w_att1"], p["w_mod1"], p["b1"], maskf)
    mod_2 = rnn_encoder(p["rnn"], mod, lengths)
    log_p2 = pallas_pointer(att, mod_2, p["w_att2"], p["w_mod2"], p["b2"], maskf)
    return log_p1, log_p2


def bidaf_forward(params, cw_idxs, qw_idxs):
    c_mask = cw_idxs != 0
    q_mask = qw_idxs != 0
    c_len = c_mask.sum(-1).astype(jnp.int32)
    q_len = q_mask.sum(-1).astype(jnp.int32)

    c_emb = embedding_fwd(params["emb"], cw_idxs)            # (B, Lc, H)
    q_emb = embedding_fwd(params["emb"], qw_idxs)            # (B, Lq, H)
    c_enc = rnn_encoder(params["enc"], c_emb, c_len)         # (B, Lc, 2H)
    q_enc = rnn_encoder(params["enc"], q_emb, q_len)         # (B, Lq, 2H)
    att = pallas_bidaf_attention(c_enc, q_enc, c_mask, q_mask, params["att"])
    mod = rnn_encoder(params["mod"], att, c_len)             # (B, Lc, 2H)
    return bidaf_output(params["out"], att, mod, c_mask)


# ----------------------------------------------------------------------------
# Parameter packing (torch-layout -> kernel-ready layout; done once, host-side)
# ----------------------------------------------------------------------------
def _pack_bilstm(pf, pb):
    """Interleaved-gate packing for the fused bidirectional LSTM kernel.

    8H gate columns: [i_f i_b f_f f_b g_f g_b o_f o_b]; state h = [h_f | h_b].
    """
    h4, _ = pf["w_ih"].shape
    h = h4 // 4

    def interleave(wf, wb):                                  # (4H, X) x2 -> (8H, X)
        return jnp.concatenate([wf.reshape(4, h, -1), wb.reshape(4, h, -1)],
                               axis=1).reshape(8 * h, -1)

    w_ih = interleave(pf["w_ih"], pb["w_ih"])                               # (8H, D)
    bias = interleave((pf["b_ih"] + pf["b_hh"]).reshape(h4, 1),
                      (pb["b_ih"] + pb["b_hh"]).reshape(h4, 1))             # (8H, 1)

    wf4 = pf["w_hh"].reshape(4, h, h)
    wb4 = pb["w_hh"].reshape(4, h, h)
    zero = jnp.zeros((h, h), F32)
    cols = []
    for k in range(4):
        cols.append(jnp.concatenate([wf4[k].T, zero], axis=0))              # from h_f
        cols.append(jnp.concatenate([zero, wb4[k].T], axis=0))              # from h_b
    w_hh_T = jnp.concatenate(cols, axis=1)                                  # (2H, 8H)

    return {"w_ih_T": w_ih.T.astype(BF16),
            "b": bias.reshape(1, 8 * h).astype(F32),
            "w_hh_T": w_hh_T.astype(BF16)}


def pack_params(p):
    def pack_rnn(rp):
        return {"layers": [_pack_bilstm(l["fwd"], l["bwd"]) for l in rp["layers"]]}

    emb = {
        "word_vectors": p["emb"]["word_vectors"].astype(F32),
        "proj_wT": p["emb"]["proj_w"].T.astype(BF16),
        "hwy": [{"wtT": hw["wt"].T.astype(BF16),
                 "bt": hw["bt"].reshape(1, -1).astype(F32),
                 "wgT": hw["wg"].T.astype(BF16),
                 "bg": hw["bg"].reshape(1, -1).astype(F32)}
                for hw in p["emb"]["hwy"]],
    }
    att = {
        "c_w": p["att"]["c_weight"].reshape(1, -1).astype(F32),
        "q_w": p["att"]["q_weight_row"].reshape(1, -1).astype(F32),
        "cq_w": p["att"]["cq_weight"].reshape(1, -1).astype(F32),
        "bias": p["att"]["bias"].reshape(1, 1).astype(F32),
    }
    out = {
        "w_att1": p["out"]["att_w1"].reshape(1, -1).astype(F32),
        "w_mod1": p["out"]["mod_w1"].reshape(1, -1).astype(F32),
        "b1": (p["out"]["att_b1"] + p["out"]["mod_b1"]).reshape(1, 1).astype(F32),
        "w_att2": p["out"]["att_w2"].reshape(1, -1).astype(F32),
        "w_mod2": p["out"]["mod_w2"].reshape(1, -1).astype(F32),
        "b2": (p["out"]["att_b2"] + p["out"]["mod_b2"]).reshape(1, 1).astype(F32),
        "rnn": pack_rnn(p["out"]["rnn"]),
    }
    return {"emb": emb, "enc": pack_rnn(p["enc"]), "att": att,
            "mod": pack_rnn(p["mod"]), "out": out}


# ----------------------------------------------------------------------------
# Deterministic synthetic parameters (torch nn.Module layout)
# ----------------------------------------------------------------------------
def init_params(key, vocab, emb_dim, hidden):
    keys = iter(jax.random.split(key, 256))

    def rnd(shape, scale=0.1):
        return (scale * jax.random.normal(next(keys), shape)).astype(F32)

    def lstm_dir(in_dim, h):
        return {"w_ih": rnd((4 * h, in_dim)), "w_hh": rnd((4 * h, h)),
                "b_ih": rnd((4 * h,)), "b_hh": rnd((4 * h,))}

    def lstm_layer(in_dim, h):
        return {"fwd": lstm_dir(in_dim, h), "bwd": lstm_dir(in_dim, h)}

    H = hidden
    return {
        "emb": {
            "word_vectors": rnd((vocab, emb_dim), 1.0),
            "proj_w": rnd((H, emb_dim)),
            "hwy": [{"wt": rnd((H, H)), "bt": rnd((H,)),
                     "wg": rnd((H, H)), "bg": rnd((H,))} for _ in range(2)],
        },
        "enc": {"layers": [lstm_layer(H, H)]},
        "att": {
            "c_weight": rnd((2 * H, 1)),
            "q_weight_row": rnd((1, 2 * H)),   # = torch q_weight (2H,1) transposed
            "cq_weight": rnd((1, 2 * H)),      # = torch cq_weight (1,1,2H) squeezed
            "bias": rnd((1, 1)),
        },
        "mod": {"layers": [lstm_layer(8 * H, H), lstm_layer(2 * H, H)]},
        "out": {
            "att_w1": rnd((1, 8 * H)), "att_b1": rnd((1,)),
            "mod_w1": rnd((1, 2 * H)), "mod_b1": rnd((1,)),
            "rnn": {"layers": [lstm_layer(2 * H, H)]},
            "att_w2": rnd((1, 8 * H)), "att_b2": rnd((1,)),
            "mod_w2": rnd((1, 2 * H)), "mod_b2": rnd((1,)),
        },
    }


if __name__ == "__main__":
    VOCAB, EMB_DIM, HIDDEN = 40, 24, 16
    B, LC, LQ = 2, 12, 8

    key = jax.random.PRNGKey(0)
    k_param, k_c, k_q = jax.random.split(key, 3)
    params = init_params(k_param, VOCAB, EMB_DIM, HIDDEN)
    packed = pack_params(params)

    cw_idxs = jax.random.randint(k_c, (B, LC), 1, VOCAB)
    qw_idxs = jax.random.randint(k_q, (B, LQ), 1, VOCAB)
    # pad the tail of the second example with index 0 (like a real SQuAD batch)
    cw_idxs = cw_idxs.at[1, 9:].set(0)
    qw_idxs = qw_idxs.at[1, 6:].set(0)

    fwd = jax.jit(functools.partial(bidaf_forward, packed))
    log_p1, log_p2 = fwd(cw_idxs, qw_idxs)
    jax.block_until_ready((log_p1, log_p2))

    # sanity: shapes + proper (masked) distributions
    assert log_p1.shape == (B, LC) and log_p2.shape == (B, LC)
    assert bool(jnp.all(jnp.isfinite(log_p1)) & jnp.all(jnp.isfinite(log_p2)))
    s1 = jnp.exp(log_p1).sum(-1)
    s2 = jnp.exp(log_p2).sum(-1)
    assert bool(jnp.allclose(s1, 1.0, atol=1e-3) & jnp.allclose(s2, 1.0, atol=1e-3))
    print("KERNEL_OK")
</pallas_src>

<mosaic_0001>
module attributes {stable_mosaic.version = 11 : i64} {
  func.func @_emb_proj_hwy_kernel(%arg0: i32, %arg1: memref<24x24xf32, #tpu.memory_space<vmem>>, %arg2: memref<24x16xbf16, #tpu.memory_space<vmem>>, %arg3: memref<16x16xbf16, #tpu.memory_space<vmem>>, %arg4: memref<1x16xf32, #tpu.memory_space<vmem>>, %arg5: memref<16x16xbf16, #tpu.memory_space<vmem>>, %arg6: memref<1x16xf32, #tpu.memory_space<vmem>>, %arg7: memref<16x16xbf16, #tpu.memory_space<vmem>>, %arg8: memref<1x16xf32, #tpu.memory_space<vmem>>, %arg9: memref<16x16xbf16, #tpu.memory_space<vmem>>, %arg10: memref<1x16xf32, #tpu.memory_space<vmem>>, %arg11: memref<24x16xf32, #tpu.memory_space<vmem>>) attributes {dimension_semantics = [#tpu.dimension_semantics<parallel>], iteration_bounds = array<i64: 1>, scalar_prefetch = 0 : i64, scratch_operands = 0 : i64, tpu.core_type = #tpu.core_type<tc>, window_params = [{transform_indices = @transform_0, window_bounds = array<i64: 24, 24>}, {pipeline_mode = #tpu.pipeline_mode<synchronous>, transform_indices = @transform_1, window_bounds = array<i64: 24, 16>}, {pipeline_mode = #tpu.pipeline_mode<synchronous>, transform_indices = @transform_2, window_bounds = array<i64: 16, 16>}, {pipeline_mode = #tpu.pipeline_mode<synchronous>, transform_indices = @transform_3, window_bounds = array<i64: 1, 16>}, {pipeline_mode = #tpu.pipeline_mode<synchronous>, transform_indices = @transform_4, window_bounds = array<i64: 16, 16>}, {pipeline_mode = #tpu.pipeline_mode<synchronous>, transform_indices = @transform_5, window_bounds = array<i64: 1, 16>}, {pipeline_mode = #tpu.pipeline_mode<synchronous>, transform_indices = @transform_6, window_bounds = array<i64: 16, 16>}, {pipeline_mode = #tpu.pipeline_mode<synchronous>, transform_indices = @transform_7, window_bounds = array<i64: 1, 16>}, {pipeline_mode = #tpu.pipeline_mode<synchronous>, transform_indices = @transform_8, window_bounds = array<i64: 16, 16>}, {pipeline_mode = #tpu.pipeline_mode<synchronous>, transform_indices = @transform_9, window_bounds = array<i64: 1, 16>}, {transform_indices = @transform_10, window_bounds = array<i64: 24, 16>}]} {
    %c0 = arith.constant 0 : index
    %c0_0 = arith.constant 0 : index
    %0 = vector.load %arg1[%c0, %c0_0] : memref<24x24xf32, #tpu.memory_space<vmem>>, vector<24x24xf32>
    %1 = arith.truncf %0 : vector<24x24xf32> to vector<24x24xbf16>
    %c0_1 = arith.constant 0 : index
    %c0_2 = arith.constant 0 : index
    %2 = vector.load %arg2[%c0_1, %c0_2] : memref<24x16xbf16, #tpu.memory_space<vmem>>, vector<24x16xbf16>
    %cst = arith.constant dense<0.000000e+00> : vector<24x16xf32>
    %3 = tpu.matmul %1, %2, %cst {dimension_numbers = #tpu.dot_dimension_numbers<[1], [0], [0], [1], [0, 0, 1, 1], [], []>} : vector<24x24xbf16>, vector<24x16xbf16>, vector<24x16xf32> -> vector<24x16xf32>
    %4 = arith.truncf %3 : vector<24x16xf32> to vector<24x16xbf16>
    %c0_3 = arith.constant 0 : index
    %c0_4 = arith.constant 0 : index
    %5 = vector.load %arg3[%c0_3, %c0_4] : memref<16x16xbf16, #tpu.memory_space<vmem>>, vector<16x16xbf16>
    %cst_5 = arith.constant dense<0.000000e+00> : vector<24x16xf32>
    %6 = tpu.matmul %4, %5, %cst_5 {dimension_numbers = #tpu.dot_dimension_numbers<[1], [0], [0], [1], [0, 0, 1, 1], [], []>} : vector<24x16xbf16>, vector<16x16xbf16>, vector<24x16xf32> -> vector<24x16xf32>
    %c0_6 = arith.constant 0 : index
    %c0_7 = arith.constant 0 : index
    %7 = vector.load %arg4[%c0_6, %c0_7] : memref<1x16xf32, #tpu.memory_space<vmem>>, vector<1x16xf32>
    %8 = vector.broadcast %7 : vector<1x16xf32> to vector<24x16xf32>
    %9 = arith.addf %6, %8 : vector<24x16xf32>
    %cst_8 = arith.constant 0.000000e+00 : f32
    %10 = vector.broadcast %cst_8 : f32 to vector<24x16xf32>
    %11 = arith.maximumf %9, %10 : vector<24x16xf32>
    %c0_9 = arith.constant 0 : index
    %c0_10 = arith.constant 0 : index
    %12 = vector.load %arg5[%c0_9, %c0_10] : memref<16x16xbf16, #tpu.memory_space<vmem>>, vector<16x16xbf16>
    %cst_11 = arith.constant dense<0.000000e+00> : vector<24x16xf32>
    %13 = tpu.matmul %4, %12, %cst_11 {dimension_numbers = #tpu.dot_dimension_numbers<[1], [0], [0], [1], [0, 0, 1, 1], [], []>} : vector<24x16xbf16>, vector<16x16xbf16>, vector<24x16xf32> -> vector<24x16xf32>
    %c0_12 = arith.constant 0 : index
    %c0_13 = arith.constant 0 : index
    %14 = vector.load %arg6[%c0_12, %c0_13] : memref<1x16xf32, #tpu.memory_space<vmem>>, vector<1x16xf32>
    %15 = vector.broadcast %14 : vector<1x16xf32> to vector<24x16xf32>
    %16 = arith.addf %13, %15 : vector<24x16xf32>
    %17 = arith.negf %16 : vector<24x16xf32>
    %18 = math.exp %17 : vector<24x16xf32>
    %cst_14 = arith.constant 1.000000e+00 : f32
    %19 = vector.broadcast %cst_14 : f32 to vector<24x16xf32>
    %20 = arith.addf %19, %18 : vector<24x16xf32>
    %21 = arith.divf %19, %20 : vector<24x16xf32>
    %22 = arith.mulf %21, %11 : vector<24x16xf32>
    %cst_15 = arith.constant 1.000000e+00 : f32
    %23 = vector.broadcast %cst_15 : f32 to vector<24x16xf32>
    %24 = arith.subf %23, %21 : vector<24x16xf32>
    %25 = arith.mulf %24, %3 : vector<24x16xf32>
    %26 = arith.addf %22, %25 : vector<24x16xf32>
    %27 = arith.truncf %26 : vector<24x16xf32> to vector<24x16xbf16>
    %c0_16 = arith.constant 0 : index
    %c0_17 = arith.constant 0 : index
    %28 = vector.load %arg7[%c0_16, %c0_17] : memref<16x16xbf16, #tpu.memory_space<vmem>>, vector<16x16xbf16>
    %cst_18 = arith.constant dense<0.000000e+00> : vector<24x16xf32>
    %29 = tpu.matmul %27, %28, %cst_18 {dimension_numbers = #tpu.dot_dimension_numbers<[1], [0], [0], [1], [0, 0, 1, 1], [], []>} : vector<24x16xbf16>, vector<16x16xbf16>, vector<24x16xf32> -> vector<24x16xf32>
    %c0_19 = arith.constant 0 : index
    %c0_20 = arith.constant 0 : index
    %30 = vector.load %arg8[%c0_19, %c0_20] : memref<1x16xf32, #tpu.memory_space<vmem>>, vector<1x16xf32>
    %31 = vector.broadcast %30 : vector<1x16xf32> to vector<24x16xf32>
    %32 = arith.addf %29, %31 : vector<24x16xf32>
    %cst_21 = arith.constant 0.000000e+00 : f32
    %33 = vector.broadcast %cst_21 : f32 to vector<24x16xf32>
    %34 = arith.maximumf %32, %33 : vector<24x16xf32>
    %c0_22 = arith.constant 0 : index
    %c0_23 = arith.constant 0 : index
    %35 = vector.load %arg9[%c0_22, %c0_23] : memref<16x16xbf16, #tpu.memory_space<vmem>>, vector<16x16xbf16>
    %cst_24 = arith.constant dense<0.000000e+00> : vector<24x16xf32>
    %36 = tpu.matmul %27, %35, %cst_24 {dimension_numbers = #tpu.dot_dimension_numbers<[1], [0], [0], [1], [0, 0, 1, 1], [], []>} : vector<24x16xbf16>, vector<16x16xbf16>, vector<24x16xf32> -> vector<24x16xf32>
    %c0_25 = arith.constant 0 : index
    %c0_26 = arith.constant 0 : index
    %37 = vector.load %arg10[%c0_25, %c0_26] : memref<1x16xf32, #tpu.memory_space<vmem>>, vector<1x16xf32>
    %38 = vector.broadcast %37 : vector<1x16xf32> to vector<24x16xf32>
    %39 = arith.addf %36, %38 : vector<24x16xf32>
    %40 = arith.negf %39 : vector<24x16xf32>
    %41 = math.exp %40 : vector<24x16xf32>
    %cst_27 = arith.constant 1.000000e+00 : f32
    %42 = vector.broadcast %cst_27 : f32 to vector<24x16xf32>
    %43 = arith.addf %42, %41 : vector<24x16xf32>
    %44 = arith.divf %42, %43 : vector<24x16xf32>
    %45 = arith.mulf %44, %34 : vector<24x16xf32>
    %cst_28 = arith.constant 1.000000e+00 : f32
    %46 = vector.broadcast %cst_28 : f32 to vector<24x16xf32>
    %47 = arith.subf %46, %44 : vector<24x16xf32>
    %48 = arith.mulf %47, %26 : vector<24x16xf32>
    %49 = arith.addf %45, %48 : vector<24x16xf32>
    %c0_29 = arith.constant 0 : index
    %c0_30 = arith.constant 0 : index
    %50 = vector.load %arg11[%c0_29, %c0_30] : memref<24x16xf32, #tpu.memory_space<vmem>>, vector<24x16xf32>
    tpu.vector_store %arg11[%c0_29, %c0_30], %49 {strides = array<i32>} : memref<24x16xf32, #tpu.memory_space<vmem>>, vector<24x16xf32>,
    return
  }
  func.func @transform_0(%arg0: i32) -> (i32, i32) {
    %c0_i32 = arith.constant 0 : i32
    %c0_i32_0 = arith.constant 0 : i32
    return %arg0, %c0_i32 : i32, i32
  }
  func.func @transform_1(%arg0: i32) -> (i32, i32) {
    %c0_i32 = arith.constant 0 : i32
    %c0_i32_0 = arith.constant 0 : i32
    %c0_i32_1 = arith.constant 0 : i32
    return %c0_i32, %c0_i32_0 : i32, i32
  }
  func.func @transform_2(%arg0: i32) -> (i32, i32) {
    %c0_i32 = arith.constant 0 : i32
    %c0_i32_0 = arith.constant 0 : i32
    %c0_i32_1 = arith.constant 0 : i32
    return %c0_i32, %c0_i32_0 : i32, i32
  }
  func.func @transform_3(%arg0: i32) -> (i32, i32) {
    %c0_i32 = arith.constant 0 : i32
    %c0_i32_0 = arith.constant 0 : i32
    %c0_i32_1 = arith.constant 0 : i32
    return %c0_i32, %c0_i32_0 : i32, i32
  }
  func.func @transform_4(%arg0: i32) -> (i32, i32) {
    %c0_i32 = arith.constant 0 : i32
    %c0_i32_0 = arith.constant 0 : i32
    %c0_i32_1 = arith.constant 0 : i32
    return %c0_i32, %c0_i32_0 : i32, i32
  }
  func.func @transform_5(%arg0: i32) -> (i32, i32) {
    %c0_i32 = arith.constant 0 : i32
    %c0_i32_0 = arith.constant 0 : i32
    %c0_i32_1 = arith.constant 0 : i32
    return %c0_i32, %c0_i32_0 : i32, i32
  }
  func.func @transform_6(%arg0: i32) -> (i32, i32) {
    %c0_i32 = arith.constant 0 : i32
    %c0_i32_0 = arith.constant 0 : i32
    %c0_i32_1 = arith.constant 0 : i32
    return %c0_i32, %c0_i32_0 : i32, i32
  }
  func.func @transform_7(%arg0: i32) -> (i32, i32) {
    %c0_i32 = arith.constant 0 : i32
    %c0_i32_0 = arith.constant 0 : i32
    %c0_i32_1 = arith.constant 0 : i32
    return %c0_i32, %c0_i32_0 : i32, i32
  }
  func.func @transform_8(%arg0: i32) -> (i32, i32) {
    %c0_i32 = arith.constant 0 : i32
    %c0_i32_0 = arith.constant 0 : i32
    %c0_i32_1 = arith.constant 0 : i32
    return %c0_i32, %c0_i32_0 : i32, i32
  }
  func.func @transform_9(%arg0: i32) -> (i32, i32) {
    %c0_i32 = arith.constant 0 : i32
    %c0_i32_0 = arith.constant 0 : i32
    %c0_i32_1 = arith.constant 0 : i32
    return %c0_i32, %c0_i32_0 : i32, i32
  }
  func.func @transform_10(%arg0: i32) -> (i32, i32) {
    %c0_i32 = arith.constant 0 : i32
    %c0_i32_0 = arith.constant 0 : i32
    return %arg0, %c0_i32 : i32, i32
  }
}

module attributes {stable_mosaic.version = 11 : i64} {
  func.func @_linear_kernel(%arg0: i32, %arg1: memref<24x16xf32, #tpu.memory_space<vmem>>, %arg2: memref<16x128xbf16, #tpu.memory_space<vmem>>, %arg3: memref<1x128xf32, #tpu.memory_space<vmem>>, %arg4: memref<24x128xf32, #tpu.memory_space<vmem>>) attributes {dimension_semantics = [#tpu.dimension_semantics<parallel>], iteration_bounds = array<i64: 1>, scalar_prefetch = 0 : i64, scratch_operands = 0 : i64, tpu.core_type = #tpu.core_type<tc>, window_params = [{transform_indices = @transform_0, window_bounds = array<i64: 24, 16>}, {pipeline_mode = #tpu.pipeline_mode<synchronous>, transform_indices = @transform_1, window_bounds = array<i64: 16, 128>}, {pipeline_mode = #tpu.pipeline_mode<synchronous>, transform_indices = @transform_2, window_bounds = array<i64: 1, 128>}, {transform_indices = @transform_3, window_bounds = array<i64: 24, 128>}]} {
    %c0 = arith.constant 0 : index
    %c0_0 = arith.constant 0 : index
    %0 = vector.load %arg1[%c0, %c0_0] : memref<24x16xf32, #tpu.memory_space<vmem>>, vector<24x16xf32>
    %1 = arith.truncf %0 : vector<24x16xf32> to vector<24x16xbf16>
    %c0_1 = arith.constant 0 : index
    %c0_2 = arith.constant 0 : index
    %2 = vector.load %arg2[%c0_1, %c0_2] : memref<16x128xbf16, #tpu.memory_space<vmem>>, vector<16x128xbf16>
    %cst = arith.constant dense<0.000000e+00> : vector<24x128xf32>
    %3 = tpu.matmul %1, %2, %cst {dimension_numbers = #tpu.dot_dimension_numbers<[1], [0], [0], [1], [0, 0, 1, 1], [], []>} : vector<24x16xbf16>, vector<16x128xbf16>, vector<24x128xf32> -> vector<24x128xf32>
    %c0_3 = arith.constant 0 : index
    %c0_4 = arith.constant 0 : index
    %4 = vector.load %arg3[%c0_3, %c0_4] : memref<1x128xf32, #tpu.memory_space<vmem>>, vector<1x128xf32>
    %5 = vector.broadcast %4 : vector<1x128xf32> to vector<24x128xf32>
    %6 = arith.addf %3, %5 : vector<24x128xf32>
    %c0_5 = arith.constant 0 : index
    %c0_6 = arith.constant 0 : index
    %7 = vector.load %arg4[%c0_5, %c0_6] : memref<24x128xf32, #tpu.memory_space<vmem>>, vector<24x128xf32>
    tpu.vector_store %arg4[%c0_5, %c0_6], %6 {strides = array<i32>} : memref<24x128xf32, #tpu.memory_space<vmem>>, vector<24x128xf32>,
    return
  }
  func.func @transform_0(%arg0: i32) -> (i32, i32) {
    %c0_i32 = arith.constant 0 : i32
    %c0_i32_0 = arith.constant 0 : i32
    return %arg0, %c0_i32 : i32, i32
  }
  func.func @transform_1(%arg0: i32) -> (i32, i32) {
    %c0_i32 = arith.constant 0 : i32
    %c0_i32_0 = arith.constant 0 : i32
    %c0_i32_1 = arith.constant 0 : i32
    return %c0_i32, %c0_i32_0 : i32, i32
  }
  func.func @transform_2(%arg0: i32) -> (i32, i32) {
    %c0_i32 = arith.constant 0 : i32
    %c0_i32_0 = arith.constant 0 : i32
    %c0_i32_1 = arith.constant 0 : i32
    return %c0_i32, %c0_i32_0 : i32, i32
  }
  func.func @transform_3(%arg0: i32) -> (i32, i32) {
    %c0_i32 = arith.constant 0 : i32
    %c0_i32_0 = arith.constant 0 : i32
    return %arg0, %c0_i32 : i32, i32
  }
}

module attributes {stable_mosaic.version = 11 : i64} {
  func.func @_bilstm_kernel(%arg0: memref<12x2x128xf32, #tpu.memory_space<vmem>>, %arg1: memref<32x128xbf16, #tpu.memory_space<vmem>>, %arg2: memref<12x2x1xf32, #tpu.memory_space<vmem>>, %arg3: memref<1x128xf32, #tpu.memory_space<vmem>>, %arg4: memref<1x32xf32, #tpu.memory_space<vmem>>, %arg5: memref<12x2x16xf32, #tpu.memory_space<vmem>>, %arg6: memref<12x2x16xf32, #tpu.memory_space<vmem>>) attributes {dimension_semantics = [], scalar_prefetch = 0 : i64, scratch_operands = 0 : i64, tpu.core_type = #tpu.core_type<tc>} {
    %c0 = arith.constant 0 : index
    %c0_0 = arith.constant 0 : index
    %0 = vector.load %arg1[%c0, %c0_0] : memref<32x128xbf16, #tpu.memory_space<vmem>>, vector<32x128xbf16>
    %c0_1 = arith.constant 0 : index
    %c0_2 = arith.constant 0 : index
    %1 = vector.load %arg3[%c0_1, %c0_2] : memref<1x128xf32, #tpu.memory_space<vmem>>, vector<1x128xf32>
    %c0_3 = arith.constant 0 : index
    %c0_4 = arith.constant 0 : index
    %2 = vector.load %arg4[%c0_3, %c0_4] : memref<1x32xf32, #tpu.memory_space<vmem>>, vector<1x32xf32>
    %cst = arith.constant 0.000000e+00 : f32
    %3 = vector.broadcast %cst : f32 to vector<2x32xf32>
    %c0_i32 = arith.constant 0 : i32
    %c12_i32 = arith.constant 12 : i32
    %4 = arith.addi %c0_i32, %c12_i32 : i32
    %c1_i32 = arith.constant 1 : i32
    %5:2 = scf.for %arg7 = %c0_i32 to %4 step %c1_i32 iter_args(%arg8 = %3, %arg9 = %3) -> (vector<2x32xf32>, vector<2x32xf32>)  : i32 {
      %c11_i32 = arith.constant 11 : i32
      %6 = arith.subi %c11_i32, %arg7 : i32
      %7 = arith.index_cast %arg7 : i32 to index
      %c0_6 = arith.constant 0 : index
      %c0_7 = arith.constant 0 : index
      %8 = vector.load %arg0[%7, %c0_6, %c0_7] : memref<12x2x128xf32, #tpu.memory_space<vmem>>, vector<1x2x128xf32>
      %9 = vector.shape_cast %8 : vector<1x2x128xf32> to vector<2x128xf32>
      %10 = vector.broadcast %1 : vector<1x128xf32> to vector<2x128xf32>
      %11 = arith.mulf %10, %9 : vector<2x128xf32>
      %cst_8 = arith.constant 1.000000e+00 : f32
      %12 = vector.broadcast %cst_8 : f32 to vector<1x128xf32>
      %13 = arith.subf %12, %1 : vector<1x128xf32>
      %14 = arith.index_cast %6 : i32 to index
      %c0_9 = arith.constant 0 : index
      %c0_10 = arith.constant 0 : index
      %15 = vector.load %arg0[%14, %c0_9, %c0_10] : memref<12x2x128xf32, #tpu.memory_space<vmem>>, vector<1x2x128xf32>
      %16 = vector.shape_cast %15 : vector<1x2x128xf32> to vector<2x128xf32>
      %17 = vector.broadcast %13 : vector<1x128xf32> to vector<2x128xf32>
      %18 = arith.mulf %17, %16 : vector<2x128xf32>
      %19 = arith.addf %11, %18 : vector<2x128xf32>
      %20 = arith.truncf %arg8 : vector<2x32xf32> to vector<2x32xbf16>
      %cst_11 = arith.constant dense<0.000000e+00> : vector<2x128xf32>
      %21 = tpu.matmul %20, %0, %cst_11 {dimension_numbers = #tpu.dot_dimension_numbers<[1], [0], [0], [1], [0, 0, 1, 1], [], []>} : vector<2x32xbf16>, vector<32x128xbf16>, vector<2x128xf32> -> vector<2x128xf32>
      %22 = arith.addf %19, %21 : vector<2x128xf32>
      %23 = vector.extract_strided_slice %22 {offsets = [0, 0], sizes = [2, 32], strides = [1, 1]} : vector<2x128xf32> to vector<2x32xf32>
      %24 = arith.negf %23 : vector<2x32xf32>
      %25 = math.exp %24 : vector<2x32xf32>
      %cst_12 = arith.constant 1.000000e+00 : f32
      %26 = vector.broadcast %cst_12 : f32 to vector<2x32xf32>
      %27 = arith.addf %26, %25 : vector<2x32xf32>
      %28 = arith.divf %26, %27 : vector<2x32xf32>
      %29 = vector.extract_strided_slice %22 {offsets = [0, 32], sizes = [2, 32], strides = [1, 1]} : vector<2x128xf32> to vector<2x32xf32>
      %30 = arith.negf %29 : vector<2x32xf32>
      %31 = math.exp %30 : vector<2x32xf32>
      %cst_13 = arith.constant 1.000000e+00 : f32
      %32 = vector.broadcast %cst_13 : f32 to vector<2x32xf32>
      %33 = arith.addf %32, %31 : vector<2x32xf32>
      %34 = arith.divf %32, %33 : vector<2x32xf32>
      %35 = vector.extract_strided_slice %22 {offsets = [0, 64], sizes = [2, 32], strides = [1, 1]} : vector<2x128xf32> to vector<2x32xf32>
      %36 = math.tanh %35 : vector<2x32xf32>
      %37 = vector.extract_strided_slice %22 {offsets = [0, 96], sizes = [2, 32], strides = [1, 1]} : vector<2x128xf32> to vector<2x32xf32>
      %38 = arith.negf %37 : vector<2x32xf32>
      %39 = math.exp %38 : vector<2x32xf32>
      %cst_14 = arith.constant 1.000000e+00 : f32
      %40 = vector.broadcast %cst_14 : f32 to vector<2x32xf32>
      %41 = arith.addf %40, %39 : vector<2x32xf32>
      %42 = arith.divf %40, %41 : vector<2x32xf32>
      %43 = arith.mulf %34, %arg9 : vector<2x32xf32>
      %44 = arith.mulf %28, %36 : vector<2x32xf32>
      %45 = arith.addf %43, %44 : vector<2x32xf32>
      %46 = math.tanh %45 : vector<2x32xf32>
      %47 = arith.mulf %42, %46 : vector<2x32xf32>
      %48 = arith.index_cast %arg7 : i32 to index
      %c0_15 = arith.constant 0 : index
      %c0_16 = arith.constant 0 : index
      %49 = vector.load %arg2[%48, %c0_15, %c0_16] : memref<12x2x1xf32, #tpu.memory_space<vmem>>, vector<1x2x1xf32>
      %50 = vector.shape_cast %49 : vector<1x2x1xf32> to vector<2x1xf32>
      %51 = arith.index_cast %6 : i32 to index
      %c0_17 = arith.constant 0 : index
      %c0_18 = arith.constant 0 : index
      %52 = vector.load %arg2[%51, %c0_17, %c0_18] : memref<12x2x1xf32, #tpu.memory_space<vmem>>, vector<1x2x1xf32>
      %53 = vector.shape_cast %52 : vector<1x2x1xf32> to vector<2x1xf32>
      %54 = vector.broadcast %2 : vector<1x32xf32> to vector<2x32xf32>
      %55 = vector.broadcast %50 : vector<2x1xf32> to vector<2x32xf32>
      %56 = arith.mulf %54, %55 : vector<2x32xf32>
      %cst_19 = arith.constant 1.000000e+00 : f32
      %57 = vector.broadcast %cst_19 : f32 to vector<1x32xf32>
      %58 = arith.subf %57, %2 : vector<1x32xf32>
      %59 = vector.broadcast %58 : vector<1x32xf32> to vector<2x32xf32>
      %60 = vector.broadcast %53 : vector<2x1xf32> to vector<2x32xf32>
      %61 = arith.mulf %59, %60 : vector<2x32xf32>
      %62 = arith.addf %56, %61 : vector<2x32xf32>
      %63 = vector.extract_strided_slice %47 {offsets = [0, 0], sizes = [2, 16], strides = [1, 1]} : vector<2x32xf32> to vector<2x16xf32>
      %64 = vector.broadcast %50 : vector<2x1xf32> to vector<2x16xf32>
      %65 = arith.mulf %64, %63 : vector<2x16xf32>
      %66 = arith.index_cast %arg7 : i32 to index
      %c0_20 = arith.constant 0 : index
      %c0_21 = arith.constant 0 : index
      %67 = vector.load %arg5[%66, %c0_20, %c0_21] : memref<12x2x16xf32, #tpu.memory_space<vmem>>, vector<1x2x16xf32>
      %68 = vector.shape_cast %67 : vector<1x2x16xf32> to vector<2x16xf32>
      %69 = vector.shape_cast %65 : vector<2x16xf32> to vector<1x2x16xf32>
      tpu.vector_store %arg5[%66, %c0_20, %c0_21], %69 {strides = array<i32>} : memref<12x2x16xf32, #tpu.memory_space<vmem>>, vector<1x2x16xf32>,
      %70 = vector.extract_strided_slice %47 {offsets = [0, 16], sizes = [2, 16], strides = [1, 1]} : vector<2x32xf32> to vector<2x16xf32>
      %71 = vector.broadcast %53 : vector<2x1xf32> to vector<2x16xf32>
      %72 = arith.mulf %71, %70 : vector<2x16xf32>
      %73 = arith.index_cast %6 : i32 to index
      %c0_22 = arith.constant 0 : index
      %c0_23 = arith.constant 0 : index
      %74 = vector.load %arg6[%73, %c0_22, %c0_23] : memref<12x2x16xf32, #tpu.memory_space<vmem>>, vector<1x2x16xf32>
      %75 = vector.shape_cast %74 : vector<1x2x16xf32> to vector<2x16xf32>
      %76 = vector.shape_cast %72 : vector<2x16xf32> to vector<1x2x16xf32>
      tpu.vector_store %arg6[%73, %c0_22, %c0_23], %76 {strides = array<i32>} : memref<12x2x16xf32, #tpu.memory_space<vmem>>, vector<1x2x16xf32>,
      %77 = arith.mulf %62, %47 : vector<2x32xf32>
      %cst_24 = arith.constant 1.000000e+00 : f32
      %78 = vector.broadcast %cst_24 : f32 to vector<2x32xf32>
      %79 = arith.subf %78, %62 : vector<2x32xf32>
      %80 = arith.mulf %79, %arg8 : vector<2x32xf32>
      %81 = arith.addf %77, %80 : vector<2x32xf32>
      %82 = arith.mulf %62, %45 : vector<2x32xf32>
      %cst_25 = arith.constant 1.000000e+00 : f32
      %83 = vector.broadcast %cst_25 : f32 to vector<2x32xf32>
      %84 = arith.subf %83, %62 : vector<2x32xf32>
      %85 = arith.mulf %84, %arg9 : vector<2x32xf32>
      %86 = arith.addf %82, %85 : vector<2x32xf32>
      scf.yield %81, %86 : vector<2x32xf32>, vector<2x32xf32>
    }
    %c12_i32_5 = arith.constant 12 : i32
    return
  }
}

module attributes {stable_mosaic.version = 11 : i64} {
  func.func @_emb_proj_hwy_kernel(%arg0: i32, %arg1: memref<16x24xf32, #tpu.memory_space<vmem>>, %arg2: memref<24x16xbf16, #tpu.memory_space<vmem>>, %arg3: memref<16x16xbf16, #tpu.memory_space<vmem>>, %arg4: memref<1x16xf32, #tpu.memory_space<vmem>>, %arg5: memref<16x16xbf16, #tpu.memory_space<vmem>>, %arg6: memref<1x16xf32, #tpu.memory_space<vmem>>, %arg7: memref<16x16xbf16, #tpu.memory_space<vmem>>, %arg8: memref<1x16xf32, #tpu.memory_space<vmem>>, %arg9: memref<16x16xbf16, #tpu.memory_space<vmem>>, %arg10: memref<1x16xf32, #tpu.memory_space<vmem>>, %arg11: memref<16x16xf32, #tpu.memory_space<vmem>>) attributes {dimension_semantics = [#tpu.dimension_semantics<parallel>], iteration_bounds = array<i64: 1>, scalar_prefetch = 0 : i64, scratch_operands = 0 : i64, tpu.core_type = #tpu.core_type<tc>, window_params = [{transform_indices = @transform_0, window_bounds = array<i64: 16, 24>}, {pipeline_mode = #tpu.pipeline_mode<synchronous>, transform_indices = @transform_1, window_bounds = array<i64: 24, 16>}, {pipeline_mode = #tpu.pipeline_mode<synchronous>, transform_indices = @transform_2, window_bounds = array<i64: 16, 16>}, {pipeline_mode = #tpu.pipeline_mode<synchronous>, transform_indices = @transform_3, window_bounds = array<i64: 1, 16>}, {pipeline_mode = #tpu.pipeline_mode<synchronous>, transform_indices = @transform_4, window_bounds = array<i64: 16, 16>}, {pipeline_mode = #tpu.pipeline_mode<synchronous>, transform_indices = @transform_5, window_bounds = array<i64: 1, 16>}, {pipeline_mode = #tpu.pipeline_mode<synchronous>, transform_indices = @transform_6, window_bounds = array<i64: 16, 16>}, {pipeline_mode = #tpu.pipeline_mode<synchronous>, transform_indices = @transform_7, window_bounds = array<i64: 1, 16>}, {pipeline_mode = #tpu.pipeline_mode<synchronous>, transform_indices = @transform_8, window_bounds = array<i64: 16, 16>}, {pipeline_mode = #tpu.pipeline_mode<synchronous>, transform_indices = @transform_9, window_bounds = array<i64: 1, 16>}, {transform_indices = @transform_10, window_bounds = array<i64: 16, 16>}]} {
    %c0 = arith.constant 0 : index
    %c0_0 = arith.constant 0 : index
    %0 = vector.load %arg1[%c0, %c0_0] : memref<16x24xf32, #tpu.memory_space<vmem>>, vector<16x24xf32>
    %1 = arith.truncf %0 : vector<16x24xf32> to vector<16x24xbf16>
    %c0_1 = arith.constant 0 : index
    %c0_2 = arith.constant 0 : index
    %2 = vector.load %arg2[%c0_1, %c0_2] : memref<24x16xbf16, #tpu.memory_space<vmem>>, vector<24x16xbf16>
    %cst = arith.constant dense<0.000000e+00> : vector<16x16xf32>
    %3 = tpu.matmul %1, %2, %cst {dimension_numbers = #tpu.dot_dimension_numbers<[1], [0], [0], [1], [0, 0, 1, 1], [], []>} : vector<16x24xbf16>, vector<24x16xbf16>, vector<16x16xf32> -> vector<16x16xf32>
    %4 = arith.truncf %3 : vector<16x16xf32> to vector<16x16xbf16>
    %c0_3 = arith.constant 0 : index
    %c0_4 = arith.constant 0 : index
    %5 = vector.load %arg3[%c0_3, %c0_4] : memref<16x16xbf16, #tpu.memory_space<vmem>>, vector<16x16xbf16>
    %cst_5 = arith.constant dense<0.000000e+00> : vector<16x16xf32>
    %6 = tpu.matmul %4, %5, %cst_5 {dimension_numbers = #tpu.dot_dimension_numbers<[1], [0], [0], [1], [0, 0, 1, 1], [], []>} : vector<16x16xbf16>, vector<16x16xbf16>, vector<16x16xf32> -> vector<16x16xf32>
    %c0_6 = arith.constant 0 : index
    %c0_7 = arith.constant 0 : index
    %7 = vector.load %arg4[%c0_6, %c0_7] : memref<1x16xf32, #tpu.memory_space<vmem>>, vector<1x16xf32>
    %8 = vector.broadcast %7 : vector<1x16xf32> to vector<16x16xf32>
    %9 = arith.addf %6, %8 : vector<16x16xf32>
    %cst_8 = arith.constant 0.000000e+00 : f32
    %10 = vector.broadcast %cst_8 : f32 to vector<16x16xf32>
    %11 = arith.maximumf %9, %10 : vector<16x16xf32>
    %c0_9 = arith.constant 0 : index
    %c0_10 = arith.constant 0 : index
    %12 = vector.load %arg5[%c0_9, %c0_10] : memref<16x16xbf16, #tpu.memory_space<vmem>>, vector<16x16xbf16>
    %cst_11 = arith.constant dense<0.000000e+00> : vector<16x16xf32>
    %13 = tpu.matmul %4, %12, %cst_11 {dimension_numbers = #tpu.dot_dimension_numbers<[1], [0], [0], [1], [0, 0, 1, 1], [], []>} : vector<16x16xbf16>, vector<16x16xbf16>, vector<16x16xf32> -> vector<16x16xf32>
    %c0_12 = arith.constant 0 : index
    %c0_13 = arith.constant 0 : index
    %14 = vector.load %arg6[%c0_12, %c0_13] : memref<1x16xf32, #tpu.memory_space<vmem>>, vector<1x16xf32>
    %15 = vector.broadcast %14 : vector<1x16xf32> to vector<16x16xf32>
    %16 = arith.addf %13, %15 : vector<16x16xf32>
    %17 = arith.negf %16 : vector<16x16xf32>
    %18 = math.exp %17 : vector<16x16xf32>
    %cst_14 = arith.constant 1.000000e+00 : f32
    %19 = vector.broadcast %cst_14 : f32 to vector<16x16xf32>
    %20 = arith.addf %19, %18 : vector<16x16xf32>
    %21 = arith.divf %19, %20 : vector<16x16xf32>
    %22 = arith.mulf %21, %11 : vector<16x16xf32>
    %cst_15 = arith.constant 1.000000e+00 : f32
    %23 = vector.broadcast %cst_15 : f32 to vector<16x16xf32>
    %24 = arith.subf %23, %21 : vector<16x16xf32>
    %25 = arith.mulf %24, %3 : vector<16x16xf32>
    %26 = arith.addf %22, %25 : vector<16x16xf32>
    %27 = arith.truncf %26 : vector<16x16xf32> to vector<16x16xbf16>
    %c0_16 = arith.constant 0 : index
    %c0_17 = arith.constant 0 : index
    %28 = vector.load %arg7[%c0_16, %c0_17] : memref<16x16xbf16, #tpu.memory_space<vmem>>, vector<16x16xbf16>
    %cst_18 = arith.constant dense<0.000000e+00> : vector<16x16xf32>
    %29 = tpu.matmul %27, %28, %cst_18 {dimension_numbers = #tpu.dot_dimension_numbers<[1], [0], [0], [1], [0, 0, 1, 1], [], []>} : vector<16x16xbf16>, vector<16x16xbf16>, vector<16x16xf32> -> vector<16x16xf32>
    %c0_19 = arith.constant 0 : index
    %c0_20 = arith.constant 0 : index
    %30 = vector.load %arg8[%c0_19, %c0_20] : memref<1x16xf32, #tpu.memory_space<vmem>>, vector<1x16xf32>
    %31 = vector.broadcast %30 : vector<1x16xf32> to vector<16x16xf32>
    %32 = arith.addf %29, %31 : vector<16x16xf32>
    %cst_21 = arith.constant 0.000000e+00 : f32
    %33 = vector.broadcast %cst_21 : f32 to vector<16x16xf32>
    %34 = arith.maximumf %32, %33 : vector<16x16xf32>
    %c0_22 = arith.constant 0 : index
    %c0_23 = arith.constant 0 : index
    %35 = vector.load %arg9[%c0_22, %c0_23] : memref<16x16xbf16, #tpu.memory_space<vmem>>, vector<16x16xbf16>
    %cst_24 = arith.constant dense<0.000000e+00> : vector<16x16xf32>
    %36 = tpu.matmul %27, %35, %cst_24 {dimension_numbers = #tpu.dot_dimension_numbers<[1], [0], [0], [1], [0, 0, 1, 1], [], []>} : vector<16x16xbf16>, vector<16x16xbf16>, vector<16x16xf32> -> vector<16x16xf32>
    %c0_25 = arith.constant 0 : index
    %c0_26 = arith.constant 0 : index
    %37 = vector.load %arg10[%c0_25, %c0_26] : memref<1x16xf32, #tpu.memory_space<vmem>>, vector<1x16xf32>
    %38 = vector.broadcast %37 : vector<1x16xf32> to vector<16x16xf32>
    %39 = arith.addf %36, %38 : vector<16x16xf32>
    %40 = arith.negf %39 : vector<16x16xf32>
    %41 = math.exp %40 : vector<16x16xf32>
    %cst_27 = arith.constant 1.000000e+00 : f32
    %42 = vector.broadcast %cst_27 : f32 to vector<16x16xf32>
    %43 = arith.addf %42, %41 : vector<16x16xf32>
    %44 = arith.divf %42, %43 : vector<16x16xf32>
    %45 = arith.mulf %44, %34 : vector<16x16xf32>
    %cst_28 = arith.constant 1.000000e+00 : f32
    %46 = vector.broadcast %cst_28 : f32 to vector<16x16xf32>
    %47 = arith.subf %46, %44 : vector<16x16xf32>
    %48 = arith.mulf %47, %26 : vector<16x16xf32>
    %49 = arith.addf %45, %48 : vector<16x16xf32>
    %c0_29 = arith.constant 0 : index
    %c0_30 = arith.constant 0 : index
    %50 = vector.load %arg11[%c0_29, %c0_30] : memref<16x16xf32, #tpu.memory_space<vmem>>, vector<16x16xf32>
    tpu.vector_store %arg11[%c0_29, %c0_30], %49 {strides = array<i32>} : memref<16x16xf32, #tpu.memory_space<vmem>>, vector<16x16xf32>,
    return
  }
  func.func @transform_0(%arg0: i32) -> (i32, i32) {
    %c0_i32 = arith.constant 0 : i32
    %c0_i32_0 = arith.constant 0 : i32
    return %arg0, %c0_i32 : i32, i32
  }
  func.func @transform_1(%arg0: i32) -> (i32, i32) {
    %c0_i32 = arith.constant 0 : i32
    %c0_i32_0 = arith.constant 0 : i32
    %c0_i32_1 = arith.constant 0 : i32
    return %c0_i32, %c0_i32_0 : i32, i32
  }
  func.func @transform_2(%arg0: i32) -> (i32, i32) {
    %c0_i32 = arith.constant 0 : i32
    %c0_i32_0 = arith.constant 0 : i32
    %c0_i32_1 = arith.constant 0 : i32
    return %c0_i32, %c0_i32_0 : i32, i32
  }
  func.func @transform_3(%arg0: i32) -> (i32, i32) {
    %c0_i32 = arith.constant 0 : i32
    %c0_i32_0 = arith.constant 0 : i32
    %c0_i32_1 = arith.constant 0 : i32
    return %c0_i32, %c0_i32_0 : i32, i32
  }
  func.func @transform_4(%arg0: i32) -> (i32, i32) {
    %c0_i32 = arith.constant 0 : i32
    %c0_i32_0 = arith.constant 0 : i32
    %c0_i32_1 = arith.constant 0 : i32
    return %c0_i32, %c0_i32_0 : i32, i32
  }
  func.func @transform_5(%arg0: i32) -> (i32, i32) {
    %c0_i32 = arith.constant 0 : i32
    %c0_i32_0 = arith.constant 0 : i32
    %c0_i32_1 = arith.constant 0 : i32
    return %c0_i32, %c0_i32_0 : i32, i32
  }
  func.func @transform_6(%arg0: i32) -> (i32, i32) {
    %c0_i32 = arith.constant 0 : i32
    %c0_i32_0 = arith.constant 0 : i32
    %c0_i32_1 = arith.constant 0 : i32
    return %c0_i32, %c0_i32_0 : i32, i32
  }
  func.func @transform_7(%arg0: i32) -> (i32, i32) {
    %c0_i32 = arith.constant 0 : i32
    %c0_i32_0 = arith.constant 0 : i32
    %c0_i32_1 = arith.constant 0 : i32
    return %c0_i32, %c0_i32_0 : i32, i32
  }
  func.func @transform_8(%arg0: i32) -> (i32, i32) {
    %c0_i32 = arith.constant 0 : i32
    %c0_i32_0 = arith.constant 0 : i32
    %c0_i32_1 = arith.constant 0 : i32
    return %c0_i32, %c0_i32_0 : i32, i32
  }
  func.func @transform_9(%arg0: i32) -> (i32, i32) {
    %c0_i32 = arith.constant 0 : i32
    %c0_i32_0 = arith.constant 0 : i32
    %c0_i32_1 = arith.constant 0 : i32
    return %c0_i32, %c0_i32_0 : i32, i32
  }
  func.func @transform_10(%arg0: i32) -> (i32, i32) {
    %c0_i32 = arith.constant 0 : i32
    %c0_i32_0 = arith.constant 0 : i32
    return %arg0, %c0_i32 : i32, i32
  }
}

module attributes {stable_mosaic.version = 11 : i64} {
  func.func @_linear_kernel(%arg0: i32, %arg1: memref<16x16xf32, #tpu.memory_space<vmem>>, %arg2: memref<16x128xbf16, #tpu.memory_space<vmem>>, %arg3: memref<1x128xf32, #tpu.memory_space<vmem>>, %arg4: memref<16x128xf32, #tpu.memory_space<vmem>>) attributes {dimension_semantics = [#tpu.dimension_semantics<parallel>], iteration_bounds = array<i64: 1>, scalar_prefetch = 0 : i64, scratch_operands = 0 : i64, tpu.core_type = #tpu.core_type<tc>, window_params = [{transform_indices = @transform_0, window_bounds = array<i64: 16, 16>}, {pipeline_mode = #tpu.pipeline_mode<synchronous>, transform_indices = @transform_1, window_bounds = array<i64: 16, 128>}, {pipeline_mode = #tpu.pipeline_mode<synchronous>, transform_indices = @transform_2, window_bounds = array<i64: 1, 128>}, {transform_indices = @transform_3, window_bounds = array<i64: 16, 128>}]} {
    %c0 = arith.constant 0 : index
    %c0_0 = arith.constant 0 : index
    %0 = vector.load %arg1[%c0, %c0_0] : memref<16x16xf32, #tpu.memory_space<vmem>>, vector<16x16xf32>
    %1 = arith.truncf %0 : vector<16x16xf32> to vector<16x16xbf16>
    %c0_1 = arith.constant 0 : index
    %c0_2 = arith.constant 0 : index
    %2 = vector.load %arg2[%c0_1, %c0_2] : memref<16x128xbf16, #tpu.memory_space<vmem>>, vector<16x128xbf16>
    %cst = arith.constant dense<0.000000e+00> : vector<16x128xf32>
    %3 = tpu.matmul %1, %2, %cst {dimension_numbers = #tpu.dot_dimension_numbers<[1], [0], [0], [1], [0, 0, 1, 1], [], []>} : vector<16x16xbf16>, vector<16x128xbf16>, vector<16x128xf32> -> vector<16x128xf32>
    %c0_3 = arith.constant 0 : index
    %c0_4 = arith.constant 0 : index
    %4 = vector.load %arg3[%c0_3, %c0_4] : memref<1x128xf32, #tpu.memory_space<vmem>>, vector<1x128xf32>
    %5 = vector.broadcast %4 : vector<1x128xf32> to vector<16x128xf32>
    %6 = arith.addf %3, %5 : vector<16x128xf32>
    %c0_5 = arith.constant 0 : index
    %c0_6 = arith.constant 0 : index
    %7 = vector.load %arg4[%c0_5, %c0_6] : memref<16x128xf32, #tpu.memory_space<vmem>>, vector<16x128xf32>
    tpu.vector_store %arg4[%c0_5, %c0_6], %6 {strides = array<i32>} : memref<16x128xf32, #tpu.memory_space<vmem>>, vector<16x128xf32>,
    return
  }
  func.func @transform_0(%arg0: i32) -> (i32, i32) {
    %c0_i32 = arith.constant 0 : i32
    %c0_i32_0 = arith.constant 0 : i32
    return %arg0, %c0_i32 : i32, i32
  }
  func.func @transform_1(%arg0: i32) -> (i32, i32) {
    %c0_i32 = arith.constant 0 : i32
    %c0_i32_0 = arith.constant 0 : i32
    %c0_i32_1 = arith.constant 0 : i32
    return %c0_i32, %c0_i32_0 : i32, i32
  }
  func.func @transform_2(%arg0: i32) -> (i32, i32) {
    %c0_i32 = arith.constant 0 : i32
    %c0_i32_0 = arith.constant 0 : i32
    %c0_i32_1 = arith.constant 0 : i32
    return %c0_i32, %c0_i32_0 : i32, i32
  }
  func.func @transform_3(%arg0: i32) -> (i32, i32) {
    %c0_i32 = arith.constant 0 : i32
    %c0_i32_0 = arith.constant 0 : i32
    return %arg0, %c0_i32 : i32, i32
  }
}

module attributes {stable_mosaic.version = 11 : i64} {
  func.func @_bilstm_kernel(%arg0: memref<8x2x128xf32, #tpu.memory_space<vmem>>, %arg1: memref<32x128xbf16, #tpu.memory_space<vmem>>, %arg2: memref<8x2x1xf32, #tpu.memory_space<vmem>>, %arg3: memref<1x128xf32, #tpu.memory_space<vmem>>, %arg4: memref<1x32xf32, #tpu.memory_space<vmem>>, %arg5: memref<8x2x16xf32, #tpu.memory_space<vmem>>, %arg6: memref<8x2x16xf32, #tpu.memory_space<vmem>>) attributes {dimension_semantics = [], scalar_prefetch = 0 : i64, scratch_operands = 0 : i64, tpu.core_type = #tpu.core_type<tc>} {
    %c0 = arith.constant 0 : index
    %c0_0 = arith.constant 0 : index
    %0 = vector.load %arg1[%c0, %c0_0] : memref<32x128xbf16, #tpu.memory_space<vmem>>, vector<32x128xbf16>
    %c0_1 = arith.constant 0 : index
    %c0_2 = arith.constant 0 : index
    %1 = vector.load %arg3[%c0_1, %c0_2] : memref<1x128xf32, #tpu.memory_space<vmem>>, vector<1x128xf32>
    %c0_3 = arith.constant 0 : index
    %c0_4 = arith.constant 0 : index
    %2 = vector.load %arg4[%c0_3, %c0_4] : memref<1x32xf32, #tpu.memory_space<vmem>>, vector<1x32xf32>
    %cst = arith.constant 0.000000e+00 : f32
    %3 = vector.broadcast %cst : f32 to vector<2x32xf32>
    %c0_i32 = arith.constant 0 : i32
    %c8_i32 = arith.constant 8 : i32
    %4 = arith.addi %c0_i32, %c8_i32 : i32
    %c1_i32 = arith.constant 1 : i32
    %5:2 = scf.for %arg7 = %c0_i32 to %4 step %c1_i32 iter_args(%arg8 = %3, %arg9 = %3) -> (vector<2x32xf32>, vector<2x32xf32>)  : i32 {
      %c7_i32 = arith.constant 7 : i32
      %6 = arith.subi %c7_i32, %arg7 : i32
      %7 = arith.index_cast %arg7 : i32 to index
      %c0_6 = arith.constant 0 : index
      %c0_7 = arith.constant 0 : index
      %8 = vector.load %arg0[%7, %c0_6, %c0_7] : memref<8x2x128xf32, #tpu.memory_space<vmem>>, vector<1x2x128xf32>
      %9 = vector.shape_cast %8 : vector<1x2x128xf32> to vector<2x128xf32>
      %10 = vector.broadcast %1 : vector<1x128xf32> to vector<2x128xf32>
      %11 = arith.mulf %10, %9 : vector<2x128xf32>
      %cst_8 = arith.constant 1.000000e+00 : f32
      %12 = vector.broadcast %cst_8 : f32 to vector<1x128xf32>
      %13 = arith.subf %12, %1 : vector<1x128xf32>
      %14 = arith.index_cast %6 : i32 to index
      %c0_9 = arith.constant 0 : index
      %c0_10 = arith.constant 0 : index
      %15 = vector.load %arg0[%14, %c0_9, %c0_10] : memref<8x2x128xf32, #tpu.memory_space<vmem>>, vector<1x2x128xf32>
      %16 = vector.shape_cast %15 : vector<1x2x128xf32> to vector<2x128xf32>
      %17 = vector.broadcast %13 : vector<1x128xf32> to vector<2x128xf32>
      %18 = arith.mulf %17, %16 : vector<2x128xf32>
      %19 = arith.addf %11, %18 : vector<2x128xf32>
      %20 = arith.truncf %arg8 : vector<2x32xf32> to vector<2x32xbf16>
      %cst_11 = arith.constant dense<0.000000e+00> : vector<2x128xf32>
      %21 = tpu.matmul %20, %0, %cst_11 {dimension_numbers = #tpu.dot_dimension_numbers<[1], [0], [0], [1], [0, 0, 1, 1], [], []>} : vector<2x32xbf16>, vector<32x128xbf16>, vector<2x128xf32> -> vector<2x128xf32>
      %22 = arith.addf %19, %21 : vector<2x128xf32>
      %23 = vector.extract_strided_slice %22 {offsets = [0, 0], sizes = [2, 32], strides = [1, 1]} : vector<2x128xf32> to vector<2x32xf32>
      %24 = arith.negf %23 : vector<2x32xf32>
      %25 = math.exp %24 : vector<2x32xf32>
      %cst_12 = arith.constant 1.000000e+00 : f32
      %26 = vector.broadcast %cst_12 : f32 to vector<2x32xf32>
      %27 = arith.addf %26, %25 : vector<2x32xf32>
      %28 = arith.divf %26, %27 : vector<2x32xf32>
      %29 = vector.extract_strided_slice %22 {offsets = [0, 32], sizes = [2, 32], strides = [1, 1]} : vector<2x128xf32> to vector<2x32xf32>
      %30 = arith.negf %29 : vector<2x32xf32>
      %31 = math.exp %30 : vector<2x32xf32>
      %cst_13 = arith.constant 1.000000e+00 : f32
      %32 = vector.broadcast %cst_13 : f32 to vector<2x32xf32>
      %33 = arith.addf %32, %31 : vector<2x32xf32>
      %34 = arith.divf %32, %33 : vector<2x32xf32>
      %35 = vector.extract_strided_slice %22 {offsets = [0, 64], sizes = [2, 32], strides = [1, 1]} : vector<2x128xf32> to vector<2x32xf32>
      %36 = math.tanh %35 : vector<2x32xf32>
      %37 = vector.extract_strided_slice %22 {offsets = [0, 96], sizes = [2, 32], strides = [1, 1]} : vector<2x128xf32> to vector<2x32xf32>
      %38 = arith.negf %37 : vector<2x32xf32>
      %39 = math.exp %38 : vector<2x32xf32>
      %cst_14 = arith.constant 1.000000e+00 : f32
      %40 = vector.broadcast %cst_14 : f32 to vector<2x32xf32>
      %41 = arith.addf %40, %39 : vector<2x32xf32>
      %42 = arith.divf %40, %41 : vector<2x32xf32>
      %43 = arith.mulf %34, %arg9 : vector<2x32xf32>
      %44 = arith.mulf %28, %36 : vector<2x32xf32>
      %45 = arith.addf %43, %44 : vector<2x32xf32>
      %46 = math.tanh %45 : vector<2x32xf32>
      %47 = arith.mulf %42, %46 : vector<2x32xf32>
      %48 = arith.index_cast %arg7 : i32 to index
      %c0_15 = arith.constant 0 : index
      %c0_16 = arith.constant 0 : index
      %49 = vector.load %arg2[%48, %c0_15, %c0_16] : memref<8x2x1xf32, #tpu.memory_space<vmem>>, vector<1x2x1xf32>
      %50 = vector.shape_cast %49 : vector<1x2x1xf32> to vector<2x1xf32>
      %51 = arith.index_cast %6 : i32 to index
      %c0_17 = arith.constant 0 : index
      %c0_18 = arith.constant 0 : index
      %52 = vector.load %arg2[%51, %c0_17, %c0_18] : memref<8x2x1xf32, #tpu.memory_space<vmem>>, vector<1x2x1xf32>
      %53 = vector.shape_cast %52 : vector<1x2x1xf32> to vector<2x1xf32>
      %54 = vector.broadcast %2 : vector<1x32xf32> to vector<2x32xf32>
      %55 = vector.broadcast %50 : vector<2x1xf32> to vector<2x32xf32>
      %56 = arith.mulf %54, %55 : vector<2x32xf32>
      %cst_19 = arith.constant 1.000000e+00 : f32
      %57 = vector.broadcast %cst_19 : f32 to vector<1x32xf32>
      %58 = arith.subf %57, %2 : vector<1x32xf32>
      %59 = vector.broadcast %58 : vector<1x32xf32> to vector<2x32xf32>
      %60 = vector.broadcast %53 : vector<2x1xf32> to vector<2x32xf32>
      %61 = arith.mulf %59, %60 : vector<2x32xf32>
      %62 = arith.addf %56, %61 : vector<2x32xf32>
      %63 = vector.extract_strided_slice %47 {offsets = [0, 0], sizes = [2, 16], strides = [1, 1]} : vector<2x32xf32> to vector<2x16xf32>
      %64 = vector.broadcast %50 : vector<2x1xf32> to vector<2x16xf32>
      %65 = arith.mulf %64, %63 : vector<2x16xf32>
      %66 = arith.index_cast %arg7 : i32 to index
      %c0_20 = arith.constant 0 : index
      %c0_21 = arith.constant 0 : index
      %67 = vector.load %arg5[%66, %c0_20, %c0_21] : memref<8x2x16xf32, #tpu.memory_space<vmem>>, vector<1x2x16xf32>
      %68 = vector.shape_cast %67 : vector<1x2x16xf32> to vector<2x16xf32>
      %69 = vector.shape_cast %65 : vector<2x16xf32> to vector<1x2x16xf32>
      tpu.vector_store %arg5[%66, %c0_20, %c0_21], %69 {strides = array<i32>} : memref<8x2x16xf32, #tpu.memory_space<vmem>>, vector<1x2x16xf32>,
      %70 = vector.extract_strided_slice %47 {offsets = [0, 16], sizes = [2, 16], strides = [1, 1]} : vector<2x32xf32> to vector<2x16xf32>
      %71 = vector.broadcast %53 : vector<2x1xf32> to vector<2x16xf32>
      %72 = arith.mulf %71, %70 : vector<2x16xf32>
      %73 = arith.index_cast %6 : i32 to index
      %c0_22 = arith.constant 0 : index
      %c0_23 = arith.constant 0 : index
      %74 = vector.load %arg6[%73, %c0_22, %c0_23] : memref<8x2x16xf32, #tpu.memory_space<vmem>>, vector<1x2x16xf32>
      %75 = vector.shape_cast %74 : vector<1x2x16xf32> to vector<2x16xf32>
      %76 = vector.shape_cast %72 : vector<2x16xf32> to vector<1x2x16xf32>
      tpu.vector_store %arg6[%73, %c0_22, %c0_23], %76 {strides = array<i32>} : memref<8x2x16xf32, #tpu.memory_space<vmem>>, vector<1x2x16xf32>,
      %77 = arith.mulf %62, %47 : vector<2x32xf32>
      %cst_24 = arith.constant 1.000000e+00 : f32
      %78 = vector.broadcast %cst_24 : f32 to vector<2x32xf32>
      %79 = arith.subf %78, %62 : vector<2x32xf32>
      %80 = arith.mulf %79, %arg8 : vector<2x32xf32>
      %81 = arith.addf %77, %80 : vector<2x32xf32>
      %82 = arith.mulf %62, %45 : vector<2x32xf32>
      %cst_25 = arith.constant 1.000000e+00 : f32
      %83 = vector.broadcast %cst_25 : f32 to vector<2x32xf32>
      %84 = arith.subf %83, %62 : vector<2x32xf32>
      %85 = arith.mulf %84, %arg9 : vector<2x32xf32>
      %86 = arith.addf %82, %85 : vector<2x32xf32>
      scf.yield %81, %86 : vector<2x32xf32>, vector<2x32xf32>
    }
    %c8_i32_5 = arith.constant 8 : i32
    return
  }
}

module attributes {stable_mosaic.version = 11 : i64} {
  func.func @_attention_kernel(%arg0: i32, %arg1: memref<2x12x32xf32, #tpu.memory_space<vmem>>, %arg2: memref<2x8x32xf32, #tpu.memory_space<vmem>>, %arg3: memref<2x12x1xf32, #tpu.memory_space<vmem>>, %arg4: memref<2x1x8xf32, #tpu.memory_space<vmem>>, %arg5: memref<1x32xf32, #tpu.memory_space<vmem>>, %arg6: memref<1x32xf32, #tpu.memory_space<vmem>>, %arg7: memref<1x32xf32, #tpu.memory_space<vmem>>, %arg8: memref<1x1xf32, #tpu.memory_space<vmem>>, %arg9: memref<2x12x128xf32, #tpu.memory_space<vmem>>) attributes {dimension_semantics = [#tpu.dimension_semantics<parallel>], iteration_bounds = array<i64: 1>, scalar_prefetch = 0 : i64, scratch_operands = 0 : i64, tpu.core_type = #tpu.core_type<tc>, window_params = [{transform_indices = @transform_0, window_bounds = array<i64: 2, 12, 32>}, {transform_indices = @transform_1, window_bounds = array<i64: 2, 8, 32>}, {transform_indices = @transform_2, window_bounds = array<i64: 2, 12, 1>}, {transform_indices = @transform_3, window_bounds = array<i64: 2, 1, 8>}, {pipeline_mode = #tpu.pipeline_mode<synchronous>, transform_indices = @transform_4, window_bounds = array<i64: 1, 32>}, {pipeline_mode = #tpu.pipeline_mode<synchronous>, transform_indices = @transform_5, window_bounds = array<i64: 1, 32>}, {pipeline_mode = #tpu.pipeline_mode<synchronous>, transform_indices = @transform_6, window_bounds = array<i64: 1, 32>}, {pipeline_mode = #tpu.pipeline_mode<synchronous>, transform_indices = @transform_7, window_bounds = array<i64: 1, 1>}, {transform_indices = @transform_8, window_bounds = array<i64: 2, 12, 128>}]} {
    %c0 = arith.constant 0 : index
    %c0_0 = arith.constant 0 : index
    %c0_1 = arith.constant 0 : index
    %0 = vector.load %arg1[%c0, %c0_0, %c0_1] : memref<2x12x32xf32, #tpu.memory_space<vmem>>, vector<2x12x32xf32>
    %c0_2 = arith.constant 0 : index
    %c0_3 = arith.constant 0 : index
    %c0_4 = arith.constant 0 : index
    %1 = vector.load %arg2[%c0_2, %c0_3, %c0_4] : memref<2x8x32xf32, #tpu.memory_space<vmem>>, vector<2x8x32xf32>
    %c0_5 = arith.constant 0 : index
    %c0_6 = arith.constant 0 : index
    %c0_7 = arith.constant 0 : index
    %2 = vector.load %arg3[%c0_5, %c0_6, %c0_7] : memref<2x12x1xf32, #tpu.memory_space<vmem>>, vector<2x12x1xf32>
    %c0_8 = arith.constant 0 : index
    %c0_9 = arith.constant 0 : index
    %c0_10 = arith.constant 0 : index
    %3 = vector.load %arg4[%c0_8, %c0_9, %c0_10] : memref<2x1x8xf32, #tpu.memory_space<vmem>>, vector<2x1x8xf32>
    %4 = arith.truncf %0 : vector<2x12x32xf32> to vector<2x12x32xbf16>
    %5 = arith.truncf %1 : vector<2x8x32xf32> to vector<2x8x32xbf16>
    %c0_11 = arith.constant 0 : index
    %c0_12 = arith.constant 0 : index
    %6 = vector.load %arg5[%c0_11, %c0_12] : memref<1x32xf32, #tpu.memory_space<vmem>>, vector<1x32xf32>
    %7 = vector.shape_cast %6 : vector<1x32xf32> to vector<1x1x32xf32>
    %8 = vector.broadcast %7 : vector<1x1x32xf32> to vector<2x12x32xf32>
    %9 = arith.mulf %0, %8 : vector<2x12x32xf32>
    %cst = arith.constant dense<0.000000e+00> : vector<2x12xf32>
    %10 = vector.multi_reduction <add>, %9, %cst [2] : vector<2x12x32xf32> to vector<2x12xf32>
    %11 = vector.shape_cast %10 : vector<2x12xf32> to vector<2x12x1xf32>
    %c0_13 = arith.constant 0 : index
    %c0_14 = arith.constant 0 : index
    %12 = vector.load %arg6[%c0_13, %c0_14] : memref<1x32xf32, #tpu.memory_space<vmem>>, vector<1x32xf32>
    %13 = vector.shape_cast %12 : vector<1x32xf32> to vector<1x1x32xf32>
    %14 = vector.broadcast %13 : vector<1x1x32xf32> to vector<2x8x32xf32>
    %15 = arith.mulf %1, %14 : vector<2x8x32xf32>
    %cst_15 = arith.constant dense<0.000000e+00> : vector<2x8xf32>
    %16 = vector.multi_reduction <add>, %15, %cst_15 [2] : vector<2x8x32xf32> to vector<2x8xf32>
    %17 = vector.shape_cast %16 : vector<2x8xf32> to vector<2x1x8xf32>
    %c0_16 = arith.constant 0 : index
    %c0_17 = arith.constant 0 : index
    %18 = vector.load %arg7[%c0_16, %c0_17] : memref<1x32xf32, #tpu.memory_space<vmem>>, vector<1x32xf32>
    %19 = vector.shape_cast %18 : vector<1x32xf32> to vector<1x1x32xf32>
    %20 = vector.broadcast %19 : vector<1x1x32xf32> to vector<2x12x32xf32>
    %21 = arith.mulf %0, %20 : vector<2x12x32xf32>
    %22 = arith.truncf %21 : vector<2x12x32xf32> to vector<2x12x32xbf16>
    "tpu.trace_start"() <{level = 10 : i32, message = "bcd,bqd->bcq"}> : () -> ()
    %cst_18 = arith.constant dense<0.000000e+00> : vector<2x12x8xf32>
    %23 = tpu.matmul %22, %5, %cst_18 {dimension_numbers = #tpu.dot_dimension_numbers<[2], [2], [1], [1], [0, 0, 0, 1, 1, 1], [0], [0]>} : vector<2x12x32xbf16>, vector<2x8x32xbf16>, vector<2x12x8xf32> -> vector<2x12x8xf32>
    "tpu.trace_stop"() : () -> ()
    %24 = vector.broadcast %11 : vector<2x12x1xf32> to vector<2x12x8xf32>
    %25 = vector.broadcast %17 : vector<2x1x8xf32> to vector<2x12x8xf32>
    %26 = arith.addf %24, %25 : vector<2x12x8xf32>
    %27 = arith.addf %26, %23 : vector<2x12x8xf32>
    %c0_19 = arith.constant 0 : index
    %c0_20 = arith.constant 0 : index
    %28 = vector.load %arg8[%c0_19, %c0_20] : memref<1x1xf32, #tpu.memory_space<vmem>>, vector<1x1xf32>
    %29 = vector.shape_cast %28 : vector<1x1xf32> to vector<1x1x1xf32>
    %30 = vector.broadcast %29 : vector<1x1x1xf32> to vector<2x12x8xf32>
    %31 = arith.addf %27, %30 : vector<2x12x8xf32>
    %32 = vector.broadcast %3 : vector<2x1x8xf32> to vector<2x12x8xf32>
    %33 = arith.mulf %32, %31 : vector<2x12x8xf32>
    %cst_21 = arith.constant 1.000000e+00 : f32
    %34 = vector.broadcast %cst_21 : f32 to vector<2x1x8xf32>
    %35 = arith.subf %34, %3 : vector<2x1x8xf32>
    %cst_22 = arith.constant -1.000000e+30 : f32
    %36 = vector.broadcast %cst_22 : f32 to vector<2x1x8xf32>
    %37 = arith.mulf %35, %36 : vector<2x1x8xf32>
    %38 = vector.broadcast %37 : vector<2x1x8xf32> to vector<2x12x8xf32>
    %39 = arith.addf %33, %38 : vector<2x12x8xf32>
    %cst_23 = arith.constant dense<0xFF800000> : vector<2x12xf32>
    %40 = vector.multi_reduction <maximumf>, %39, %cst_23 [2] : vector<2x12x8xf32> to vector<2x12xf32>
    %41 = vector.shape_cast %40 : vector<2x12xf32> to vector<2x12x1xf32>
    %42 = vector.broadcast %41 : vector<2x12x1xf32> to vector<2x12x8xf32>
    %43 = arith.subf %39, %42 : vector<2x12x8xf32>
    %44 = math.exp %43 : vector<2x12x8xf32>
    %cst_24 = arith.constant dense<0.000000e+00> : vector<2x12xf32>
    %45 = vector.multi_reduction <add>, %44, %cst_24 [2] : vector<2x12x8xf32> to vector<2x12xf32>
    %46 = vector.shape_cast %45 : vector<2x12xf32> to vector<2x12x1xf32>
    %47 = tpu.reciprocal %46 {approx = true} : vector<2x12x1xf32> -> vector<2x12x1xf32>
    %48 = vector.broadcast %47 : vector<2x12x1xf32> to vector<2x12x8xf32>
    %49 = arith.mulf %44, %48 : vector<2x12x8xf32>
    %50 = vector.broadcast %2 : vector<2x12x1xf32> to vector<2x12x8xf32>
    %51 = arith.mulf %50, %31 : vector<2x12x8xf32>
    %cst_25 = arith.constant 1.000000e+00 : f32
    %52 = vector.broadcast %cst_25 : f32 to vector<2x12x1xf32>
    %53 = arith.subf %52, %2 : vector<2x12x1xf32>
    %cst_26 = arith.constant -1.000000e+30 : f32
    %54 = vector.broadcast %cst_26 : f32 to vector<2x12x1xf32>
    %55 = arith.mulf %53, %54 : vector<2x12x1xf32>
    %56 = vector.broadcast %55 : vector<2x12x1xf32> to vector<2x12x8xf32>
    %57 = arith.addf %51, %56 : vector<2x12x8xf32>
    %cst_27 = arith.constant dense<0xFF800000> : vector<2x8xf32>
    %58 = vector.multi_reduction <maximumf>, %57, %cst_27 [1] : vector<2x12x8xf32> to vector<2x8xf32>
    %59 = vector.shape_cast %58 : vector<2x8xf32> to vector<2x1x8xf32>
    %60 = vector.broadcast %59 : vector<2x1x8xf32> to vector<2x12x8xf32>
    %61 = arith.subf %57, %60 : vector<2x12x8xf32>
    %62 = math.exp %61 : vector<2x12x8xf32>
    %cst_28 = arith.constant dense<0.000000e+00> : vector<2x8xf32>
    %63 = vector.multi_reduction <add>, %62, %cst_28 [1] : vector<2x12x8xf32> to vector<2x8xf32>
    %64 = vector.shape_cast %63 : vector<2x8xf32> to vector<2x1x8xf32>
    %65 = tpu.reciprocal %64 {approx = true} : vector<2x1x8xf32> -> vector<2x1x8xf32>
    %66 = vector.broadcast %65 : vector<2x1x8xf32> to vector<2x12x8xf32>
    %67 = arith.mulf %62, %66 : vector<2x12x8xf32>
    %68 = arith.truncf %49 : vector<2x12x8xf32> to vector<2x12x8xbf16>
    "tpu.trace_start"() <{level = 10 : i32, message = "bcq,bqd->bcd"}> : () -> ()
    %cst_29 = arith.constant dense<0.000000e+00> : vector<2x12x32xf32>
    %69 = tpu.matmul %68, %5, %cst_29 {dimension_numbers = #tpu.dot_dimension_numbers<[2], [1], [1], [2], [0, 0, 0, 1, 1, 2], [0], [0]>} : vector<2x12x8xbf16>, vector<2x8x32xbf16>, vector<2x12x32xf32> -> vector<2x12x32xf32>
    "tpu.trace_stop"() : () -> ()
    %70 = arith.truncf %67 : vector<2x12x8xf32> to vector<2x12x8xbf16>
    "tpu.trace_start"() <{level = 10 : i32, message = "bcq,bkq->bck"}> : () -> ()
    %cst_30 = arith.constant dense<0.000000e+00> : vector<2x12x12xf32>
    %71 = tpu.matmul %68, %70, %cst_30 {dimension_numbers = #tpu.dot_dimension_numbers<[2], [2], [1], [1], [0, 0, 0, 1, 1, 1], [0], [0]>} : vector<2x12x8xbf16>, vector<2x12x8xbf16>, vector<2x12x12xf32> -> vector<2x12x12xf32>
    "tpu.trace_stop"() : () -> ()
    %72 = arith.truncf %71 : vector<2x12x12xf32> to vector<2x12x12xbf16>
    "tpu.trace_start"() <{level = 10 : i32, message = "bck,bkd->bcd"}> : () -> ()
    %cst_31 = arith.constant dense<0.000000e+00> : vector<2x12x32xf32>
    %73 = tpu.matmul %72, %4, %cst_31 {dimension_numbers = #tpu.dot_dimension_numbers<[2], [1], [1], [2], [0, 0, 0, 1, 1, 2], [0], [0]>} : vector<2x12x12xbf16>, vector<2x12x32xbf16>, vector<2x12x32xf32> -> vector<2x12x32xf32>
    "tpu.trace_stop"() : () -> ()
    %c0_32 = arith.constant 0 : index
    %c0_33 = arith.constant 0 : index
    %c0_34 = arith.constant 0 : index
    %74 = vector.load %arg9[%c0_32, %c0_33, %c0_34] : memref<2x12x128xf32, #tpu.memory_space<vmem>>, vector<2x12x32xf32>
    tpu.vector_store %arg9[%c0_32, %c0_33, %c0_34], %0 {strides = array<i32>} : memref<2x12x128xf32, #tpu.memory_space<vmem>>, vector<2x12x32xf32>,
    %c0_35 = arith.constant 0 : index
    %c0_36 = arith.constant 0 : index
    %c32 = arith.constant 32 : index
    %75 = vector.load %arg9[%c0_35, %c0_36, %c32] : memref<2x12x128xf32, #tpu.memory_space<vmem>>, vector<2x12x32xf32>
    tpu.vector_store %arg9[%c0_35, %c0_36, %c32], %69 {strides = array<i32>} : memref<2x12x128xf32, #tpu.memory_space<vmem>>, vector<2x12x32xf32>,
    %76 = arith.mulf %0, %69 : vector<2x12x32xf32>
    %c0_37 = arith.constant 0 : index
    %c0_38 = arith.constant 0 : index
    %c64 = arith.constant 64 : index
    %77 = vector.load %arg9[%c0_37, %c0_38, %c64] : memref<2x12x128xf32, #tpu.memory_space<vmem>>, vector<2x12x32xf32>
    tpu.vector_store %arg9[%c0_37, %c0_38, %c64], %76 {strides = array<i32>} : memref<2x12x128xf32, #tpu.memory_space<vmem>>, vector<2x12x32xf32>,
    %78 = arith.mulf %0, %73 : vector<2x12x32xf32>
    %c0_39 = arith.constant 0 : index
    %c0_40 = arith.constant 0 : index
    %c96 = arith.constant 96 : index
    %79 = vector.load %arg9[%c0_39, %c0_40, %c96] : memref<2x12x128xf32, #tpu.memory_space<vmem>>, vector<2x12x32xf32>
    tpu.vector_store %arg9[%c0_39, %c0_40, %c96], %78 {strides = array<i32>} : memref<2x12x128xf32, #tpu.memory_space<vmem>>, vector<2x12x32xf32>,
    return
  }
  func.func @transform_0(%arg0: i32) -> (i32, i32, i32) {
    %c0_i32 = arith.constant 0 : i32
    %c0_i32_0 = arith.constant 0 : i32
    %c0_i32_1 = arith.constant 0 : i32
    return %arg0, %c0_i32, %c0_i32_0 : i32, i32, i32
  }
  func.func @transform_1(%arg0: i32) -> (i32, i32, i32) {
    %c0_i32 = arith.constant 0 : i32
    %c0_i32_0 = arith.constant 0 : i32
    %c0_i32_1 = arith.constant 0 : i32
    return %arg0, %c0_i32, %c0_i32_0 : i32, i32, i32
  }
  func.func @transform_2(%arg0: i32) -> (i32, i32, i32) {
    %c0_i32 = arith.constant 0 : i32
    %c0_i32_0 = arith.constant 0 : i32
    %c0_i32_1 = arith.constant 0 : i32
    return %arg0, %c0_i32, %c0_i32_0 : i32, i32, i32
  }
  func.func @transform_3(%arg0: i32) -> (i32, i32, i32) {
    %c0_i32 = arith.constant 0 : i32
    %c0_i32_0 = arith.constant 0 : i32
    %c0_i32_1 = arith.constant 0 : i32
    return %arg0, %c0_i32, %c0_i32_0 : i32, i32, i32
  }
  func.func @transform_4(%arg0: i32) -> (i32, i32) {
    %c0_i32 = arith.constant 0 : i32
    %c0_i32_0 = arith.constant 0 : i32
    %c0_i32_1 = arith.constant 0 : i32
    return %c0_i32, %c0_i32_0 : i32, i32
  }
  func.func @transform_5(%arg0: i32) -> (i32, i32) {
    %c0_i32 = arith.constant 0 : i32
    %c0_i32_0 = arith.constant 0 : i32
    %c0_i32_1 = arith.constant 0 : i32
    return %c0_i32, %c0_i32_0 : i32, i32
  }
  func.func @transform_6(%arg0: i32) -> (i32, i32) {
    %c0_i32 = arith.constant 0 : i32
    %c0_i32_0 = arith.constant 0 : i32
    %c0_i32_1 = arith.constant 0 : i32
    return %c0_i32, %c0_i32_0 : i32, i32
  }
  func.func @transform_7(%arg0: i32) -> (i32, i32) {
    %c0_i32 = arith.constant 0 : i32
    %c0_i32_0 = arith.constant 0 : i32
    %c0_i32_1 = arith.constant 0 : i32
    return %c0_i32, %c0_i32_0 : i32, i32
  }
  func.func @transform_8(%arg0: i32) -> (i32, i32, i32) {
    %c0_i32 = arith.constant 0 : i32
    %c0_i32_0 = arith.constant 0 : i32
    %c0_i32_1 = arith.constant 0 : i32
    return %arg0, %c0_i32, %c0_i32_0 : i32, i32, i32
  }
}

module attributes {stable_mosaic.version = 11 : i64} {
  func.func @_linear_kernel(%arg0: i32, %arg1: memref<24x128xf32, #tpu.memory_space<vmem>>, %arg2: memref<128x128xbf16, #tpu.memory_space<vmem>>, %arg3: memref<1x128xf32, #tpu.memory_space<vmem>>, %arg4: memref<24x128xf32, #tpu.memory_space<vmem>>) attributes {dimension_semantics = [#tpu.dimension_semantics<parallel>], iteration_bounds = array<i64: 1>, scalar_prefetch = 0 : i64, scratch_operands = 0 : i64, tpu.core_type = #tpu.core_type<tc>, window_params = [{transform_indices = @transform_0, window_bounds = array<i64: 24, 128>}, {pipeline_mode = #tpu.pipeline_mode<synchronous>, transform_indices = @transform_1, window_bounds = array<i64: 128, 128>}, {pipeline_mode = #tpu.pipeline_mode<synchronous>, transform_indices = @transform_2, window_bounds = array<i64: 1, 128>}, {transform_indices = @transform_3, window_bounds = array<i64: 24, 128>}]} {
    %c0 = arith.constant 0 : index
    %c0_0 = arith.constant 0 : index
    %0 = vector.load %arg1[%c0, %c0_0] : memref<24x128xf32, #tpu.memory_space<vmem>>, vector<24x128xf32>
    %1 = arith.truncf %0 : vector<24x128xf32> to vector<24x128xbf16>
    %c0_1 = arith.constant 0 : index
    %c0_2 = arith.constant 0 : index
    %2 = vector.load %arg2[%c0_1, %c0_2] : memref<128x128xbf16, #tpu.memory_space<vmem>>, vector<128x128xbf16>
    %cst = arith.constant dense<0.000000e+00> : vector<24x128xf32>
    %3 = tpu.matmul %1, %2, %cst {dimension_numbers = #tpu.dot_dimension_numbers<[1], [0], [0], [1], [0, 0, 1, 1], [], []>} : vector<24x128xbf16>, vector<128x128xbf16>, vector<24x128xf32> -> vector<24x128xf32>
    %c0_3 = arith.constant 0 : index
    %c0_4 = arith.constant 0 : index
    %4 = vector.load %arg3[%c0_3, %c0_4] : memref<1x128xf32, #tpu.memory_space<vmem>>, vector<1x128xf32>
    %5 = vector.broadcast %4 : vector<1x128xf32> to vector<24x128xf32>
    %6 = arith.addf %3, %5 : vector<24x128xf32>
    %c0_5 = arith.constant 0 : index
    %c0_6 = arith.constant 0 : index
    %7 = vector.load %arg4[%c0_5, %c0_6] : memref<24x128xf32, #tpu.memory_space<vmem>>, vector<24x128xf32>
    tpu.vector_store %arg4[%c0_5, %c0_6], %6 {strides = array<i32>} : memref<24x128xf32, #tpu.memory_space<vmem>>, vector<24x128xf32>,
    return
  }
  func.func @transform_0(%arg0: i32) -> (i32, i32) {
    %c0_i32 = arith.constant 0 : i32
    %c0_i32_0 = arith.constant 0 : i32
    return %arg0, %c0_i32 : i32, i32
  }
  func.func @transform_1(%arg0: i32) -> (i32, i32) {
    %c0_i32 = arith.constant 0 : i32
    %c0_i32_0 = arith.constant 0 : i32
    %c0_i32_1 = arith.constant 0 : i32
    return %c0_i32, %c0_i32_0 : i32, i32
  }
  func.func @transform_2(%arg0: i32) -> (i32, i32) {
    %c0_i32 = arith.constant 0 : i32
    %c0_i32_0 = arith.constant 0 : i32
    %c0_i32_1 = arith.constant 0 : i32
    return %c0_i32, %c0_i32_0 : i32, i32
  }
  func.func @transform_3(%arg0: i32) -> (i32, i32) {
    %c0_i32 = arith.constant 0 : i32
    %c0_i32_0 = arith.constant 0 : i32
    return %arg0, %c0_i32 : i32, i32
  }
}

module attributes {stable_mosaic.version = 11 : i64} {
  func.func @_linear_kernel(%arg0: i32, %arg1: memref<24x32xf32, #tpu.memory_space<vmem>>, %arg2: memref<32x128xbf16, #tpu.memory_space<vmem>>, %arg3: memref<1x128xf32, #tpu.memory_space<vmem>>, %arg4: memref<24x128xf32, #tpu.memory_space<vmem>>) attributes {dimension_semantics = [#tpu.dimension_semantics<parallel>], iteration_bounds = array<i64: 1>, scalar_prefetch = 0 : i64, scratch_operands = 0 : i64, tpu.core_type = #tpu.core_type<tc>, window_params = [{transform_indices = @transform_0, window_bounds = array<i64: 24, 32>}, {pipeline_mode = #tpu.pipeline_mode<synchronous>, transform_indices = @transform_1, window_bounds = array<i64: 32, 128>}, {pipeline_mode = #tpu.pipeline_mode<synchronous>, transform_indices = @transform_2, window_bounds = array<i64: 1, 128>}, {transform_indices = @transform_3, window_bounds = array<i64: 24, 128>}]} {
    %c0 = arith.constant 0 : index
    %c0_0 = arith.constant 0 : index
    %0 = vector.load %arg1[%c0, %c0_0] : memref<24x32xf32, #tpu.memory_space<vmem>>, vector<24x32xf32>
    %1 = arith.truncf %0 : vector<24x32xf32> to vector<24x32xbf16>
    %c0_1 = arith.constant 0 : index
    %c0_2 = arith.constant 0 : index
    %2 = vector.load %arg2[%c0_1, %c0_2] : memref<32x128xbf16, #tpu.memory_space<vmem>>, vector<32x128xbf16>
    %cst = arith.constant dense<0.000000e+00> : vector<24x128xf32>
    %3 = tpu.matmul %1, %2, %cst {dimension_numbers = #tpu.dot_dimension_numbers<[1], [0], [0], [1], [0, 0, 1, 1], [], []>} : vector<24x32xbf16>, vector<32x128xbf16>, vector<24x128xf32> -> vector<24x128xf32>
    %c0_3 = arith.constant 0 : index
    %c0_4 = arith.constant 0 : index
    %4 = vector.load %arg3[%c0_3, %c0_4] : memref<1x128xf32, #tpu.memory_space<vmem>>, vector<1x128xf32>
    %5 = vector.broadcast %4 : vector<1x128xf32> to vector<24x128xf32>
    %6 = arith.addf %3, %5 : vector<24x128xf32>
    %c0_5 = arith.constant 0 : index
    %c0_6 = arith.constant 0 : index
    %7 = vector.load %arg4[%c0_5, %c0_6] : memref<24x128xf32, #tpu.memory_space<vmem>>, vector<24x128xf32>
    tpu.vector_store %arg4[%c0_5, %c0_6], %6 {strides = array<i32>} : memref<24x128xf32, #tpu.memory_space<vmem>>, vector<24x128xf32>,
    return
  }
  func.func @transform_0(%arg0: i32) -> (i32, i32) {
    %c0_i32 = arith.constant 0 : i32
    %c0_i32_0 = arith.constant 0 : i32
    return %arg0, %c0_i32 : i32, i32
  }
  func.func @transform_1(%arg0: i32) -> (i32, i32) {
    %c0_i32 = arith.constant 0 : i32
    %c0_i32_0 = arith.constant 0 : i32
    %c0_i32_1 = arith.constant 0 : i32
    return %c0_i32, %c0_i32_0 : i32, i32
  }
  func.func @transform_2(%arg0: i32) -> (i32, i32) {
    %c0_i32 = arith.constant 0 : i32
    %c0_i32_0 = arith.constant 0 : i32
    %c0_i32_1 = arith.constant 0 : i32
    return %c0_i32, %c0_i32_0 : i32, i32
  }
  func.func @transform_3(%arg0: i32) -> (i32, i32) {
    %c0_i32 = arith.constant 0 : i32
    %c0_i32_0 = arith.constant 0 : i32
    return %arg0, %c0_i32 : i32, i32
  }
}

module attributes {stable_mosaic.version = 11 : i64} {
  func.func @_pointer_kernel(%arg0: i32, %arg1: memref<2x12x128xf32, #tpu.memory_space<vmem>>, %arg2: memref<2x12x32xf32, #tpu.memory_space<vmem>>, %arg3: memref<1x128xf32, #tpu.memory_space<vmem>>, %arg4: memref<1x32xf32, #tpu.memory_space<vmem>>, %arg5: memref<1x1xf32, #tpu.memory_space<vmem>>, %arg6: memref<2x12xf32, #tpu.memory_space<vmem>>, %arg7: memref<2x12xf32, #tpu.memory_space<vmem>>) attributes {dimension_semantics = [#tpu.dimension_semantics<parallel>], iteration_bounds = array<i64: 1>, scalar_prefetch = 0 : i64, scratch_operands = 0 : i64, tpu.core_type = #tpu.core_type<tc>, window_params = [{transform_indices = @transform_0, window_bounds = array<i64: 2, 12, 128>}, {transform_indices = @transform_1, window_bounds = array<i64: 2, 12, 32>}, {pipeline_mode = #tpu.pipeline_mode<synchronous>, transform_indices = @transform_2, window_bounds = array<i64: 1, 128>}, {pipeline_mode = #tpu.pipeline_mode<synchronous>, transform_indices = @transform_3, window_bounds = array<i64: 1, 32>}, {pipeline_mode = #tpu.pipeline_mode<synchronous>, transform_indices = @transform_4, window_bounds = array<i64: 1, 1>}, {transform_indices = @transform_5, window_bounds = array<i64: 2, 12>}, {transform_indices = @transform_6, window_bounds = array<i64: 2, 12>}]} {
    %c0 = arith.constant 0 : index
    %c0_0 = arith.constant 0 : index
    %c0_1 = arith.constant 0 : index
    %0 = vector.load %arg1[%c0, %c0_0, %c0_1] : memref<2x12x128xf32, #tpu.memory_space<vmem>>, vector<2x12x128xf32>
    %c0_2 = arith.constant 0 : index
    %c0_3 = arith.constant 0 : index
    %1 = vector.load %arg3[%c0_2, %c0_3] : memref<1x128xf32, #tpu.memory_space<vmem>>, vector<1x128xf32>
    %2 = vector.shape_cast %1 : vector<1x128xf32> to vector<1x1x128xf32>
    %3 = vector.broadcast %2 : vector<1x1x128xf32> to vector<2x12x128xf32>
    %4 = arith.mulf %0, %3 : vector<2x12x128xf32>
    %cst = arith.constant dense<0.000000e+00> : vector<2x12xf32>
    %5 = vector.multi_reduction <add>, %4, %cst [2] : vector<2x12x128xf32> to vector<2x12xf32>
    %c0_4 = arith.constant 0 : index
    %c0_5 = arith.constant 0 : index
    %c0_6 = arith.constant 0 : index
    %6 = vector.load %arg2[%c0_4, %c0_5, %c0_6] : memref<2x12x32xf32, #tpu.memory_space<vmem>>, vector<2x12x32xf32>
    %c0_7 = arith.constant 0 : index
    %c0_8 = arith.constant 0 : index
    %7 = vector.load %arg4[%c0_7, %c0_8] : memref<1x32xf32, #tpu.memory_space<vmem>>, vector<1x32xf32>
    %8 = vector.shape_cast %7 : vector<1x32xf32> to vector<1x1x32xf32>
    %9 = vector.broadcast %8 : vector<1x1x32xf32> to vector<2x12x32xf32>
    %10 = arith.mulf %6, %9 : vector<2x12x32xf32>
    %cst_9 = arith.constant dense<0.000000e+00> : vector<2x12xf32>
    %11 = vector.multi_reduction <add>, %10, %cst_9 [2] : vector<2x12x32xf32> to vector<2x12xf32>
    %12 = arith.addf %5, %11 : vector<2x12xf32>
    %c0_10 = arith.constant 0 : index
    %c0_11 = arith.constant 0 : index
    %13 = vector.load %arg5[%c0_10, %c0_11] : memref<1x1xf32, #tpu.memory_space<vmem>>, vector<1x1xf32>
    %14 = vector.broadcast %13 : vector<1x1xf32> to vector<2x12xf32>
    %15 = arith.addf %12, %14 : vector<2x12xf32>
    %c0_12 = arith.constant 0 : index
    %c0_13 = arith.constant 0 : index
    %16 = vector.load %arg6[%c0_12, %c0_13] : memref<2x12xf32, #tpu.memory_space<vmem>>, vector<2x12xf32>
    %17 = arith.mulf %16, %15 : vector<2x12xf32>
    %cst_14 = arith.constant 1.000000e+00 : f32
    %18 = vector.broadcast %cst_14 : f32 to vector<2x12xf32>
    %19 = arith.subf %18, %16 : vector<2x12xf32>
    %cst_15 = arith.constant -1.000000e+30 : f32
    %20 = vector.broadcast %cst_15 : f32 to vector<2x12xf32>
    %21 = arith.mulf %19, %20 : vector<2x12xf32>
    %22 = arith.addf %17, %21 : vector<2x12xf32>
    %cst_16 = arith.constant dense<0xFF800000> : vector<2xf32>
    %23 = vector.multi_reduction <maximumf>, %22, %cst_16 [1] : vector<2x12xf32> to vector<2xf32>
    %24 = vector.shape_cast %23 : vector<2xf32> to vector<2x1xf32>
    %25 = vector.broadcast %24 : vector<2x1xf32> to vector<2x12xf32>
    %26 = arith.subf %22, %25 : vector<2x12xf32>
    %27 = math.exp %26 : vector<2x12xf32>
    %cst_17 = arith.constant dense<0.000000e+00> : vector<2xf32>
    %28 = vector.multi_reduction <add>, %27, %cst_17 [1] : vector<2x12xf32> to vector<2xf32>
    %29 = vector.shape_cast %28 : vector<2xf32> to vector<2x1xf32>
    %30 = math.log %29 : vector<2x1xf32>
    %31 = arith.addf %30, %24 : vector<2x1xf32>
    %32 = vector.broadcast %31 : vector<2x1xf32> to vector<2x12xf32>
    %33 = arith.subf %22, %32 : vector<2x12xf32>
    %c0_18 = arith.constant 0 : index
    %c0_19 = arith.constant 0 : index
    %34 = vector.load %arg7[%c0_18, %c0_19] : memref<2x12xf32, #tpu.memory_space<vmem>>, vector<2x12xf32>
    tpu.vector_store %arg7[%c0_18, %c0_19], %33 {strides = array<i32>} : memref<2x12xf32, #tpu.memory_space<vmem>>, vector<2x12xf32>,
    return
  }
  func.func @transform_0(%arg0: i32) -> (i32, i32, i32) {
    %c0_i32 = arith.constant 0 : i32
    %c0_i32_0 = arith.constant 0 : i32
    %c0_i32_1 = arith.constant 0 : i32
    return %arg0, %c0_i32, %c0_i32_0 : i32, i32, i32
  }
  func.func @transform_1(%arg0: i32) -> (i32, i32, i32) {
    %c0_i32 = arith.constant 0 : i32
    %c0_i32_0 = arith.constant 0 : i32
    %c0_i32_1 = arith.constant 0 : i32
    return %arg0, %c0_i32, %c0_i32_0 : i32, i32, i32
  }
  func.func @transform_2(%arg0: i32) -> (i32, i32) {
    %c0_i32 = arith.constant 0 : i32
    %c0_i32_0 = arith.constant 0 : i32
    %c0_i32_1 = arith.constant 0 : i32
    return %c0_i32, %c0_i32_0 : i32, i32
  }
  func.func @transform_3(%arg0: i32) -> (i32, i32) {
    %c0_i32 = arith.constant 0 : i32
    %c0_i32_0 = arith.constant 0 : i32
    %c0_i32_1 = arith.constant 0 : i32
    return %c0_i32, %c0_i32_0 : i32, i32
  }
  func.func @transform_4(%arg0: i32) -> (i32, i32) {
    %c0_i32 = arith.constant 0 : i32
    %c0_i32_0 = arith.constant 0 : i32
    %c0_i32_1 = arith.constant 0 : i32
    return %c0_i32, %c0_i32_0 : i32, i32
  }
  func.func @transform_5(%arg0: i32) -> (i32, i32) {
    %c0_i32 = arith.constant 0 : i32
    %c0_i32_0 = arith.constant 0 : i32
    return %arg0, %c0_i32 : i32, i32
  }
  func.func @transform_6(%arg0: i32) -> (i32, i32) {
    %c0_i32 = arith.constant 0 : i32
    %c0_i32_0 = arith.constant 0 : i32
    return %arg0, %c0_i32 : i32, i32
  }
}

</mosaic_0001>

<llo_original>
// kernel: bidaf_forward.17
$region0: #{bidaf_forward.17}
  #allocation0 [shape = 'u32[]', space=smem, size = 0x4, offset = 0x4, fixed_abs, tag = 'smem constant byte address 0x4 - core index']
  #allocation1 [shape = 'u32[144,128]{1,0:T(1,128)}', space=vmem, size = 0x12000, scoped, tag = 'internal scratch']
  %s0 = inlined_call_operand.vmem [shape: f32[24,16], index: 0, kind: input, shape index: {}]
  %s1 = inlined_call_operand.vmem [shape: bf16[16,128], index: 1, kind: input, shape index: {}]
  %s2 = inlined_call_operand.vmem [shape: f32[1,128], index: 2, kind: input, shape index: {}]
  %s3 = inlined_call_operand.vmem [shape: f32[24,128], index: 3, kind: output, shape index: {}]
  %s4 = sld [smem:[#allocation0]]
  $region22: #{bidaf_forward.17} parent=0
    _
  %s6 = ssub.s32 1, %s4
  %s7 = scalar_select 0, %s6, %s4
  // Predicated region
  $region2: #{bidaf_forward.17} parent=0 // pred_check
    _
  $region3: #{bidaf_forward.17} parent=0 // pred_check_branch
    %9 = sbr.rel (0) target = $region5
  $region4: #{bidaf_forward.17} parent=0 // pred_region
    _
  $region5: #{bidaf_forward.17} parent=0 // pred_fallthru
    _
  // Predicated region
  $region6: #{bidaf_forward.17} parent=0 // pred_check
    _
  $region7: #{bidaf_forward.17} parent=0 // pred_check_branch
    %11 = sbr.rel (0) target = $region9
  $region8: #{bidaf_forward.17} parent=0 // pred_region
    _
  $region9: #{bidaf_forward.17} parent=0 // pred_fallthru
    _
  // Predicated region
  $region10: #{bidaf_forward.17} parent=0 // pred_check
    _
  $region11: #{bidaf_forward.17} parent=0 // pred_check_branch
    %13 = sbr.rel (0) target = $region13
  $region12: #{bidaf_forward.17} parent=0 // pred_region
    _
  $region13: #{bidaf_forward.17} parent=0 // pred_fallthru
    _
  %v15 = vld [vmem:[%s0] sm:$0xff]
  %v16 = vld [vmem:[%s0 + $0x8] sm:$0xff]
  %v17 = vld [vmem:[%s0 + $0x10] sm:$0xff]
  %v18 = vpack.c.bf16 %v16, %v15
  %v19 = vpack.c.bf16 %v17, %v17
  %v20 = vld [vmem:[%s1] sm:$0xf]
  %v21 = vld [vmem:[%s1 + $0x4] sm:$0xf]
  %v22 = vld [vmem:[%s2] sm:$0x1]
  %v24 = vlaneseq
  %v25 = vshrl.u32 %v24, 7
  %v26 = vsub.s32 0, %v25
  %v27 = vrot.slane %v22, %v26
  %v31 = vunpack.c.l.b16 %v20
  %v32 = vunpack.c.l.b16 %v21
  %v33 = vpack.c.b16 %v32, %v31
  %vm35 = vcmask 130048
  %v37 = vsel %vm35, %v18, 0
  %v40 = vsel %vm35, %v19, 0
  %42 = vmatprep.subr.bf16.mxu0 0
  %43 = vmatpush1.bf16.msra.mxu0 %v33
  %44 = vmatprep.subr.bf16.mxu0 0
  %45 = vmatpush1.bf16.msra.mxu0 0
  %46 = vmatprep.subr.bf16.mxu0 0
  %47 = vmatpush1.bf16.msra.mxu0 0
  %48 = vmatprep.subr.bf16.mxu0 0
  %49 = vmatpush1.bf16.msra.mxu0 0
  %50 = vmatprep.subr.bf16.mxu0 0
  %51 = vmatpush1.bf16.msra.mxu0 0
  %52 = vmatprep.subr.bf16.mxu0 0
  %53 = vmatpush1.bf16.msra.mxu0 0
  %54 = vmatprep.subr.bf16.mxu0 0
  %55 = vmatpush1.bf16.msra.mxu0 0
  %56 = vmatprep.subr.bf16.mxu0 0
  %57 = vmatpush1.bf16.msra.mxu0 0
  %58 = vmatprep.subr.bf16.mxu0 0
  %59 = vmatpush1.bf16.msra.mxu0 0
  %60 = vmatprep.subr.bf16.mxu0 0
  %61 = vmatpush1.bf16.msra.mxu0 0
  %62 = vmatprep.subr.bf16.mxu0 0
  %63 = vmatpush1.bf16.msra.mxu0 0
  %64 = vmatprep.subr.bf16.mxu0 0
  %65 = vmatpush1.bf16.msra.mxu0 0
  %66 = vmatprep.subr.bf16.mxu0 0
  %67 = vmatpush1.bf16.msra.mxu0 0
  %68 = vmatprep.subr.bf16.mxu0 0
  %69 = vmatpush1.bf16.msra.mxu0 0
  %70 = vmatprep.subr.bf16.mxu0 0
  %71 = vmatpush1.bf16.msra.mxu0 0
  %72 = vmatprep.subr.bf16.mxu0 0
  %73 = vmatpush1.bf16.msra.mxu0 0
  %74 = vmatprep.mubr.bf16.mxu0 0
  %75 = vmatmul.mubr.bf16.gmra.mrb[0].mxu0 %v37
  %v76 = vpop.f32.mrb[0].mxu0
  %v77 = vadd.f32 %v27, %v76
  %v78 = vpop.f32.mrb[0].mxu0
  %v79 = vpop.f32.mrb[0].mxu0
  %v80 = vadd.f32 %v27, %v79
  %v81 = vpop.f32.mrb[0].mxu0
  %82 = vmatprep.mubr.bf16.mxu0 0
  %83 = vmatmul.mubr.bf16.gmra.mrb[0].mxu0 %v40
  %v84 = vpop.f32.mrb[0].mxu0
  %v85 = vadd.f32 %v27, %v84
  %v86 = vpop.f32.mrb[0].mxu0
  %v87 = vpop.f32.mrb[0].mxu0
  %v88 = vpop.f32.mrb[0].mxu0
  %89 = vdwg.mxu0
  %90 = vst [vmem:[%s3] sm:$0xff] %v77
  %91 = vst [vmem:[%s3 + $0x8] sm:$0xff] %v80
  %92 = vst [vmem:[%s3 + $0x10] sm:$0xff] %v85
  // Predicated region
  $region14: #{bidaf_forward.17} parent=0 // pred_check
    _
  $region15: #{bidaf_forward.17} parent=0 // pred_check_branch
    %94 = sbr.rel (0) target = $region17
  $region16: #{bidaf_forward.17} parent=0 // pred_region
    _
  $region17: #{bidaf_forward.17} parent=0 // pred_fallthru
    _
  // Predicated region
  $region18: #{bidaf_forward.17} parent=0 // pred_check
    _
  $region19: #{bidaf_forward.17} parent=0 // pred_check_branch
    %96 = sbr.rel (0) target = $region21
  $region20: #{bidaf_forward.17} parent=0 // pred_region
    _
  $region21: #{bidaf_forward.17} parent=0 // pred_fallthru
    _

// kernel: bidaf_forward.18
$region0: #{bidaf_forward.18}
  #allocation0 [shape = 'u32[]', space=smem, size = 0x4, offset = 0x4, fixed_abs, tag = 'smem constant byte address 0x4 - core index']
  #allocation1 [shape = 'u32[144,128]{1,0:T(1,128)}', space=vmem, size = 0x12000, scoped, tag = 'internal scratch']
  %s0 = inlined_call_operand.vmem [shape: f32[12,2,128], index: 0, kind: input, shape index: {}]
  %s1 = inlined_call_operand.vmem [shape: bf16[32,128], index: 1, kind: input, shape index: {}]
  %s2 = inlined_call_operand.vmem [shape: f32[12,2,1], index: 2, kind: input, shape index: {}]
  %s3 = inlined_call_operand.vmem [shape: f32[1,128], index: 3, kind: input, shape index: {}]
  %s4 = inlined_call_operand.vmem [shape: f32[1,32], index: 4, kind: input, shape index: {}]
  %s5 = inlined_call_operand.vmem [shape: f32[12,2,16], index: 5, kind: output, shape index: {0}]
  %s6 = inlined_call_operand.vmem [shape: f32[12,2,16], index: 6, kind: output, shape index: {1}]
  %7 = xla_tuple %s5, %s6
  %s8 = sld [smem:[#allocation0]]
  $region45: #{bidaf_forward.18} parent=0
    _
  %s10 = ssub.s32 1, %s8
  %s11 = scalar_select 0, %s10, %s8
  // Predicated region
  $region2: #{bidaf_forward.18} parent=0 // pred_check
    _
  $region3: #{bidaf_forward.18} parent=0 // pred_check_branch
    %13 = sbr.rel (0) target = $region5
  $region4: #{bidaf_forward.18} parent=0 // pred_region
    _
  $region5: #{bidaf_forward.18} parent=0 // pred_fallthru
    _
  // Predicated region
  $region6: #{bidaf_forward.18} parent=0 // pred_check
    _
  $region7: #{bidaf_forward.18} parent=0 // pred_check_branch
    %15 = sbr.rel (0) target = $region9
  $region8: #{bidaf_forward.18} parent=0 // pred_region
    _
  $region9: #{bidaf_forward.18} parent=0 // pred_fallthru
    _
  // Predicated region
  $region10: #{bidaf_forward.18} parent=0 // pred_check
    _
  $region11: #{bidaf_forward.18} parent=0 // pred_check_branch
    %17 = sbr.rel (0) target = $region13
  $region12: #{bidaf_forward.18} parent=0 // pred_region
    _
  $region13: #{bidaf_forward.18} parent=0 // pred_fallthru
    _
  // Predicated region
  $region14: #{bidaf_forward.18} parent=0 // pred_check
    _
  $region15: #{bidaf_forward.18} parent=0 // pred_check_branch
    %19 = sbr.rel (0) target = $region17
  $region16: #{bidaf_forward.18} parent=0 // pred_region
    _
  $region17: #{bidaf_forward.18} parent=0 // pred_fallthru
    _
  // Predicated region
  $region18: #{bidaf_forward.18} parent=0 // pred_check
    _
  $region19: #{bidaf_forward.18} parent=0 // pred_check_branch
    %21 = sbr.rel (0) target = $region21
  $region20: #{bidaf_forward.18} parent=0 // pred_region
    _
  $region21: #{bidaf_forward.18} parent=0 // pred_fallthru
    _
  %v23 = vld [vmem:[%s1] sm:$0xf]
  %v24 = vld [vmem:[%s1 + $0x4] sm:$0xf]
  %v25 = vld [vmem:[%s1 + $0x8] sm:$0xf]
  %v26 = vld [vmem:[%s1 + $0xc] sm:$0xf]
  %v27 = vld [vmem:[%s3] sm:$0x1]
  %v28 = vld [vmem:[%s4] sm:$0x1]
  loop: start=0, step=1, limit=12
  $region22: #{bidaf_forward.18} parent=0 // loop_pre_header
    _
  $region23: #{bidaf_forward.18} parent=0 // loop_header
    %s30 = sphi 0, %s34
    %p31 = scmp.ge.s32.totalorder %s30, 12
    %v35 = vphi 0.0, %v198
    %v36 = vphi 0.0, %v205
  $region24: #{bidaf_forward.18} parent=0 // loop_header_branch
    %33 = sbr.rel (%p31) target = $region28
  $region25: #{bidaf_forward.18} parent=0 // loop_body
    %s37 = ssub.s32 11, %s30
    %s38 = smul.u32 %s30, 2
    %s39 = scalar_lea.vmem %s0, %s38
    %v40 = vld [vmem:[%s39] sm:$0x3]
    %v42 = vlaneseq
    %v43 = vshrl.u32 %v42, 7
    %v44 = vsub.s32 0, %v43
    %v45 = vrot.slane %v27, %v44
    %v47 = vmul.f32 %v45, %v40
    %v48 = vsub.f32 1.0, %v27
    %s49 = smul.u32 %s37, 2
    %s50 = scalar_lea.vmem %s0, %s49
    %v51 = vld [vmem:[%s50] sm:$0x3]
    %v53 = vlaneseq
    %v54 = vshrl.u32 %v53, 7
    %v55 = vsub.s32 0, %v54
    %v56 = vrot.slane %v48, %v55
    %v58 = vmul.f32 %v56, %v51
    %v59 = vadd.f32 %v47, %v58
    %v60 = vpack.c.bf16 %v35, %v35
    %v65 = vunpack.c.l.b16 %v23
    %v66 = vunpack.c.l.b16 %v24
    %v67 = vunpack.c.l.b16 %v25
    %v68 = vunpack.c.l.b16 %v26
    %v69 = vpack.c.b16 %v66, %v65
    %v70 = vpack.c.b16 %v68, %v67
    %vm73 = vcmask 261120
    %v75 = vsel %vm73, %v60, 0
    %77 = vmatprep.subr.bf16.mxu0 0
    %78 = vmatpush1.bf16.msra.mxu0 %v69
    %79 = vmatprep.subr.bf16.mxu0 0
    %80 = vmatpush1.bf16.msra.mxu0 %v70
    %81 = vmatprep.subr.bf16.mxu0 0
    %82 = vmatpush1.bf16.msra.mxu0 0
    %83 = vmatprep.subr.bf16.mxu0 0
    %84 = vmatpush1.bf16.msra.mxu0 0
    %85 = vmatprep.subr.bf16.mxu0 0
    %86 = vmatpush1.bf16.msra.mxu0 0
    %87 = vmatprep.subr.bf16.mxu0 0
    %88 = vmatpush1.bf16.msra.mxu0 0
    %89 = vmatprep.subr.bf16.mxu0 0
    %90 = vmatpush1.bf16.msra.mxu0 0
    %91 = vmatprep.subr.bf16.mxu0 0
    %92 = vmatpush1.bf16.msra.mxu0 0
    %93 = vmatprep.subr.bf16.mxu0 0
    %94 = vmatpush1.bf16.msra.mxu0 0
    %95 = vmatprep.subr.bf16.mxu0 0
    %96 = vmatpush1.bf16.msra.mxu0 0
    %97 = vmatprep.subr.bf16.mxu0 0
    %98 = vmatpush1.bf16.msra.mxu0 0
    %99 = vmatprep.subr.bf16.mxu0 0
    %100 = vmatpush1.bf16.msra.mxu0 0
    %101 = vmatprep.subr.bf16.mxu0 0
    %102 = vmatpush1.bf16.msra.mxu0 0
    %103 = vmatprep.subr.bf16.mxu0 0
    %104 = vmatpush1.bf16.msra.mxu0 0
    %105 = vmatprep.subr.bf16.mxu0 0
    %106 = vmatpush1.bf16.msra.mxu0 0
    %107 = vmatprep.subr.bf16.mxu0 0
    %108 = vmatpush1.bf16.msra.mxu0 0
    %109 = vmatprep.mubr.bf16.mxu0 0
    %110 = vmatmul.mubr.bf16.gmra.mrb[0].mxu0 %v75
    %v111 = vpop.f32.mrb[0].mxu0
    %v112 = vadd.f32 0.0, %v111
    %v113 = vpop.f32.mrb[0].mxu0
    %v114 = vpop.f32.mrb[0].mxu0
    %v115 = vpop.f32.mrb[0].mxu0
    %116 = vdwg.mxu0
    %v117 = vadd.f32 %v59, %v112
    %v118 = vxor.u32 %v117, 2147483648
    %v119 = vmul.f32 %v118, 1.442695
    %v120 = vpow.pop %v119
    %v121 = vadd.f32 %v120, 1.0
    %v122 = vrcp.pop %v121
    %v123 = vmul.f32 1.0, %v122
    %v124 = vtanh.pop %v117
    %126 = vrot.lane.b32.xlu0 %v36, 32
    %v127 = vpop.permute.xlu0 %126
    %v129 = vmul.f32 %v123, %v127
    %131 = vrot.lane.b32.xlu0 %v124, 64
    %v132 = vpop.permute.xlu0 %131
    %v134 = vmul.f32 %v123, %v132
    %136 = vrot.lane.b32.xlu0 %v134, 32
    %v137 = vpop.permute.xlu0 %136
    %v139 = vadd.f32 %v129, %v137
    %v140 = vtanh.pop %v139
    %142 = vrot.lane.b32.xlu0 %v140, 64
    %v143 = vpop.permute.xlu0 %142
    %v145 = vmul.f32 %v123, %v143
    %s146 = scalar_lea.vmem %s2, %s38
    %v147 = vld [vmem:[%s146] sm:$0x3]
    %s148 = scalar_lea.vmem %s2, %s49
    %v149 = vld [vmem:[%s148] sm:$0x3]
    %v151 = vlaneseq
    %v152 = vshrl.u32 %v151, 7
    %v153 = vsub.s32 0, %v152
    %v154 = vrot.slane %v28, %v153
    %157 = vset.pattern.permute.xlu0 0
    %158 = vperm.xlu0 %157, %v147
    %v159 = vpop.permute.xlu0 %158
    %v161 = vmul.f32 %v154, %v159
    %v162 = vsub.f32 1.0, %v28
    %v164 = vlaneseq
    %v165 = vshrl.u32 %v164, 7
    %v166 = vsub.s32 0, %v165
    %v167 = vrot.slane %v162, %v166
    %170 = vset.pattern.permute.xlu0 0
    %171 = vperm.xlu0 %170, %v149
    %v172 = vpop.permute.xlu0 %171
    %v174 = vmul.f32 %v167, %v172
    %v175 = vadd.f32 %v161, %v174
    %v176 = vmul.f32 %v159, %v145
    %178 = vrot.lane.b32.xlu0 %v176, 32
    %v179 = vpop.permute.xlu0 %178
    %s181 = scalar_lea.vmem %s5, %s38
    %vm182 = vcmask 123904
    %183 = vst.msk [vmem:[%s181] sm:$0x3] %vm182, %v179
    %v184 = vmul.f32 %v172, %v145
    %186 = vrot.lane.b32.xlu0 %v184, 16
    %v187 = vpop.permute.xlu0 %186
    %s189 = scalar_lea.vmem %s6, %s49
    %190 = vst.msk [vmem:[%s189] sm:$0x3] %vm182, %v187
    %192 = vrot.lane.b32.xlu0 %v145, 32
    %v193 = vpop.permute.xlu0 %192
    %v195 = vmul.f32 %v175, %v193
    %v196 = vsub.f32 1.0, %v175
    %v197 = vmul.f32 %v196, %v35
    %v198 = vadd.f32 %v195, %v197
    %200 = vrot.lane.b32.xlu0 %v139, 96
    %v201 = vpop.permute.xlu0 %200
    %v203 = vmul.f32 %v175, %v201
    %v204 = vmul.f32 %v196, %v36
    %v205 = vadd.f32 %v203, %v204
  $region26: #{bidaf_forward.18} parent=0 // loop_footer
    %s34 = sadd.s32 1, %s30
  $region27: #{bidaf_forward.18} parent=0 // loop_footer_branch
    %29 = sbr.rel target = $region23
  $region28: #{bidaf_forward.18} parent=0 // loop_exit
    _
  // Predicated region
  $region29: #{bidaf_forward.18} parent=0 // pred_check
    _
  $region30: #{bidaf_forward.18} parent=0 // pred_check_branch
    %207 = sbr.rel (0) target = $region32
  $region31: #{bidaf_forward.18} parent=0 // pred_region
    _
  $region32: #{bidaf_forward.18} parent=0 // pred_fallthru
    _
  // Predicated region
  $region33: #{bidaf_forward.18} parent=0 // pred_check
    _
  $region34: #{bidaf_forward.18} parent=0 // pred_check_branch
    %209 = sbr.rel (0) target = $region36
  $region35: #{bidaf_forward.18} parent=0 // pred_region
    _
  $region36: #{bidaf_forward.18} parent=0 // pred_fallthru
    _
  // Predicated region
  $region37: #{bidaf_forward.18} parent=0 // pred_check
    _
  $region38: #{bidaf_forward.18} parent=0 // pred_check_branch
    %211 = sbr.rel (0) target = $region40
  $region39: #{bidaf_forward.18} parent=0 // pred_region
    _
  $region40: #{bidaf_forward.18} parent=0 // pred_fallthru
    _
  // Predicated region
  $region41: #{bidaf_forward.18} parent=0 // pred_check
    _
  $region42: #{bidaf_forward.18} parent=0 // pred_check_branch
    %213 = sbr.rel (0) target = $region44
  $region43: #{bidaf_forward.18} parent=0 // pred_region
    _
  $region44: #{bidaf_forward.18} parent=0 // pred_fallthru
    _

// kernel: bidaf_forward.15
$region0: #{bidaf_forward.15}
  #allocation0 [shape = 'u32[]', space=smem, size = 0x4, offset = 0x4, fixed_abs, tag = 'smem constant byte address 0x4 - core index']
  #allocation1 [shape = 'u32[144,128]{1,0:T(1,128)}', space=vmem, size = 0x12000, scoped, tag = 'internal scratch']
  %s0 = inlined_call_operand.vmem [shape: f32[24,24], index: 0, kind: input, shape index: {}]
  %s1 = inlined_call_operand.vmem [shape: bf16[24,16], index: 1, kind: input, shape index: {}]
  %s2 = inlined_call_operand.vmem [shape: bf16[16,16], index: 2, kind: input, shape index: {}]
  %s3 = inlined_call_operand.vmem [shape: f32[1,16], index: 3, kind: input, shape index: {}]
  %s4 = inlined_call_operand.vmem [shape: bf16[16,16], index: 4, kind: input, shape index: {}]
  %s5 = inlined_call_operand.vmem [shape: f32[1,16], index: 5, kind: input, shape index: {}]
  %s6 = inlined_call_operand.vmem [shape: bf16[16,16], index: 6, kind: input, shape index: {}]
  %s7 = inlined_call_operand.vmem [shape: f32[1,16], index: 7, kind: input, shape index: {}]
  %s8 = inlined_call_operand.vmem [shape: bf16[16,16], index: 8, kind: input, shape index: {}]
  %s9 = inlined_call_operand.vmem [shape: f32[1,16], index: 9, kind: input, shape index: {}]
  %s10 = inlined_call_operand.vmem [shape: f32[24,16], index: 10, kind: output, shape index: {}]
  %s11 = sld [smem:[#allocation0]]
  $region50: #{bidaf_forward.15} parent=0
    _
  %s13 = ssub.s32 1, %s11
  %s14 = scalar_select 0, %s13, %s11
  // Predicated region
  $region2: #{bidaf_forward.15} parent=0 // pred_check
    _
  $region3: #{bidaf_forward.15} parent=0 // pred_check_branch
    %16 = sbr.rel (0) target = $region5
  $region4: #{bidaf_forward.15} parent=0 // pred_region
    _
  $region5: #{bidaf_forward.15} parent=0 // pred_fallthru
    _
  // Predicated region
  $region6: #{bidaf_forward.15} parent=0 // pred_check
    _
  $region7: #{bidaf_forward.15} parent=0 // pred_check_branch
    %18 = sbr.rel (0) target = $region9
  $region8: #{bidaf_forward.15} parent=0 // pred_region
    _
  $region9: #{bidaf_forward.15} parent=0 // pred_fallthru
    _
  // Predicated region
  $region10: #{bidaf_forward.15} parent=0 // pred_check
    _
  $region11: #{bidaf_forward.15} parent=0 // pred_check_branch
    %20 = sbr.rel (0) target = $region13
  $region12: #{bidaf_forward.15} parent=0 // pred_region
    _
  $region13: #{bidaf_forward.15} parent=0 // pred_fallthru
    _
  // Predicated region
  $region14: #{bidaf_forward.15} parent=0 // pred_check
    _
  $region15: #{bidaf_forward.15} parent=0 // pred_check_branch
    %22 = sbr.rel (0) target = $region17
  $region16: #{bidaf_forward.15} parent=0 // pred_region
    _
  $region17: #{bidaf_forward.15} parent=0 // pred_fallthru
    _
  // Predicated region
  $region18: #{bidaf_forward.15} parent=0 // pred_check
    _
  $region19: #{bidaf_forward.15} parent=0 // pred_check_branch
    %24 = sbr.rel (0) target = $region21
  $region20: #{bidaf_forward.15} parent=0 // pred_region
    _
  $region21: #{bidaf_forward.15} parent=0 // pred_fallthru
    _
  // Predicated region
  $region22: #{bidaf_forward.15} parent=0 // pred_check
    _
  $region23: #{bidaf_forward.15} parent=0 // pred_check_branch
    %26 = sbr.rel (0) target = $region25
  $region24: #{bidaf_forward.15} parent=0 // pred_region
    _
  $region25: #{bidaf_forward.15} parent=0 // pred_fallthru
    _
  // Predicated region
  $region26: #{bidaf_forward.15} parent=0 // pred_check
    _
  $region27: #{bidaf_forward.15} parent=0 // pred_check_branch
    %28 = sbr.rel (0) target = $region29
  $region28: #{bidaf_forward.15} parent=0 // pred_region
    _
  $region29: #{bidaf_forward.15} parent=0 // pred_fallthru
    _
  // Predicated region
  $region30: #{bidaf_forward.15} parent=0 // pred_check
    _
  $region31: #{bidaf_forward.15} parent=0 // pred_check_branch
    %30 = sbr.rel (0) target = $region33
  $region32: #{bidaf_forward.15} parent=0 // pred_region
    _
  $region33: #{bidaf_forward.15} parent=0 // pred_fallthru
    _
  // Predicated region
  $region34: #{bidaf_forward.15} parent=0 // pred_check
    _
  $region35: #{bidaf_forward.15} parent=0 // pred_check_branch
    %32 = sbr.rel (0) target = $region37
  $region36: #{bidaf_forward.15} parent=0 // pred_region
    _
  $region37: #{bidaf_forward.15} parent=0 // pred_fallthru
    _
  // Predicated region
  $region38: #{bidaf_forward.15} parent=0 // pred_check
    _
  $region39: #{bidaf_forward.15} parent=0 // pred_check_branch
    %34 = sbr.rel (0) target = $region41
  $region40: #{bidaf_forward.15} parent=0 // pred_region
    _
  $region41: #{bidaf_forward.15} parent=0 // pred_fallthru
    _
  %v36 = vld [vmem:[%s0] sm:$0xff]
  %v37 = vld [vmem:[%s0 + $0x8] sm:$0xff]
  %v38 = vld [vmem:[%s0 + $0x10] sm:$0xff]
  %v39 = vpack.c.bf16 %v37, %v36
  %v40 = vpack.c.bf16 %v38, %v38
  %v41 = vld [vmem:[%s1] sm:$0xf]
  %v42 = vld [vmem:[%s1 + $0x4] sm:$0xf]
  %v43 = vld [vmem:[%s1 + $0x8] sm:$0xf]
  %v47 = vunpack.c.l.b16 %v41
  %v48 = vunpack.c.l.b16 %v42
  %v49 = vunpack.c.l.b16 %v43
  %v50 = vpack.c.b16 %v48, %v47
  %v51 = vpack.c.b16 %v49, %v49
  %vm53 = vcmask 195584
  %v55 = vsel %vm53, %v39, 0
  %v58 = vsel %vm53, %v40, 0
  %vm60 = vcmask 1043456
  %v62 = vsel %vm60, %v51, 0
  %64 = vmatprep.subr.bf16.mxu0 0
  %65 = vmatpush1.bf16.msra.mxu0 %v50
  %66 = vmatprep.subr.bf16.mxu0 0
  %67 = vmatpush1.bf16.msra.mxu0 %v62
  %68 = vmatprep.subr.bf16.mxu0 0
  %69 = vmatpush1.bf16.msra.mxu0 0
  %70 = vmatprep.subr.bf16.mxu0 0
  %71 = vmatpush1.bf16.msra.mxu0 0
  %72 = vmatprep.subr.bf16.mxu0 0
  %73 = vmatpush1.bf16.msra.mxu0 0
  %74 = vmatprep.subr.bf16.mxu0 0
  %75 = vmatpush1.bf16.msra.mxu0 0
  %76 = vmatprep.subr.bf16.mxu0 0
  %77 = vmatpush1.bf16.msra.mxu0 0
  %78 = vmatprep.subr.bf16.mxu0 0
  %79 = vmatpush1.bf16.msra.mxu0 0
  %80 = vmatprep.subr.bf16.mxu0 0
  %81 = vmatpush1.bf16.msra.mxu0 0
  %82 = vmatprep.subr.bf16.mxu0 0
  %83 = vmatpush1.bf16.msra.mxu0 0
  %84 = vmatprep.subr.bf16.mxu0 0
  %85 = vmatpush1.bf16.msra.mxu0 0
  %86 = vmatprep.subr.bf16.mxu0 0
  %87 = vmatpush1.bf16.msra.mxu0 0
  %88 = vmatprep.subr.bf16.mxu0 0
  %89 = vmatpush1.bf16.msra.mxu0 0
  %90 = vmatprep.subr.bf16.mxu0 0
  %91 = vmatpush1.bf16.msra.mxu0 0
  %92 = vmatprep.subr.bf16.mxu0 0
  %93 = vmatpush1.bf16.msra.mxu0 0
  %94 = vmatprep.subr.bf16.mxu0 0
  %95 = vmatpush1.bf16.msra.mxu0 0
  %96 = vmatprep.mubr.bf16.mxu0 0
  %97 = vmatmul.mubr.bf16.gmra.mrb[0].mxu0 %v55
  %v98 = vpop.f32.mrb[0].mxu0
  %v99 = vadd.f32 0.0, %v98
  %v100 = vpop.f32.mrb[0].mxu0
  %v101 = vpop.f32.mrb[0].mxu0
  %v102 = vadd.f32 0.0, %v101
  %v103 = vpop.f32.mrb[0].mxu0
  %104 = vmatprep.mubr.bf16.mxu0 0
  %105 = vmatmul.mubr.bf16.gmra.mrb[0].mxu0 %v58
  %v106 = vpop.f32.mrb[0].mxu0
  %v107 = vadd.f32 0.0, %v106
  %v108 = vpop.f32.mrb[0].mxu0
  %v109 = vpop.f32.mrb[0].mxu0
  %v110 = vpop.f32.mrb[0].mxu0
  %111 = vdwg.mxu0
  %v112 = vpack.c.bf16 %v102, %v99
  %v113 = vpack.c.bf16 %v107, %v107
  %v114 = vld [vmem:[%s2] sm:$0xf]
  %v115 = vld [vmem:[%s2 + $0x4] sm:$0xf]
  %v116 = vld [vmem:[%s3] sm:$0x1]
  %v118 = vlaneseq
  %v119 = vshrl.u32 %v118, 7
  %v120 = vsub.s32 0, %v119
  %v121 = vrot.slane %v116, %v120
  %v125 = vunpack.c.l.b16 %v114
  %v126 = vunpack.c.l.b16 %v115
  %v127 = vpack.c.b16 %v126, %v125
  %vm129 = vcmask 130048
  %v131 = vsel %vm129, %v112, 0
  %v134 = vsel %vm129, %v113, 0
  %136 = vmatprep.subr.bf16.mxu0 0
  %137 = vmatpush1.bf16.msra.mxu0 %v127
  %138 = vmatprep.subr.bf16.mxu0 0
  %139 = vmatpush1.bf16.msra.mxu0 0
  %140 = vmatprep.subr.bf16.mxu0 0
  %141 = vmatpush1.bf16.msra.mxu0 0
  %142 = vmatprep.subr.bf16.mxu0 0
  %143 = vmatpush1.bf16.msra.mxu0 0
  %144 = vmatprep.subr.bf16.mxu0 0
  %145 = vmatpush1.bf16.msra.mxu0 0
  %146 = vmatprep.subr.bf16.mxu0 0
  %147 = vmatpush1.bf16.msra.mxu0 0
  %148 = vmatprep.subr.bf16.mxu0 0
  %149 = vmatpush1.bf16.msra.mxu0 0
  %150 = vmatprep.subr.bf16.mxu0 0
  %151 = vmatpush1.bf16.msra.mxu0 0
  %152 = vmatprep.subr.bf16.mxu0 0
  %153 = vmatpush1.bf16.msra.mxu0 0
  %154 = vmatprep.subr.bf16.mxu0 0
  %155 = vmatpush1.bf16.msra.mxu0 0
  %156 = vmatprep.subr.bf16.mxu0 0
  %157 = vmatpush1.bf16.msra.mxu0 0
  %158 = vmatprep.subr.bf16.mxu0 0
  %159 = vmatpush1.bf16.msra.mxu0 0
  %160 = vmatprep.subr.bf16.mxu0 0
  %161 = vmatpush1.bf16.msra.mxu0 0
  %162 = vmatprep.subr.bf16.mxu0 0
  %163 = vmatpush1.bf16.msra.mxu0 0
  %164 = vmatprep.subr.bf16.mxu0 0
  %165 = vmatpush1.bf16.msra.mxu0 0
  %166 = vmatprep.subr.bf16.mxu0 0
  %167 = vmatpush1.bf16.msra.mxu0 0
  %168 = vmatprep.mubr.bf16.mxu0 0
  %169 = vmatmul.mubr.bf16.gmra.mrb[0].mxu0 %v131
  %v170 = vpop.f32.mrb[0].mxu0
  %v171 = vadd.f32 %v121, %v170
  %v172 = vpop.f32.mrb[0].mxu0
  %v173 = vpop.f32.mrb[0].mxu0
  %v174 = vadd.f32 %v121, %v173
  %v175 = vpop.f32.mrb[0].mxu0
  %176 = vmatprep.mubr.bf16.mxu0 0
  %177 = vmatmul.mubr.bf16.gmra.mrb[0].mxu0 %v134
  %v178 = vpop.f32.mrb[0].mxu0
  %v179 = vadd.f32 %v121, %v178
  %v180 = vpop.f32.mrb[0].mxu0
  %v181 = vpop.f32.mrb[0].mxu0
  %v182 = vpop.f32.mrb[0].mxu0
  %183 = vdwg.mxu0
  %v184 = vmax.f32 %v171, 0.0
  %v185 = vmax.f32 %v174, 0.0
  %v186 = vmax.f32 %v179, 0.0
  %v187 = vld [vmem:[%s4] sm:$0xf]
  %v188 = vld [vmem:[%s4 + $0x4] sm:$0xf]
  %v189 = vld [vmem:[%s5] sm:$0x1]
  %v191 = vlaneseq
  %v192 = vshrl.u32 %v191, 7
  %v193 = vsub.s32 0, %v192
  %v194 = vrot.slane %v189, %v193
  %v198 = vunpack.c.l.b16 %v187
  %v199 = vunpack.c.l.b16 %v188
  %v200 = vpack.c.b16 %v199, %v198
  %202 = vmatprep.subr.bf16.mxu0 0
  %203 = vmatpush1.bf16.msra.mxu0 %v200
  %204 = vmatprep.subr.bf16.mxu0 0
  %205 = vmatpush1.bf16.msra.mxu0 0
  %206 = vmatprep.subr.bf16.mxu0 0
  %207 = vmatpush1.bf16.msra.mxu0 0
  %208 = vmatprep.subr.bf16.mxu0 0
  %209 = vmatpush1.bf16.msra.mxu0 0
  %210 = vmatprep.subr.bf16.mxu0 0
  %211 = vmatpush1.bf16.msra.mxu0 0
  %212 = vmatprep.subr.bf16.mxu0 0
  %213 = vmatpush1.bf16.msra.mxu0 0
  %214 = vmatprep.subr.bf16.mxu0 0
  %215 = vmatpush1.bf16.msra.mxu0 0
  %216 = vmatprep.subr.bf16.mxu0 0
  %217 = vmatpush1.bf16.msra.mxu0 0
  %218 = vmatprep.subr.bf16.mxu0 0
  %219 = vmatpush1.bf16.msra.mxu0 0
  %220 = vmatprep.subr.bf16.mxu0 0
  %221 = vmatpush1.bf16.msra.mxu0 0
  %222 = vmatprep.subr.bf16.mxu0 0
  %223 = vmatpush1.bf16.msra.mxu0 0
  %224 = vmatprep.subr.bf16.mxu0 0
  %225 = vmatpush1.bf16.msra.mxu0 0
  %226 = vmatprep.subr.bf16.mxu0 0
  %227 = vmatpush1.bf16.msra.mxu0 0
  %228 = vmatprep.subr.bf16.mxu0 0
  %229 = vmatpush1.bf16.msra.mxu0 0
  %230 = vmatprep.subr.bf16.mxu0 0
  %231 = vmatpush1.bf16.msra.mxu0 0
  %232 = vmatprep.subr.bf16.mxu0 0
  %233 = vmatpush1.bf16.msra.mxu0 0
  %234 = vmatprep.mubr.bf16.mxu0 0
  %235 = vmatmul.mubr.bf16.gmra.mrb[0].mxu0 %v131
  %v236 = vpop.f32.mrb[0].mxu0
  %v237 = vadd.f32 %v194, %v236
  %v238 = vpop.f32.mrb[0].mxu0
  %v239 = vpop.f32.mrb[0].mxu0
  %v240 = vadd.f32 %v194, %v239
  %v241 = vpop.f32.mrb[0].mxu0
  %242 = vmatprep.mubr.bf16.mxu0 0
  %243 = vmatmul.mubr.bf16.gmra.mrb[0].mxu0 %v134
  %v244 = vpop.f32.mrb[0].mxu0
  %v245 = vadd.f32 %v194, %v244
  %v246 = vpop.f32.mrb[0].mxu0
  %v247 = vpop.f32.mrb[0].mxu0
  %v248 = vpop.f32.mrb[0].mxu0
  %249 = vdwg.mxu0
  %v250 = vxor.u32 %v237, 2147483648
  %v251 = vxor.u32 %v240, 2147483648
  %v252 = vxor.u32 %v245, 2147483648
  %v253 = vmul.f32 %v250, 1.442695
  %v254 = vpow.pop %v253
  %v255 = vmul.f32 %v251, 1.442695
  %v256 = vpow.pop %v255
  %v257 = vmul.f32 %v252, 1.442695
  %v258 = vpow.pop %v257
  %v259 = vadd.f32 %v254, 1.0
  %v260 = vadd.f32 %v256, 1.0
  %v261 = vadd.f32 %v258, 1.0
  %v262 = vrcp.pop %v259
  %v263 = vmul.f32 1.0, %v262
  %v264 = vrcp.pop %v260
  %v265 = vmul.f32 1.0, %v264
  %v266 = vrcp.pop %v261
  %v267 = vmul.f32 1.0, %v266
  %v268 = vmul.f32 %v263, %v184
  %v269 = vmul.f32 %v265, %v185
  %v270 = vmul.f32 %v267, %v186
  %v271 = vsub.f32 1.0, %v263
  %v272 = vsub.f32 1.0, %v265
  %v273 = vsub.f32 1.0, %v267
  %v274 = vmul.f32 %v271, %v99
  %v275 = vmul.f32 %v272, %v102
  %v276 = vmul.f32 %v273, %v107
  %v277 = vadd.f32 %v268, %v274
  %v278 = vadd.f32 %v269, %v275
  %v279 = vadd.f32 %v270, %v276
  %v280 = vpack.c.bf16 %v278, %v277
  %v281 = vpack.c.bf16 %v279, %v279
  %v282 = vld [vmem:[%s6] sm:$0xf]
  %v283 = vld [vmem:[%s6 + $0x4] sm:$0xf]
  %v284 = vld [vmem:[%s7] sm:$0x1]
  %v286 = vlaneseq
  %v287 = vshrl.u32 %v286, 7
  %v288 = vsub.s32 0, %v287
  %v289 = vrot.slane %v284, %v288
  %v293 = vunpack.c.l.b16 %v282
  %v294 = vunpack.c.l.b16 %v283
  %v295 = vpack.c.b16 %v294, %v293
  %v298 = vsel %vm129, %v280, 0
  %v301 = vsel %vm129, %v281, 0
  %303 = vmatprep.subr.bf16.mxu0 0
  %304 = vmatpush1.bf16.msra.mxu0 %v295
  %305 = vmatprep.subr.bf16.mxu0 0
  %306 = vmatpush1.bf16.msra.mxu0 0
  %307 = vmatprep.subr.bf16.mxu0 0
  %308 = vmatpush1.bf16.msra.mxu0 0
  %309 = vmatprep.subr.bf16.mxu0 0
  %310 = vmatpush1.bf16.msra.mxu0 0
  %311 = vmatprep.subr.bf16.mxu0 0
  %312 = vmatpush1.bf16.msra.mxu0 0
  %313 = vmatprep.subr.bf16.mxu0 0
  %314 = vmatpush1.bf16.msra.mxu0 0
  %315 = vmatprep.subr.bf16.mxu0 0
  %316 = vmatpush1.bf16.msra.mxu0 0
  %317 = vmatprep.subr.bf16.mxu0 0
  %318 = vmatpush1.bf16.msra.mxu0 0
  %319 = vmatprep.subr.bf16.mxu0 0
  %320 = vmatpush1.bf16.msra.mxu0 0
  %321 = vmatprep.subr.bf16.mxu0 0
  %322 = vmatpush1.bf16.msra.mxu0 0
  %323 = vmatprep.subr.bf16.mxu0 0
  %324 = vmatpush1.bf16.msra.mxu0 0
  %325 = vmatprep.subr.bf16.mxu0 0
  %326 = vmatpush1.bf16.msra.mxu0 0
  %327 = vmatprep.subr.bf16.mxu0 0
  %328 = vmatpush1.bf16.msra.mxu0 0
  %329 = vmatprep.subr.bf16.mxu0 0
  %330 = vmatpush1.bf16.msra.mxu0 0
  %331 = vmatprep.subr.bf16.mxu0 0
  %332 = vmatpush1.bf16.msra.mxu0 0
  %333 = vmatprep.subr.bf16.mxu0 0
  %334 = vmatpush1.bf16.msra.mxu0 0
  %335 = vmatprep.mubr.bf16.mxu0 0
  %336 = vmatmul.mubr.bf16.gmra.mrb[0].mxu0 %v298
  %v337 = vpop.f32.mrb[0].mxu0
  %v338 = vadd.f32 %v289, %v337
  %v339 = vpop.f32.mrb[0].mxu0
  %v340 = vpop.f32.mrb[0].mxu0
  %v341 = vadd.f32 %v289, %v340
  %v342 = vpop.f32.mrb[0].mxu0
  %343 = vmatprep.mubr.bf16.mxu0 0
  %344 = vmatmul.mubr.bf16.gmra.mrb[0].mxu0 %v301
  %v345 = vpop.f32.mrb[0].mxu0
  %v346 = vadd.f32 %v289, %v345
  %v347 = vpop.f32.mrb[0].mxu0
  %v348 = vpop.f32.mrb[0].mxu0
  %v349 = vpop.f32.mrb[0].mxu0
  %350 = vdwg.mxu0
  %v351 = vmax.f32 %v338, 0.0
  %v352 = vmax.f32 %v341, 0.0
  %v353 = vmax.f32 %v346, 0.0
  %v354 = vld [vmem:[%s8] sm:$0xf]
  %v355 = vld [vmem:[%s8 + $0x4] sm:$0xf]
  %v356 = vld [vmem:[%s9] sm:$0x1]
  %v358 = vlaneseq
  %v359 = vshrl.u32 %v358, 7
  %v360 = vsub.s32 0, %v359
  %v361 = vrot.slane %v356, %v360
  %v365 = vunpack.c.l.b16 %v354
  %v366 = vunpack.c.l.b16 %v355
  %v367 = vpack.c.b16 %v366, %v365
  %369 = vmatprep.subr.bf16.mxu0 0
  %370 = vmatpush1.bf16.msra.mxu0 %v367
  %371 = vmatprep.subr.bf16.mxu0 0
  %372 = vmatpush1.bf16.msra.mxu0 0
  %373 = vmatprep.subr.bf16.mxu0 0
  %374 = vmatpush1.bf16.msra.mxu0 0
  %375 = vmatprep.subr.bf16.mxu0 0
  %376 = vmatpush1.bf16.msra.mxu0 0
  %377 = vmatprep.subr.bf16.mxu0 0
  %378 = vmatpush1.bf16.msra.mxu0 0
  %379 = vmatprep.subr.bf16.mxu0 0
  %380 = vmatpush1.bf16.msra.mxu0 0
  %381 = vmatprep.subr.bf16.mxu0 0
  %382 = vmatpush1.bf16.msra.mxu0 0
  %383 = vmatprep.subr.bf16.mxu0 0
  %384 = vmatpush1.bf16.msra.mxu0 0
  %385 = vmatprep.subr.bf16.mxu0 0
  %386 = vmatpush1.bf16.msra.mxu0 0
  %387 = vmatprep.subr.bf16.mxu0 0
  %388 = vmatpush1.bf16.msra.mxu0 0
  %389 = vmatprep.subr.bf16.mxu0 0
  %390 = vmatpush1.bf16.msra.mxu0 0
  %391 = vmatprep.subr.bf16.mxu0 0
  %392 = vmatpush1.bf16.msra.mxu0 0
  %393 = vmatprep.subr.bf16.mxu0 0
  %394 = vmatpush1.bf16.msra.mxu0 0
  %395 = vmatprep.subr.bf16.mxu0 0
  %396 = vmatpush1.bf16.msra.mxu0 0
  %397 = vmatprep.subr.bf16.mxu0 0
  %398 = vmatpush1.bf16.msra.mxu0 0
  %399 = vmatprep.subr.bf16.mxu0 0
  %400 = vmatpush1.bf16.msra.mxu0 0
  %401 = vmatprep.mubr.bf16.mxu0 0
  %402 = vmatmul.mubr.bf16.gmra.mrb[0].mxu0 %v298
  %v403 = vpop.f32.mrb[0].mxu0
  %v404 = vadd.f32 %v361, %v403
  %v405 = vpop.f32.mrb[0].mxu0
  %v406 = vpop.f32.mrb[0].mxu0
  %v407 = vadd.f32 %v361, %v406
  %v408 = vpop.f32.mrb[0].mxu0
  %409 = vmatprep.mubr.bf16.mxu0 0
  %410 = vmatmul.mubr.bf16.gmra.mrb[0].mxu0 %v301
  %v411 = vpop.f32.mrb[0].mxu0
  %v412 = vadd.f32 %v361, %v411
  %v413 = vpop.f32.mrb[0].mxu0
  %v414 = vpop.f32.mrb[0].mxu0
  %v415 = vpop.f32.mrb[0].mxu0
  %416 = vdwg.mxu0
  %v417 = vxor.u32 %v404, 2147483648
  %v418 = vxor.u32 %v407, 2147483648
  %v419 = vxor.u32 %v412, 2147483648
  %v420 = vmul.f32 %v417, 1.442695
  %v421 = vpow.pop %v420
  %v422 = vmul.f32 %v418, 1.442695
  %v423 = vpow.pop %v422
  %v424 = vmul.f32 %v419, 1.442695
  %v425 = vpow.pop %v424
  %v426 = vadd.f32 %v421, 1.0
  %v427 = vadd.f32 %v423, 1.0
  %v428 = vadd.f32 %v425, 1.0
  %v429 = vrcp.pop %v426
  %v430 = vmul.f32 1.0, %v429
  %v431 = vrcp.pop %v427
  %v432 = vmul.f32 1.0, %v431
  %v433 = vrcp.pop %v428
  %v434 = vmul.f32 1.0, %v433
  %v435 = vmul.f32 %v430, %v351
  %v436 = vmul.f32 %v432, %v352
  %v437 = vmul.f32 %v434, %v353
  %v438 = vsub.f32 1.0, %v430
  %v439 = vsub.f32 1.0, %v432
  %v440 = vsub.f32 1.0, %v434
  %v441 = vmul.f32 %v438, %v277
  %v442 = vmul.f32 %v439, %v278
  %v443 = vmul.f32 %v440, %v279
  %v444 = vadd.f32 %v435, %v441
  %v445 = vadd.f32 %v436, %v442
  %v446 = vadd.f32 %v437, %v443
  %447 = vst.msk [vmem:[%s10] sm:$0xff] %vm129, %v444
  %448 = vst.msk [vmem:[%s10 + $0x8] sm:$0xff] %vm129, %v445
  %449 = vst.msk [vmem:[%s10 + $0x10] sm:$0xff] %vm129, %v446
  // Predicated region
  $region42: #{bidaf_forward.15} parent=0 // pred_check
    _
  $region43: #{bidaf_forward.15} parent=0 // pred_check_branch
    %451 = sbr.rel (0) target = $region45
  $region44: #{bidaf_forward.15} parent=0 // pred_region
    _
  $region45: #{bidaf_forward.15} parent=0 // pred_fallthru
    _
  // Predicated region
  $region46: #{bidaf_forward.15} parent=0 // pred_check
    _
  $region47: #{bidaf_forward.15} parent=0 // pred_check_branch
    %453 = sbr.rel (0) target = $region49
  $region48: #{bidaf_forward.15} parent=0 // pred_region
    _
  $region49: #{bidaf_forward.15} parent=0 // pred_fallthru
    _

// kernel: bidaf_forward.19
$region0: #{bidaf_forward.19}
  #allocation0 [shape = 'u32[]', space=smem, size = 0x4, offset = 0x4, fixed_abs, tag = 'smem constant byte address 0x4 - core index']
  #allocation1 [shape = 'u32[144,128]{1,0:T(1,128)}', space=vmem, size = 0x12000, scoped, tag = 'internal scratch']
  %s0 = inlined_call_operand.vmem [shape: f32[16,16], index: 0, kind: input, shape index: {}]
  %s1 = inlined_call_operand.vmem [shape: bf16[16,128], index: 1, kind: input, shape index: {}]
  %s2 = inlined_call_operand.vmem [shape: f32[1,128], index: 2, kind: input, shape index: {}]
  %s3 = inlined_call_operand.vmem [shape: f32[16,128], index: 3, kind: output, shape index: {}]
  %s4 = sld [smem:[#allocation0]]
  $region22: #{bidaf_forward.19} parent=0
    _
  %s6 = ssub.s32 1, %s4
  %s7 = scalar_select 0, %s6, %s4
  // Predicated region
  $region2: #{bidaf_forward.19} parent=0 // pred_check
    _
  $region3: #{bidaf_forward.19} parent=0 // pred_check_branch
    %9 = sbr.rel (0) target = $region5
  $region4: #{bidaf_forward.19} parent=0 // pred_region
    _
  $region5: #{bidaf_forward.19} parent=0 // pred_fallthru
    _
  // Predicated region
  $region6: #{bidaf_forward.19} parent=0 // pred_check
    _
  $region7: #{bidaf_forward.19} parent=0 // pred_check_branch
    %11 = sbr.rel (0) target = $region9
  $region8: #{bidaf_forward.19} parent=0 // pred_region
    _
  $region9: #{bidaf_forward.19} parent=0 // pred_fallthru
    _
  // Predicated region
  $region10: #{bidaf_forward.19} parent=0 // pred_check
    _
  $region11: #{bidaf_forward.19} parent=0 // pred_check_branch
    %13 = sbr.rel (0) target = $region13
  $region12: #{bidaf_forward.19} parent=0 // pred_region
    _
  $region13: #{bidaf_forward.19} parent=0 // pred_fallthru
    _
  %v15 = vld [vmem:[%s0] sm:$0xff]
  %v16 = vld [vmem:[%s0 + $0x8] sm:$0xff]
  %v17 = vpack.c.bf16 %v16, %v15
  %v18 = vld [vmem:[%s1] sm:$0xf]
  %v19 = vld [vmem:[%s1 + $0x4] sm:$0xf]
  %v20 = vld [vmem:[%s2] sm:$0x1]
  %v22 = vlaneseq
  %v23 = vshrl.u32 %v22, 7
  %v24 = vsub.s32 0, %v23
  %v25 = vrot.slane %v20, %v24
  %v29 = vunpack.c.l.b16 %v18
  %v30 = vunpack.c.l.b16 %v19
  %v31 = vpack.c.b16 %v30, %v29
  %vm33 = vcmask 130048
  %v35 = vsel %vm33, %v17, 0
  %37 = vmatprep.subr.bf16.mxu0 0
  %38 = vmatpush1.bf16.msra.mxu0 %v31
  %39 = vmatprep.subr.bf16.mxu0 0
  %40 = vmatpush1.bf16.msra.mxu0 0
  %41 = vmatprep.subr.bf16.mxu0 0
  %42 = vmatpush1.bf16.msra.mxu0 0
  %43 = vmatprep.subr.bf16.mxu0 0
  %44 = vmatpush1.bf16.msra.mxu0 0
  %45 = vmatprep.subr.bf16.mxu0 0
  %46 = vmatpush1.bf16.msra.mxu0 0
  %47 = vmatprep.subr.bf16.mxu0 0
  %48 = vmatpush1.bf16.msra.mxu0 0
  %49 = vmatprep.subr.bf16.mxu0 0
  %50 = vmatpush1.bf16.msra.mxu0 0
  %51 = vmatprep.subr.bf16.mxu0 0
  %52 = vmatpush1.bf16.msra.mxu0 0
  %53 = vmatprep.subr.bf16.mxu0 0
  %54 = vmatpush1.bf16.msra.mxu0 0
  %55 = vmatprep.subr.bf16.mxu0 0
  %56 = vmatpush1.bf16.msra.mxu0 0
  %57 = vmatprep.subr.bf16.mxu0 0
  %58 = vmatpush1.bf16.msra.mxu0 0
  %59 = vmatprep.subr.bf16.mxu0 0
  %60 = vmatpush1.bf16.msra.mxu0 0
  %61 = vmatprep.subr.bf16.mxu0 0
  %62 = vmatpush1.bf16.msra.mxu0 0
  %63 = vmatprep.subr.bf16.mxu0 0
  %64 = vmatpush1.bf16.msra.mxu0 0
  %65 = vmatprep.subr.bf16.mxu0 0
  %66 = vmatpush1.bf16.msra.mxu0 0
  %67 = vmatprep.subr.bf16.mxu0 0
  %68 = vmatpush1.bf16.msra.mxu0 0
  %69 = vmatprep.mubr.bf16.mxu0 0
  %70 = vmatmul.mubr.bf16.gmra.mrb[0].mxu0 %v35
  %v71 = vpop.f32.mrb[0].mxu0
  %v72 = vadd.f32 %v25, %v71
  %v73 = vpop.f32.mrb[0].mxu0
  %v74 = vpop.f32.mrb[0].mxu0
  %v75 = vadd.f32 %v25, %v74
  %v76 = vpop.f32.mrb[0].mxu0
  %77 = vdwg.mxu0
  %78 = vst [vmem:[%s3] sm:$0xff] %v72
  %79 = vst [vmem:[%s3 + $0x8] sm:$0xff] %v75
  // Predicated region
  $region14: #{bidaf_forward.19} parent=0 // pred_check
    _
  $region15: #{bidaf_forward.19} parent=0 // pred_check_branch
    %81 = sbr.rel (0) target = $region17
  $region16: #{bidaf_forward.19} parent=0 // pred_region
    _
  $region17: #{bidaf_forward.19} parent=0 // pred_fallthru
    _
  // Predicated region
  $region18: #{bidaf_forward.19} parent=0 // pred_check
    _
  $region19: #{bidaf_forward.19} parent=0 // pred_check_branch
    %83 = sbr.rel (0) target = $region21
  $region20: #{bidaf_forward.19} parent=0 // pred_region
    _
  $region21: #{bidaf_forward.19} parent=0 // pred_fallthru
    _

// kernel: bidaf_forward.16
$region0: #{bidaf_forward.16}
  #allocation0 [shape = 'u32[]', space=smem, size = 0x4, offset = 0x4, fixed_abs, tag = 'smem constant byte address 0x4 - core index']
  #allocation1 [shape = 'u32[144,128]{1,0:T(1,128)}', space=vmem, size = 0x12000, scoped, tag = 'internal scratch']
  %s0 = inlined_call_operand.vmem [shape: f32[16,24], index: 0, kind: input, shape index: {}]
  %s1 = inlined_call_operand.vmem [shape: bf16[24,16], index: 1, kind: input, shape index: {}]
  %s2 = inlined_call_operand.vmem [shape: bf16[16,16], index: 2, kind: input, shape index: {}]
  %s3 = inlined_call_operand.vmem [shape: f32[1,16], index: 3, kind: input, shape index: {}]
  %s4 = inlined_call_operand.vmem [shape: bf16[16,16], index: 4, kind: input, shape index: {}]
  %s5 = inlined_call_operand.vmem [shape: f32[1,16], index: 5, kind: input, shape index: {}]
  %s6 = inlined_call_operand.vmem [shape: bf16[16,16], index: 6, kind: input, shape index: {}]
  %s7 = inlined_call_operand.vmem [shape: f32[1,16], index: 7, kind: input, shape index: {}]
  %s8 = inlined_call_operand.vmem [shape: bf16[16,16], index: 8, kind: input, shape index: {}]
  %s9 = inlined_call_operand.vmem [shape: f32[1,16], index: 9, kind: input, shape index: {}]
  %s10 = inlined_call_operand.vmem [shape: f32[16,16], index: 10, kind: output, shape index: {}]
  %s11 = sld [smem:[#allocation0]]
  $region50: #{bidaf_forward.16} parent=0
    _
  %s13 = ssub.s32 1, %s11
  %s14 = scalar_select 0, %s13, %s11
  // Predicated region
  $region2: #{bidaf_forward.16} parent=0 // pred_check
    _
  $region3: #{bidaf_forward.16} parent=0 // pred_check_branch
    %16 = sbr.rel (0) target = $region5
  $region4: #{bidaf_forward.16} parent=0 // pred_region
    _
  $region5: #{bidaf_forward.16} parent=0 // pred_fallthru
    _
  // Predicated region
  $region6: #{bidaf_forward.16} parent=0 // pred_check
    _
  $region7: #{bidaf_forward.16} parent=0 // pred_check_branch
    %18 = sbr.rel (0) target = $region9
  $region8: #{bidaf_forward.16} parent=0 // pred_region
    _
  $region9: #{bidaf_forward.16} parent=0 // pred_fallthru
    _
  // Predicated region
  $region10: #{bidaf_forward.16} parent=0 // pred_check
    _
  $region11: #{bidaf_forward.16} parent=0 // pred_check_branch
    %20 = sbr.rel (0) target = $region13
  $region12: #{bidaf_forward.16} parent=0 // pred_region
    _
  $region13: #{bidaf_forward.16} parent=0 // pred_fallthru
    _
  // Predicated region
  $region14: #{bidaf_forward.16} parent=0 // pred_check
    _
  $region15: #{bidaf_forward.16} parent=0 // pred_check_branch
    %22 = sbr.rel (0) target = $region17
  $region16: #{bidaf_forward.16} parent=0 // pred_region
    _
  $region17: #{bidaf_forward.16} parent=0 // pred_fallthru
    _
  // Predicated region
  $region18: #{bidaf_forward.16} parent=0 // pred_check
    _
  $region19: #{bidaf_forward.16} parent=0 // pred_check_branch
    %24 = sbr.rel (0) target = $region21
  $region20: #{bidaf_forward.16} parent=0 // pred_region
    _
  $region21: #{bidaf_forward.16} parent=0 // pred_fallthru
    _
  // Predicated region
  $region22: #{bidaf_forward.16} parent=0 // pred_check
    _
  $region23: #{bidaf_forward.16} parent=0 // pred_check_branch
    %26 = sbr.rel (0) target = $region25
  $region24: #{bidaf_forward.16} parent=0 // pred_region
    _
  $region25: #{bidaf_forward.16} parent=0 // pred_fallthru
    _
  // Predicated region
  $region26: #{bidaf_forward.16} parent=0 // pred_check
    _
  $region27: #{bidaf_forward.16} parent=0 // pred_check_branch
    %28 = sbr.rel (0) target = $region29
  $region28: #{bidaf_forward.16} parent=0 // pred_region
    _
  $region29: #{bidaf_forward.16} parent=0 // pred_fallthru
    _
  // Predicated region
  $region30: #{bidaf_forward.16} parent=0 // pred_check
    _
  $region31: #{bidaf_forward.16} parent=0 // pred_check_branch
    %30 = sbr.rel (0) target = $region33
  $region32: #{bidaf_forward.16} parent=0 // pred_region
    _
  $region33: #{bidaf_forward.16} parent=0 // pred_fallthru
    _
  // Predicated region
  $region34: #{bidaf_forward.16} parent=0 // pred_check
    _
  $region35: #{bidaf_forward.16} parent=0 // pred_check_branch
    %32 = sbr.rel (0) target = $region37
  $region36: #{bidaf_forward.16} parent=0 // pred_region
    _
  $region37: #{bidaf_forward.16} parent=0 // pred_fallthru
    _
  // Predicated region
  $region38: #{bidaf_forward.16} parent=0 // pred_check
    _
  $region39: #{bidaf_forward.16} parent=0 // pred_check_branch
    %34 = sbr.rel (0) target = $region41
  $region40: #{bidaf_forward.16} parent=0 // pred_region
    _
  $region41: #{bidaf_forward.16} parent=0 // pred_fallthru
    _
  %v36 = vld [vmem:[%s0] sm:$0xff]
  %v37 = vld [vmem:[%s0 + $0x8] sm:$0xff]
  %v38 = vpack.c.bf16 %v37, %v36
  %v39 = vld [vmem:[%s1] sm:$0xf]
  %v40 = vld [vmem:[%s1 + $0x4] sm:$0xf]
  %v41 = vld [vmem:[%s1 + $0x8] sm:$0xf]
  %v45 = vunpack.c.l.b16 %v39
  %v46 = vunpack.c.l.b16 %v40
  %v47 = vunpack.c.l.b16 %v41
  %v48 = vpack.c.b16 %v46, %v45
  %v49 = vpack.c.b16 %v47, %v47
  %vm51 = vcmask 195584
  %v53 = vsel %vm51, %v38, 0
  %vm55 = vcmask 1043456
  %v57 = vsel %vm55, %v49, 0
  %59 = vmatprep.subr.bf16.mxu0 0
  %60 = vmatpush1.bf16.msra.mxu0 %v48
  %61 = vmatprep.subr.bf16.mxu0 0
  %62 = vmatpush1.bf16.msra.mxu0 %v57
  %63 = vmatprep.subr.bf16.mxu0 0
  %64 = vmatpush1.bf16.msra.mxu0 0
  %65 = vmatprep.subr.bf16.mxu0 0
  %66 = vmatpush1.bf16.msra.mxu0 0
  %67 = vmatprep.subr.bf16.mxu0 0
  %68 = vmatpush1.bf16.msra.mxu0 0
  %69 = vmatprep.subr.bf16.mxu0 0
  %70 = vmatpush1.bf16.msra.mxu0 0
  %71 = vmatprep.subr.bf16.mxu0 0
  %72 = vmatpush1.bf16.msra.mxu0 0
  %73 = vmatprep.subr.bf16.mxu0 0
  %74 = vmatpush1.bf16.msra.mxu0 0
  %75 = vmatprep.subr.bf16.mxu0 0
  %76 = vmatpush1.bf16.msra.mxu0 0
  %77 = vmatprep.subr.bf16.mxu0 0
  %78 = vmatpush1.bf16.msra.mxu0 0
  %79 = vmatprep.subr.bf16.mxu0 0
  %80 = vmatpush1.bf16.msra.mxu0 0
  %81 = vmatprep.subr.bf16.mxu0 0
  %82 = vmatpush1.bf16.msra.mxu0 0
  %83 = vmatprep.subr.bf16.mxu0 0
  %84 = vmatpush1.bf16.msra.mxu0 0
  %85 = vmatprep.subr.bf16.mxu0 0
  %86 = vmatpush1.bf16.msra.mxu0 0
  %87 = vmatprep.subr.bf16.mxu0 0
  %88 = vmatpush1.bf16.msra.mxu0 0
  %89 = vmatprep.subr.bf16.mxu0 0
  %90 = vmatpush1.bf16.msra.mxu0 0
  %91 = vmatprep.mubr.bf16.mxu0 0
  %92 = vmatmul.mubr.bf16.gmra.mrb[0].mxu0 %v53
  %v93 = vpop.f32.mrb[0].mxu0
  %v94 = vadd.f32 0.0, %v93
  %v95 = vpop.f32.mrb[0].mxu0
  %v96 = vpop.f32.mrb[0].mxu0
  %v97 = vadd.f32 0.0, %v96
  %v98 = vpop.f32.mrb[0].mxu0
  %99 = vdwg.mxu0
  %v100 = vpack.c.bf16 %v97, %v94
  %v101 = vld [vmem:[%s2] sm:$0xf]
  %v102 = vld [vmem:[%s2 + $0x4] sm:$0xf]
  %v103 = vld [vmem:[%s3] sm:$0x1]
  %v105 = vlaneseq
  %v106 = vshrl.u32 %v105, 7
  %v107 = vsub.s32 0, %v106
  %v108 = vrot.slane %v103, %v107
  %v112 = vunpack.c.l.b16 %v101
  %v113 = vunpack.c.l.b16 %v102
  %v114 = vpack.c.b16 %v113, %v112
  %vm116 = vcmask 130048
  %v118 = vsel %vm116, %v100, 0
  %120 = vmatprep.subr.bf16.mxu0 0
  %121 = vmatpush1.bf16.msra.mxu0 %v114
  %122 = vmatprep.subr.bf16.mxu0 0
  %123 = vmatpush1.bf16.msra.mxu0 0
  %124 = vmatprep.subr.bf16.mxu0 0
  %125 = vmatpush1.bf16.msra.mxu0 0
  %126 = vmatprep.subr.bf16.mxu0 0
  %127 = vmatpush1.bf16.msra.mxu0 0
  %128 = vmatprep.subr.bf16.mxu0 0
  %129 = vmatpush1.bf16.msra.mxu0 0
  %130 = vmatprep.subr.bf16.mxu0 0
  %131 = vmatpush1.bf16.msra.mxu0 0
  %132 = vmatprep.subr.bf16.mxu0 0
  %133 = vmatpush1.bf16.msra.mxu0 0
  %134 = vmatprep.subr.bf16.mxu0 0
  %135 = vmatpush1.bf16.msra.mxu0 0
  %136 = vmatprep.subr.bf16.mxu0 0
  %137 = vmatpush1.bf16.msra.mxu0 0
  %138 = vmatprep.subr.bf16.mxu0 0
  %139 = vmatpush1.bf16.msra.mxu0 0
  %140 = vmatprep.subr.bf16.mxu0 0
  %141 = vmatpush1.bf16.msra.mxu0 0
  %142 = vmatprep.subr.bf16.mxu0 0
  %143 = vmatpush1.bf16.msra.mxu0 0
  %144 = vmatprep.subr.bf16.mxu0 0
  %145 = vmatpush1.bf16.msra.mxu0 0
  %146 = vmatprep.subr.bf16.mxu0 0
  %147 = vmatpush1.bf16.msra.mxu0 0
  %148 = vmatprep.subr.bf16.mxu0 0
  %149 = vmatpush1.bf16.msra.mxu0 0
  %150 = vmatprep.subr.bf16.mxu0 0
  %151 = vmatpush1.bf16.msra.mxu0 0
  %152 = vmatprep.mubr.bf16.mxu0 0
  %153 = vmatmul.mubr.bf16.gmra.mrb[0].mxu0 %v118
  %v154 = vpop.f32.mrb[0].mxu0
  %v155 = vadd.f32 %v108, %v154
  %v156 = vpop.f32.mrb[0].mxu0
  %v157 = vpop.f32.mrb[0].mxu0
  %v158 = vadd.f32 %v108, %v157
  %v159 = vpop.f32.mrb[0].mxu0
  %160 = vdwg.mxu0
  %v161 = vmax.f32 %v155, 0.0
  %v162 = vmax.f32 %v158, 0.0
  %v163 = vld [vmem:[%s4] sm:$0xf]
  %v164 = vld [vmem:[%s4 + $0x4] sm:$0xf]
  %v165 = vld [vmem:[%s5] sm:$0x1]
  %v167 = vlaneseq
  %v168 = vshrl.u32 %v167, 7
  %v169 = vsub.s32 0, %v168
  %v170 = vrot.slane %v165, %v169
  %v174 = vunpack.c.l.b16 %v163
  %v175 = vunpack.c.l.b16 %v164
  %v176 = vpack.c.b16 %v175, %v174
  %178 = vmatprep.subr.bf16.mxu0 0
  %179 = vmatpush1.bf16.msra.mxu0 %v176
  %180 = vmatprep.subr.bf16.mxu0 0
  %181 = vmatpush1.bf16.msra.mxu0 0
  %182 = vmatprep.subr.bf16.mxu0 0
  %183 = vmatpush1.bf16.msra.mxu0 0
  %184 = vmatprep.subr.bf16.mxu0 0
  %185 = vmatpush1.bf16.msra.mxu0 0
  %186 = vmatprep.subr.bf16.mxu0 0
  %187 = vmatpush1.bf16.msra.mxu0 0
  %188 = vmatprep.subr.bf16.mxu0 0
  %189 = vmatpush1.bf16.msra.mxu0 0
  %190 = vmatprep.subr.bf16.mxu0 0
  %191 = vmatpush1.bf16.msra.mxu0 0
  %192 = vmatprep.subr.bf16.mxu0 0
  %193 = vmatpush1.bf16.msra.mxu0 0
  %194 = vmatprep.subr.bf16.mxu0 0
  %195 = vmatpush1.bf16.msra.mxu0 0
  %196 = vmatprep.subr.bf16.mxu0 0
  %197 = vmatpush1.bf16.msra.mxu0 0
  %198 = vmatprep.subr.bf16.mxu0 0
  %199 = vmatpush1.bf16.msra.mxu0 0
  %200 = vmatprep.subr.bf16.mxu0 0
  %201 = vmatpush1.bf16.msra.mxu0 0
  %202 = vmatprep.subr.bf16.mxu0 0
  %203 = vmatpush1.bf16.msra.mxu0 0
  %204 = vmatprep.subr.bf16.mxu0 0
  %205 = vmatpush1.bf16.msra.mxu0 0
  %206 = vmatprep.subr.bf16.mxu0 0
  %207 = vmatpush1.bf16.msra.mxu0 0
  %208 = vmatprep.subr.bf16.mxu0 0
  %209 = vmatpush1.bf16.msra.mxu0 0
  %210 = vmatprep.mubr.bf16.mxu0 0
  %211 = vmatmul.mubr.bf16.gmra.mrb[0].mxu0 %v118
  %v212 = vpop.f32.mrb[0].mxu0
  %v213 = vadd.f32 %v170, %v212
  %v214 = vpop.f32.mrb[0].mxu0
  %v215 = vpop.f32.mrb[0].mxu0
  %v216 = vadd.f32 %v170, %v215
  %v217 = vpop.f32.mrb[0].mxu0
  %218 = vdwg.mxu0
  %v219 = vxor.u32 %v213, 2147483648
  %v220 = vxor.u32 %v216, 2147483648
  %v221 = vmul.f32 %v219, 1.442695
  %v222 = vpow.pop %v221
  %v223 = vmul.f32 %v220, 1.442695
  %v224 = vpow.pop %v223
  %v225 = vadd.f32 %v222, 1.0
  %v226 = vadd.f32 %v224, 1.0
  %v227 = vrcp.pop %v225
  %v228 = vmul.f32 1.0, %v227
  %v229 = vrcp.pop %v226
  %v230 = vmul.f32 1.0, %v229
  %v231 = vmul.f32 %v228, %v161
  %v232 = vmul.f32 %v230, %v162
  %v233 = vsub.f32 1.0, %v228
  %v234 = vsub.f32 1.0, %v230
  %v235 = vmul.f32 %v233, %v94
  %v236 = vmul.f32 %v234, %v97
  %v237 = vadd.f32 %v231, %v235
  %v238 = vadd.f32 %v232, %v236
  %v239 = vpack.c.bf16 %v238, %v237
  %v240 = vld [vmem:[%s6] sm:$0xf]
  %v241 = vld [vmem:[%s6 + $0x4] sm:$0xf]
  %v242 = vld [vmem:[%s7] sm:$0x1]
  %v244 = vlaneseq
  %v245 = vshrl.u32 %v244, 7
  %v246 = vsub.s32 0, %v245
  %v247 = vrot.slane %v242, %v246
  %v251 = vunpack.c.l.b16 %v240
  %v252 = vunpack.c.l.b16 %v241
  %v253 = vpack.c.b16 %v252, %v251
  %v256 = vsel %vm116, %v239, 0
  %258 = vmatprep.subr.bf16.mxu0 0
  %259 = vmatpush1.bf16.msra.mxu0 %v253
  %260 = vmatprep.subr.bf16.mxu0 0
  %261 = vmatpush1.bf16.msra.mxu0 0
  %262 = vmatprep.subr.bf16.mxu0 0
  %263 = vmatpush1.bf16.msra.mxu0 0
  %264 = vmatprep.subr.bf16.mxu0 0
  %265 = vmatpush1.bf16.msra.mxu0 0
  %266 = vmatprep.subr.bf16.mxu0 0
  %267 = vmatpush1.bf16.msra.mxu0 0
  %268 = vmatprep.subr.bf16.mxu0 0
  %269 = vmatpush1.bf16.msra.mxu0 0
  %270 = vmatprep.subr.bf16.mxu0 0
  %271 = vmatpush1.bf16.msra.mxu0 0
  %272 = vmatprep.subr.bf16.mxu0 0
  %273 = vmatpush1.bf16.msra.mxu0 0
  %274 = vmatprep.subr.bf16.mxu0 0
  %275 = vmatpush1.bf16.msra.mxu0 0
  %276 = vmatprep.subr.bf16.mxu0 0
  %277 = vmatpush1.bf16.msra.mxu0 0
  %278 = vmatprep.subr.bf16.mxu0 0
  %279 = vmatpush1.bf16.msra.mxu0 0
  %280 = vmatprep.subr.bf16.mxu0 0
  %281 = vmatpush1.bf16.msra.mxu0 0
  %282 = vmatprep.subr.bf16.mxu0 0
  %283 = vmatpush1.bf16.msra.mxu0 0
  %284 = vmatprep.subr.bf16.mxu0 0
  %285 = vmatpush1.bf16.msra.mxu0 0
  %286 = vmatprep.subr.bf16.mxu0 0
  %287 = vmatpush1.bf16.msra.mxu0 0
  %288 = vmatprep.subr.bf16.mxu0 0
  %289 = vmatpush1.bf16.msra.mxu0 0
  %290 = vmatprep.mubr.bf16.mxu0 0
  %291 = vmatmul.mubr.bf16.gmra.mrb[0].mxu0 %v256
  %v292 = vpop.f32.mrb[0].mxu0
  %v293 = vadd.f32 %v247, %v292
  %v294 = vpop.f32.mrb[0].mxu0
  %v295 = vpop.f32.mrb[0].mxu0
  %v296 = vadd.f32 %v247, %v295
  %v297 = vpop.f32.mrb[0].mxu0
  %298 = vdwg.mxu0
  %v299 = vmax.f32 %v293, 0.0
  %v300 = vmax.f32 %v296, 0.0
  %v301 = vld [vmem:[%s8] sm:$0xf]
  %v302 = vld [vmem:[%s8 + $0x4] sm:$0xf]
  %v303 = vld [vmem:[%s9] sm:$0x1]
  %v305 = vlaneseq
  %v306 = vshrl.u32 %v305, 7
  %v307 = vsub.s32 0, %v306
  %v308 = vrot.slane %v303, %v307
  %v312 = vunpack.c.l.b16 %v301
  %v313 = vunpack.c.l.b16 %v302
  %v314 = vpack.c.b16 %v313, %v312
  %316 = vmatprep.subr.bf16.mxu0 0
  %317 = vmatpush1.bf16.msra.mxu0 %v314
  %318 = vmatprep.subr.bf16.mxu0 0
  %319 = vmatpush1.bf16.msra.mxu0 0
  %320 = vmatprep.subr.bf16.mxu0 0
  %321 = vmatpush1.bf16.msra.mxu0 0
  %322 = vmatprep.subr.bf16.mxu0 0
  %323 = vmatpush1.bf16.msra.mxu0 0
  %324 = vmatprep.subr.bf16.mxu0 0
  %325 = vmatpush1.bf16.msra.mxu0 0
  %326 = vmatprep.subr.bf16.mxu0 0
  %327 = vmatpush1.bf16.msra.mxu0 0
  %328 = vmatprep.subr.bf16.mxu0 0
  %329 = vmatpush1.bf16.msra.mxu0 0
  %330 = vmatprep.subr.bf16.mxu0 0
  %331 = vmatpush1.bf16.msra.mxu0 0
  %332 = vmatprep.subr.bf16.mxu0 0
  %333 = vmatpush1.bf16.msra.mxu0 0
  %334 = vmatprep.subr.bf16.mxu0 0
  %335 = vmatpush1.bf16.msra.mxu0 0
  %336 = vmatprep.subr.bf16.mxu0 0
  %337 = vmatpush1.bf16.msra.mxu0 0
  %338 = vmatprep.subr.bf16.mxu0 0
  %339 = vmatpush1.bf16.msra.mxu0 0
  %340 = vmatprep.subr.bf16.mxu0 0
  %341 = vmatpush1.bf16.msra.mxu0 0
  %342 = vmatprep.subr.bf16.mxu0 0
  %343 = vmatpush1.bf16.msra.mxu0 0
  %344 = vmatprep.subr.bf16.mxu0 0
  %345 = vmatpush1.bf16.msra.mxu0 0
  %346 = vmatprep.subr.bf16.mxu0 0
  %347 = vmatpush1.bf16.msra.mxu0 0
  %348 = vmatprep.mubr.bf16.mxu0 0
  %349 = vmatmul.mubr.bf16.gmra.mrb[0].mxu0 %v256
  %v350 = vpop.f32.mrb[0].mxu0
  %v351 = vadd.f32 %v308, %v350
  %v352 = vpop.f32.mrb[0].mxu0
  %v353 = vpop.f32.mrb[0].mxu0
  %v354 = vadd.f32 %v308, %v353
  %v355 = vpop.f32.mrb[0].mxu0
  %356 = vdwg.mxu0
  %v357 = vxor.u32 %v351, 2147483648
  %v358 = vxor.u32 %v354, 2147483648
  %v359 = vmul.f32 %v357, 1.442695
  %v360 = vpow.pop %v359
  %v361 = vmul.f32 %v358, 1.442695
  %v362 = vpow.pop %v361
  %v363 = vadd.f32 %v360, 1.0
  %v364 = vadd.f32 %v362, 1.0
  %v365 = vrcp.pop %v363
  %v366 = vmul.f32 1.0, %v365
  %v367 = vrcp.pop %v364
  %v368 = vmul.f32 1.0, %v367
  %v369 = vmul.f32 %v366, %v299
  %v370 = vmul.f32 %v368, %v300
  %v371 = vsub.f32 1.0, %v366
  %v372 = vsub.f32 1.0, %v368
  %v373 = vmul.f32 %v371, %v237
  %v374 = vmul.f32 %v372, %v238
  %v375 = vadd.f32 %v369, %v373
  %v376 = vadd.f32 %v370, %v374
  %377 = vst.msk [vmem:[%s10] sm:$0xff] %vm116, %v375
  %378 = vst.msk [vmem:[%s10 + $0x8] sm:$0xff] %vm116, %v376
  // Predicated region
  $region42: #{bidaf_forward.16} parent=0 // pred_check
    _
  $region43: #{bidaf_forward.16} parent=0 // pred_check_branch
    %380 = sbr.rel (0) target = $region45
  $region44: #{bidaf_forward.16} parent=0 // pred_region
    _
  $region45: #{bidaf_forward.16} parent=0 // pred_fallthru
    _
  // Predicated region
  $region46: #{bidaf_forward.16} parent=0 // pred_check
    _
  $region47: #{bidaf_forward.16} parent=0 // pred_check_branch
    %382 = sbr.rel (0) target = $region49
  $region48: #{bidaf_forward.16} parent=0 // pred_region
    _
  $region49: #{bidaf_forward.16} parent=0 // pred_fallthru
    _

// kernel: bidaf_forward.20
$region0: #{bidaf_forward.20}
  #allocation0 [shape = 'u32[]', space=smem, size = 0x4, offset = 0x4, fixed_abs, tag = 'smem constant byte address 0x4 - core index']
  #allocation1 [shape = 'u32[144,128]{1,0:T(1,128)}', space=vmem, size = 0x12000, scoped, tag = 'internal scratch']
  %s0 = inlined_call_operand.vmem [shape: f32[8,2,128], index: 0, kind: input, shape index: {}]
  %s1 = inlined_call_operand.vmem [shape: bf16[32,128], index: 1, kind: input, shape index: {}]
  %s2 = inlined_call_operand.vmem [shape: f32[8,2,1], index: 2, kind: input, shape index: {}]
  %s3 = inlined_call_operand.vmem [shape: f32[1,128], index: 3, kind: input, shape index: {}]
  %s4 = inlined_call_operand.vmem [shape: f32[1,32], index: 4, kind: input, shape index: {}]
  %s5 = inlined_call_operand.vmem [shape: f32[8,2,16], index: 5, kind: output, shape index: {0}]
  %s6 = inlined_call_operand.vmem [shape: f32[8,2,16], index: 6, kind: output, shape index: {1}]
  %7 = xla_tuple %s5, %s6
  %s8 = sld [smem:[#allocation0]]
  $region45: #{bidaf_forward.20} parent=0
    _
  %s10 = ssub.s32 1, %s8
  %s11 = scalar_select 0, %s10, %s8
  // Predicated region
  $region2: #{bidaf_forward.20} parent=0 // pred_check
    _
  $region3: #{bidaf_forward.20} parent=0 // pred_check_branch
    %13 = sbr.rel (0) target = $region5
  $region4: #{bidaf_forward.20} parent=0 // pred_region
    _
  $region5: #{bidaf_forward.20} parent=0 // pred_fallthru
    _
  // Predicated region
  $region6: #{bidaf_forward.20} parent=0 // pred_check
    _
  $region7: #{bidaf_forward.20} parent=0 // pred_check_branch
    %15 = sbr.rel (0) target = $region9
  $region8: #{bidaf_forward.20} parent=0 // pred_region
    _
  $region9: #{bidaf_forward.20} parent=0 // pred_fallthru
    _
  // Predicated region
  $region10: #{bidaf_forward.20} parent=0 // pred_check
    _
  $region11: #{bidaf_forward.20} parent=0 // pred_check_branch
    %17 = sbr.rel (0) target = $region13
  $region12: #{bidaf_forward.20} parent=0 // pred_region
    _
  $region13: #{bidaf_forward.20} parent=0 // pred_fallthru
    _
  // Predicated region
  $region14: #{bidaf_forward.20} parent=0 // pred_check
    _
  $region15: #{bidaf_forward.20} parent=0 // pred_check_branch
    %19 = sbr.rel (0) target = $region17
  $region16: #{bidaf_forward.20} parent=0 // pred_region
    _
  $region17: #{bidaf_forward.20} parent=0 // pred_fallthru
    _
  // Predicated region
  $region18: #{bidaf_forward.20} parent=0 // pred_check
    _
  $region19: #{bidaf_forward.20} parent=0 // pred_check_branch
    %21 = sbr.rel (0) target = $region21
  $region20: #{bidaf_forward.20} parent=0 // pred_region
    _
  $region21: #{bidaf_forward.20} parent=0 // pred_fallthru
    _
  %v23 = vld [vmem:[%s1] sm:$0xf]
  %v24 = vld [vmem:[%s1 + $0x4] sm:$0xf]
  %v25 = vld [vmem:[%s1 + $0x8] sm:$0xf]
  %v26 = vld [vmem:[%s1 + $0xc] sm:$0xf]
  %v27 = vld [vmem:[%s3] sm:$0x1]
  %v28 = vld [vmem:[%s4] sm:$0x1]
  loop: start=0, step=1, limit=8
  $region22: #{bidaf_forward.20} parent=0 // loop_pre_header
    _
  $region23: #{bidaf_forward.20} parent=0 // loop_header
    %s30 = sphi 0, %s34
    %p31 = scmp.ge.s32.totalorder %s30, 8
    %v35 = vphi 0.0, %v198
    %v36 = vphi 0.0, %v205
  $region24: #{bidaf_forward.20} parent=0 // loop_header_branch
    %33 = sbr.rel (%p31) target = $region28
  $region25: #{bidaf_forward.20} parent=0 // loop_body
    %s37 = ssub.s32 7, %s30
    %s38 = smul.u32 %s30, 2
    %s39 = scalar_lea.vmem %s0, %s38
    %v40 = vld [vmem:[%s39] sm:$0x3]
    %v42 = vlaneseq
    %v43 = vshrl.u32 %v42, 7
    %v44 = vsub.s32 0, %v43
    %v45 = vrot.slane %v27, %v44
    %v47 = vmul.f32 %v45, %v40
    %v48 = vsub.f32 1.0, %v27
    %s49 = smul.u32 %s37, 2
    %s50 = scalar_lea.vmem %s0, %s49
    %v51 = vld [vmem:[%s50] sm:$0x3]
    %v53 = vlaneseq
    %v54 = vshrl.u32 %v53, 7
    %v55 = vsub.s32 0, %v54
    %v56 = vrot.slane %v48, %v55
    %v58 = vmul.f32 %v56, %v51
    %v59 = vadd.f32 %v47, %v58
    %v60 = vpack.c.bf16 %v35, %v35
    %v65 = vunpack.c.l.b16 %v23
    %v66 = vunpack.c.l.b16 %v24
    %v67 = vunpack.c.l.b16 %v25
    %v68 = vunpack.c.l.b16 %v26
    %v69 = vpack.c.b16 %v66, %v65
    %v70 = vpack.c.b16 %v68, %v67
    %vm73 = vcmask 261120
    %v75 = vsel %vm73, %v60, 0
    %77 = vmatprep.subr.bf16.mxu0 0
    %78 = vmatpush1.bf16.msra.mxu0 %v69
    %79 = vmatprep.subr.bf16.mxu0 0
    %80 = vmatpush1.bf16.msra.mxu0 %v70
    %81 = vmatprep.subr.bf16.mxu0 0
    %82 = vmatpush1.bf16.msra.mxu0 0
    %83 = vmatprep.subr.bf16.mxu0 0
    %84 = vmatpush1.bf16.msra.mxu0 0
    %85 = vmatprep.subr.bf16.mxu0 0
    %86 = vmatpush1.bf16.msra.mxu0 0
    %87 = vmatprep.subr.bf16.mxu0 0
    %88 = vmatpush1.bf16.msra.mxu0 0
    %89 = vmatprep.subr.bf16.mxu0 0
    %90 = vmatpush1.bf16.msra.mxu0 0
    %91 = vmatprep.subr.bf16.mxu0 0
    %92 = vmatpush1.bf16.msra.mxu0 0
    %93 = vmatprep.subr.bf16.mxu0 0
    %94 = vmatpush1.bf16.msra.mxu0 0
    %95 = vmatprep.subr.bf16.mxu0 0
    %96 = vmatpush1.bf16.msra.mxu0 0
    %97 = vmatprep.subr.bf16.mxu0 0
    %98 = vmatpush1.bf16.msra.mxu0 0
    %99 = vmatprep.subr.bf16.mxu0 0
    %100 = vmatpush1.bf16.msra.mxu0 0
    %101 = vmatprep.subr.bf16.mxu0 0
    %102 = vmatpush1.bf16.msra.mxu0 0
    %103 = vmatprep.subr.bf16.mxu0 0
    %104 = vmatpush1.bf16.msra.mxu0 0
    %105 = vmatprep.subr.bf16.mxu0 0
    %106 = vmatpush1.bf16.msra.mxu0 0
    %107 = vmatprep.subr.bf16.mxu0 0
    %108 = vmatpush1.bf16.msra.mxu0 0
    %109 = vmatprep.mubr.bf16.mxu0 0
    %110 = vmatmul.mubr.bf16.gmra.mrb[0].mxu0 %v75
    %v111 = vpop.f32.mrb[0].mxu0
    %v112 = vadd.f32 0.0, %v111
    %v113 = vpop.f32.mrb[0].mxu0
    %v114 = vpop.f32.mrb[0].mxu0
    %v115 = vpop.f32.mrb[0].mxu0
    %116 = vdwg.mxu0
    %v117 = vadd.f32 %v59, %v112
    %v118 = vxor.u32 %v117, 2147483648
    %v119 = vmul.f32 %v118, 1.442695
    %v120 = vpow.pop %v119
    %v121 = vadd.f32 %v120, 1.0
    %v122 = vrcp.pop %v121
    %v123 = vmul.f32 1.0, %v122
    %v124 = vtanh.pop %v117
    %126 = vrot.lane.b32.xlu0 %v36, 32
    %v127 = vpop.permute.xlu0 %126
    %v129 = vmul.f32 %v123, %v127
    %131 = vrot.lane.b32.xlu0 %v124, 64
    %v132 = vpop.permute.xlu0 %131
    %v134 = vmul.f32 %v123, %v132
    %136 = vrot.lane.b32.xlu0 %v134, 32
    %v137 = vpop.permute.xlu0 %136
    %v139 = vadd.f32 %v129, %v137
    %v140 = vtanh.pop %v139
    %142 = vrot.lane.b32.xlu0 %v140, 64
    %v143 = vpop.permute.xlu0 %142
    %v145 = vmul.f32 %v123, %v143
    %s146 = scalar_lea.vmem %s2, %s38
    %v147 = vld [vmem:[%s146] sm:$0x3]
    %s148 = scalar_lea.vmem %s2, %s49
    %v149 = vld [vmem:[%s148] sm:$0x3]
    %v151 = vlaneseq
    %v152 = vshrl.u32 %v151, 7
    %v153 = vsub.s32 0, %v152
    %v154 = vrot.slane %v28, %v153
    %157 = vset.pattern.permute.xlu0 0
    %158 = vperm.xlu0 %157, %v147
    %v159 = vpop.permute.xlu0 %158
    %v161 = vmul.f32 %v154, %v159
    %v162 = vsub.f32 1.0, %v28
    %v164 = vlaneseq
    %v165 = vshrl.u32 %v164, 7
    %v166 = vsub.s32 0, %v165
    %v167 = vrot.slane %v162, %v166
    %170 = vset.pattern.permute.xlu0 0
    %171 = vperm.xlu0 %170, %v149
    %v172 = vpop.permute.xlu0 %171
    %v174 = vmul.f32 %v167, %v172
    %v175 = vadd.f32 %v161, %v174
    %v176 = vmul.f32 %v159, %v145
    %178 = vrot.lane.b32.xlu0 %v176, 32
    %v179 = vpop.permute.xlu0 %178
    %s181 = scalar_lea.vmem %s5, %s38
    %vm182 = vcmask 123904
    %183 = vst.msk [vmem:[%s181] sm:$0x3] %vm182, %v179
    %v184 = vmul.f32 %v172, %v145
    %186 = vrot.lane.b32.xlu0 %v184, 16
    %v187 = vpop.permute.xlu0 %186
    %s189 = scalar_lea.vmem %s6, %s49
    %190 = vst.msk [vmem:[%s189] sm:$0x3] %vm182, %v187
    %192 = vrot.lane.b32.xlu0 %v145, 32
    %v193 = vpop.permute.xlu0 %192
    %v195 = vmul.f32 %v175, %v193
    %v196 = vsub.f32 1.0, %v175
    %v197 = vmul.f32 %v196, %v35
    %v198 = vadd.f32 %v195, %v197
    %200 = vrot.lane.b32.xlu0 %v139, 96
    %v201 = vpop.permute.xlu0 %200
    %v203 = vmul.f32 %v175, %v201
    %v204 = vmul.f32 %v196, %v36
    %v205 = vadd.f32 %v203, %v204
  $region26: #{bidaf_forward.20} parent=0 // loop_footer
    %s34 = sadd.s32 1, %s30
  $region27: #{bidaf_forward.20} parent=0 // loop_footer_branch
    %29 = sbr.rel target = $region23
  $region28: #{bidaf_forward.20} parent=0 // loop_exit
    _
  // Predicated region
  $region29: #{bidaf_forward.20} parent=0 // pred_check
    _
  $region30: #{bidaf_forward.20} parent=0 // pred_check_branch
    %207 = sbr.rel (0) target = $region32
  $region31: #{bidaf_forward.20} parent=0 // pred_region
    _
  $region32: #{bidaf_forward.20} parent=0 // pred_fallthru
    _
  // Predicated region
  $region33: #{bidaf_forward.20} parent=0 // pred_check
    _
  $region34: #{bidaf_forward.20} parent=0 // pred_check_branch
    %209 = sbr.rel (0) target = $region36
  $region35: #{bidaf_forward.20} parent=0 // pred_region
    _
  $region36: #{bidaf_forward.20} parent=0 // pred_fallthru
    _
  // Predicated region
  $region37: #{bidaf_forward.20} parent=0 // pred_check
    _
  $region38: #{bidaf_forward.20} parent=0 // pred_check_branch
    %211 = sbr.rel (0) target = $region40
  $region39: #{bidaf_forward.20} parent=0 // pred_region
    _
  $region40: #{bidaf_forward.20} parent=0 // pred_fallthru
    _
  // Predicated region
  $region41: #{bidaf_forward.20} parent=0 // pred_check
    _
  $region42: #{bidaf_forward.20} parent=0 // pred_check_branch
    %213 = sbr.rel (0) target = $region44
  $region43: #{bidaf_forward.20} parent=0 // pred_region
    _
  $region44: #{bidaf_forward.20} parent=0 // pred_fallthru
    _

// kernel: bidaf_forward.22
$region0: #{bidaf_forward.22}
  #allocation0 [shape = 'u32[]', space=smem, size = 0x4, offset = 0x4, fixed_abs, tag = 'smem constant byte address 0x4 - core index']
  #allocation1 [shape = 'u32[144,128]{1,0:T(1,128)}', space=vmem, size = 0x12000, scoped, tag = 'internal scratch']
  %s0 = inlined_call_operand.vmem [shape: f32[24,128], index: 0, kind: input, shape index: {}]
  %s1 = inlined_call_operand.vmem [shape: bf16[128,128], index: 1, kind: input, shape index: {}]
  %s2 = inlined_call_operand.vmem [shape: f32[1,128], index: 2, kind: input, shape index: {}]
  %s3 = inlined_call_operand.vmem [shape: f32[24,128], index: 3, kind: output, shape index: {}]
  %s4 = sld [smem:[#allocation0]]
  $region22: #{bidaf_forward.22} parent=0
    _
  %s6 = ssub.s32 1, %s4
  %s7 = scalar_select 0, %s6, %s4
  // Predicated region
  $region2: #{bidaf_forward.22} parent=0 // pred_check
    _
  $region3: #{bidaf_forward.22} parent=0 // pred_check_branch
    %9 = sbr.rel (0) target = $region5
  $region4: #{bidaf_forward.22} parent=0 // pred_region
    _
  $region5: #{bidaf_forward.22} parent=0 // pred_fallthru
    _
  // Predicated region
  $region6: #{bidaf_forward.22} parent=0 // pred_check
    _
  $region7: #{bidaf_forward.22} parent=0 // pred_check_branch
    %11 = sbr.rel (0) target = $region9
  $region8: #{bidaf_forward.22} parent=0 // pred_region
    _
  $region9: #{bidaf_forward.22} parent=0 // pred_fallthru
    _
  // Predicated region
  $region10: #{bidaf_forward.22} parent=0 // pred_check
    _
  $region11: #{bidaf_forward.22} parent=0 // pred_check_branch
    %13 = sbr.rel (0) target = $region13
  $region12: #{bidaf_forward.22} parent=0 // pred_region
    _
  $region13: #{bidaf_forward.22} parent=0 // pred_fallthru
    _
  %v15 = vld [vmem:[%s0] sm:$0xff]
  %v16 = vld [vmem:[%s0 + $0x8] sm:$0xff]
  %v17 = vld [vmem:[%s0 + $0x10] sm:$0xff]
  %v18 = vpack.c.bf16 %v16, %v15
  %v19 = vpack.c.bf16 %v17, %v17
  %v20 = vld [vmem:[%s1] sm:$0xf]
  %v21 = vld [vmem:[%s1 + $0x4] sm:$0xf]
  %v22 = vld [vmem:[%s1 + $0x8] sm:$0xf]
  %v23 = vld [vmem:[%s1 + $0xc] sm:$0xf]
  %v24 = vld [vmem:[%s1 + $0x10] sm:$0xf]
  %v25 = vld [vmem:[%s1 + $0x14] sm:$0xf]
  %v26 = vld [vmem:[%s1 + $0x18] sm:$0xf]
  %v27 = vld [vmem:[%s1 + $0x1c] sm:$0xf]
  %v28 = vld [vmem:[%s1 + $0x20] sm:$0xf]
  %v29 = vld [vmem:[%s1 + $0x24] sm:$0xf]
  %v30 = vld [vmem:[%s1 + $0x28] sm:$0xf]
  %v31 = vld [vmem:[%s1 + $0x2c] sm:$0xf]
  %v32 = vld [vmem:[%s1 + $0x30] sm:$0xf]
  %v33 = vld [vmem:[%s1 + $0x34] sm:$0xf]
  %v34 = vld [vmem:[%s1 + $0x38] sm:$0xf]
  %v35 = vld [vmem:[%s1 + $0x3c] sm:$0xf]
  %v36 = vld [vmem:[%s2] sm:$0x1]
  %v38 = vlaneseq
  %v39 = vshrl.u32 %v38, 7
  %v40 = vsub.s32 0, %v39
  %v41 = vrot.slane %v36, %v40
  %v59 = vunpack.c.l.b16 %v20
  %v60 = vunpack.c.l.b16 %v21
  %v61 = vunpack.c.l.b16 %v22
  %v62 = vunpack.c.l.b16 %v23
  %v63 = vunpack.c.l.b16 %v24
  %v64 = vunpack.c.l.b16 %v25
  %v65 = vunpack.c.l.b16 %v26
  %v66 = vunpack.c.l.b16 %v27
  %v67 = vunpack.c.l.b16 %v28
  %v68 = vunpack.c.l.b16 %v29
  %v69 = vunpack.c.l.b16 %v30
  %v70 = vunpack.c.l.b16 %v31
  %v71 = vunpack.c.l.b16 %v32
  %v72 = vunpack.c.l.b16 %v33
  %v73 = vunpack.c.l.b16 %v34
  %v74 = vunpack.c.l.b16 %v35
  %v75 = vpack.c.b16 %v60, %v59
  %v76 = vpack.c.b16 %v62, %v61
  %v77 = vpack.c.b16 %v64, %v63
  %v78 = vpack.c.b16 %v66, %v65
  %v79 = vpack.c.b16 %v68, %v67
  %v80 = vpack.c.b16 %v70, %v69
  %v81 = vpack.c.b16 %v72, %v71
  %v82 = vpack.c.b16 %v74, %v73
  %91 = vmatprep.subr.bf16.mxu0 0
  %92 = vmatpush1.bf16.msra.mxu0 %v75
  %93 = vmatprep.subr.bf16.mxu0 0
  %94 = vmatpush1.bf16.msra.mxu0 %v76
  %95 = vmatprep.subr.bf16.mxu0 0
  %96 = vmatpush1.bf16.msra.mxu0 %v77
  %97 = vmatprep.subr.bf16.mxu0 0
  %98 = vmatpush1.bf16.msra.mxu0 %v78
  %99 = vmatprep.subr.bf16.mxu0 0
  %100 = vmatpush1.bf16.msra.mxu0 %v79
  %101 = vmatprep.subr.bf16.mxu0 0
  %102 = vmatpush1.bf16.msra.mxu0 %v80
  %103 = vmatprep.subr.bf16.mxu0 0
  %104 = vmatpush1.bf16.msra.mxu0 %v81
  %105 = vmatprep.subr.bf16.mxu0 0
  %106 = vmatpush1.bf16.msra.mxu0 %v82
  %107 = vmatprep.subr.bf16.mxu0 0
  %108 = vmatpush1.bf16.msra.mxu0 0
  %109 = vmatprep.subr.bf16.mxu0 0
  %110 = vmatpush1.bf16.msra.mxu0 0
  %111 = vmatprep.subr.bf16.mxu0 0
  %112 = vmatpush1.bf16.msra.mxu0 0
  %113 = vmatprep.subr.bf16.mxu0 0
  %114 = vmatpush1.bf16.msra.mxu0 0
  %115 = vmatprep.subr.bf16.mxu0 0
  %116 = vmatpush1.bf16.msra.mxu0 0
  %117 = vmatprep.subr.bf16.mxu0 0
  %118 = vmatpush1.bf16.msra.mxu0 0
  %119 = vmatprep.subr.bf16.mxu0 0
  %120 = vmatpush1.bf16.msra.mxu0 0
  %121 = vmatprep.subr.bf16.mxu0 0
  %122 = vmatpush1.bf16.msra.mxu0 0
  %123 = vmatprep.mubr.bf16.mxu0 0
  %124 = vmatmul.mubr.bf16.gmra.mrb[0].mxu0 %v18
  %v125 = vpop.f32.mrb[0].mxu0
  %v126 = vadd.f32 %v41, %v125
  %v127 = vpop.f32.mrb[0].mxu0
  %v128 = vpop.f32.mrb[0].mxu0
  %v129 = vadd.f32 %v41, %v128
  %v130 = vpop.f32.mrb[0].mxu0
  %131 = vmatprep.mubr.bf16.mxu0 0
  %132 = vmatmul.mubr.bf16.gmra.mrb[0].mxu0 %v19
  %v133 = vpop.f32.mrb[0].mxu0
  %v134 = vadd.f32 %v41, %v133
  %v135 = vpop.f32.mrb[0].mxu0
  %v136 = vpop.f32.mrb[0].mxu0
  %v137 = vpop.f32.mrb[0].mxu0
  %138 = vdwg.mxu0
  %139 = vst [vmem:[%s3] sm:$0xff] %v126
  %140 = vst [vmem:[%s3 + $0x8] sm:$0xff] %v129
  %141 = vst [vmem:[%s3 + $0x10] sm:$0xff] %v134
  // Predicated region
  $region14: #{bidaf_forward.22} parent=0 // pred_check
    _
  $region15: #{bidaf_forward.22} parent=0 // pred_check_branch
    %143 = sbr.rel (0) target = $region17
  $region16: #{bidaf_forward.22} parent=0 // pred_region
    _
  $region17: #{bidaf_forward.22} parent=0 // pred_fallthru
    _
  // Predicated region
  $region18: #{bidaf_forward.22} parent=0 // pred_check
    _
  $region19: #{bidaf_forward.22} parent=0 // pred_check_branch
    %145 = sbr.rel (0) target = $region21
  $region20: #{bidaf_forward.22} parent=0 // pred_region
    _
  $region21: #{bidaf_forward.22} parent=0 // pred_fallthru
    _

// kernel: bidaf_forward.24
$region0: #{bidaf_forward.24}
  #allocation0 [shape = 'u32[]', space=smem, size = 0x4, offset = 0x4, fixed_abs, tag = 'smem constant byte address 0x4 - core index']
  #allocation1 [shape = 'u32[144,128]{1,0:T(1,128)}', space=vmem, size = 0x12000, scoped, tag = 'internal scratch']
  %s0 = inlined_call_operand.vmem [shape: f32[24,32], index: 0, kind: input, shape index: {}]
  %s1 = inlined_call_operand.vmem [shape: bf16[32,128], index: 1, kind: input, shape index: {}]
  %s2 = inlined_call_operand.vmem [shape: f32[1,128], index: 2, kind: input, shape index: {}]
  %s3 = inlined_call_operand.vmem [shape: f32[24,128], index: 3, kind: output, shape index: {}]
  %s4 = sld [smem:[#allocation0]]
  $region22: #{bidaf_forward.24} parent=0
    _
  %s6 = ssub.s32 1, %s4
  %s7 = scalar_select 0, %s6, %s4
  // Predicated region
  $region2: #{bidaf_forward.24} parent=0 // pred_check
    _
  $region3: #{bidaf_forward.24} parent=0 // pred_check_branch
    %9 = sbr.rel (0) target = $region5
  $region4: #{bidaf_forward.24} parent=0 // pred_region
    _
  $region5: #{bidaf_forward.24} parent=0 // pred_fallthru
    _
  // Predicated region
  $region6: #{bidaf_forward.24} parent=0 // pred_check
    _
  $region7: #{bidaf_forward.24} parent=0 // pred_check_branch
    %11 = sbr.rel (0) target = $region9
  $region8: #{bidaf_forward.24} parent=0 // pred_region
    _
  $region9: #{bidaf_forward.24} parent=0 // pred_fallthru
    _
  // Predicated region
  $region10: #{bidaf_forward.24} parent=0 // pred_check
    _
  $region11: #{bidaf_forward.24} parent=0 // pred_check_branch
    %13 = sbr.rel (0) target = $region13
  $region12: #{bidaf_forward.24} parent=0 // pred_region
    _
  $region13: #{bidaf_forward.24} parent=0 // pred_fallthru
    _
  %v15 = vld [vmem:[%s0] sm:$0xff]
  %v16 = vld [vmem:[%s0 + $0x8] sm:$0xff]
  %v17 = vld [vmem:[%s0 + $0x10] sm:$0xff]
  %v18 = vpack.c.bf16 %v16, %v15
  %v19 = vpack.c.bf16 %v17, %v17
  %v20 = vld [vmem:[%s1] sm:$0xf]
  %v21 = vld [vmem:[%s1 + $0x4] sm:$0xf]
  %v22 = vld [vmem:[%s1 + $0x8] sm:$0xf]
  %v23 = vld [vmem:[%s1 + $0xc] sm:$0xf]
  %v24 = vld [vmem:[%s2] sm:$0x1]
  %v26 = vlaneseq
  %v27 = vshrl.u32 %v26, 7
  %v28 = vsub.s32 0, %v27
  %v29 = vrot.slane %v24, %v28
  %v35 = vunpack.c.l.b16 %v20
  %v36 = vunpack.c.l.b16 %v21
  %v37 = vunpack.c.l.b16 %v22
  %v38 = vunpack.c.l.b16 %v23
  %v39 = vpack.c.b16 %v36, %v35
  %v40 = vpack.c.b16 %v38, %v37
  %vm43 = vcmask 261120
  %v45 = vsel %vm43, %v18, 0
  %v48 = vsel %vm43, %v19, 0
  %50 = vmatprep.subr.bf16.mxu0 0
  %51 = vmatpush1.bf16.msra.mxu0 %v39
  %52 = vmatprep.subr.bf16.mxu0 0
  %53 = vmatpush1.bf16.msra.mxu0 %v40
  %54 = vmatprep.subr.bf16.mxu0 0
  %55 = vmatpush1.bf16.msra.mxu0 0
  %56 = vmatprep.subr.bf16.mxu0 0
  %57 = vmatpush1.bf16.msra.mxu0 0
  %58 = vmatprep.subr.bf16.mxu0 0
  %59 = vmatpush1.bf16.msra.mxu0 0
  %60 = vmatprep.subr.bf16.mxu0 0
  %61 = vmatpush1.bf16.msra.mxu0 0
  %62 = vmatprep.subr.bf16.mxu0 0
  %63 = vmatpush1.bf16.msra.mxu0 0
  %64 = vmatprep.subr.bf16.mxu0 0
  %65 = vmatpush1.bf16.msra.mxu0 0
  %66 = vmatprep.subr.bf16.mxu0 0
  %67 = vmatpush1.bf16.msra.mxu0 0
  %68 = vmatprep.subr.bf16.mxu0 0
  %69 = vmatpush1.bf16.msra.mxu0 0
  %70 = vmatprep.subr.bf16.mxu0 0
  %71 = vmatpush1.bf16.msra.mxu0 0
  %72 = vmatprep.subr.bf16.mxu0 0
  %73 = vmatpush1.bf16.msra.mxu0 0
  %74 = vmatprep.subr.bf16.mxu0 0
  %75 = vmatpush1.bf16.msra.mxu0 0
  %76 = vmatprep.subr.bf16.mxu0 0
  %77 = vmatpush1.bf16.msra.mxu0 0
  %78 = vmatprep.subr.bf16.mxu0 0
  %79 = vmatpush1.bf16.msra.mxu0 0
  %80 = vmatprep.subr.bf16.mxu0 0
  %81 = vmatpush1.bf16.msra.mxu0 0
  %82 = vmatprep.mubr.bf16.mxu0 0
  %83 = vmatmul.mubr.bf16.gmra.mrb[0].mxu0 %v45
  %v84 = vpop.f32.mrb[0].mxu0
  %v85 = vadd.f32 %v29, %v84
  %v86 = vpop.f32.mrb[0].mxu0
  %v87 = vpop.f32.mrb[0].mxu0
  %v88 = vadd.f32 %v29, %v87
  %v89 = vpop.f32.mrb[0].mxu0
  %90 = vmatprep.mubr.bf16.mxu0 0
  %91 = vmatmul.mubr.bf16.gmra.mrb[0].mxu0 %v48
  %v92 = vpop.f32.mrb[0].mxu0
  %v93 = vadd.f32 %v29, %v92
  %v94 = vpop.f32.mrb[0].mxu0
  %v95 = vpop.f32.mrb[0].mxu0
  %v96 = vpop.f32.mrb[0].mxu0
  %97 = vdwg.mxu0
  %98 = vst [vmem:[%s3] sm:$0xff] %v85
  %99 = vst [vmem:[%s3 + $0x8] sm:$0xff] %v88
  %100 = vst [vmem:[%s3 + $0x10] sm:$0xff] %v93
  // Predicated region
  $region14: #{bidaf_forward.24} parent=0 // pred_check
    _
  $region15: #{bidaf_forward.24} parent=0 // pred_check_branch
    %102 = sbr.rel (0) target = $region17
  $region16: #{bidaf_forward.24} parent=0 // pred_region
    _
  $region17: #{bidaf_forward.24} parent=0 // pred_fallthru
    _
  // Predicated region
  $region18: #{bidaf_forward.24} parent=0 // pred_check
    _
  $region19: #{bidaf_forward.24} parent=0 // pred_check_branch
    %104 = sbr.rel (0) target = $region21
  $region20: #{bidaf_forward.24} parent=0 // pred_region
    _
  $region21: #{bidaf_forward.24} parent=0 // pred_fallthru
    _

// kernel: bidaf_forward.21
$region0: #{bidaf_forward.21}
  #allocation0 [shape = 'u32[]', space=smem, size = 0x4, offset = 0x4, fixed_abs, tag = 'smem constant byte address 0x4 - core index']
  #allocation1 [shape = 'u32[144,128]{1,0:T(1,128)}', space=vmem, size = 0x12000, scoped, tag = 'internal scratch']
  #allocation2 [shape = 'f32[1,1]{1,0:T(1,128)S(1)}', space=vmem, size = 0x200, scoped, tag = 'scoped memory for bidaf_forward.21']
  %s0 = inlined_call_operand.vmem [shape: f32[2,12,32], index: 0, kind: input, shape index: {}]
  %s1 = inlined_call_operand.vmem [shape: f32[2,8,32], index: 1, kind: input, shape index: {}]
  %s2 = inlined_call_operand.vmem [shape: f32[2,12,1], index: 2, kind: input, shape index: {}]
  %s3 = inlined_call_operand.vmem [shape: f32[2,1,8], index: 3, kind: input, shape index: {}]
  %s4 = inlined_call_operand.vmem [shape: f32[1,32], index: 4, kind: input, shape index: {}]
  %s5 = inlined_call_operand.vmem [shape: f32[1,32], index: 5, kind: input, shape index: {}]
  %s6 = inlined_call_operand.vmem [shape: f32[1,32], index: 6, kind: input, shape index: {}]
  %s7 = inlined_call_operand.<no memory space> [shape: f32[1,1], index: 7, kind: input, shape index: {}]
  %s8 = inlined_call_operand.vmem [shape: f32[2,12,128], index: 8, kind: output, shape index: {}]
  %s9 = sld [smem:[#allocation0]]
  $region42: #{bidaf_forward.21} parent=0
    _
  %s11 = ssub.s32 1, %s9
  %s12 = scalar_select 0, %s11, %s9
  %v13 = vstv %s7
  %14 = vst [vmem:[#allocation2] sm:$0x1] %v13
  // Predicated region
  $region2: #{bidaf_forward.21} parent=0 // pred_check
    _
  $region3: #{bidaf_forward.21} parent=0 // pred_check_branch
    %16 = sbr.rel (0) target = $region5
  $region4: #{bidaf_forward.21} parent=0 // pred_region
    _
  $region5: #{bidaf_forward.21} parent=0 // pred_fallthru
    _
  // Predicated region
  $region6: #{bidaf_forward.21} parent=0 // pred_check
    _
  $region7: #{bidaf_forward.21} parent=0 // pred_check_branch
    %18 = sbr.rel (0) target = $region9
  $region8: #{bidaf_forward.21} parent=0 // pred_region
    _
  $region9: #{bidaf_forward.21} parent=0 // pred_fallthru
    _
  // Predicated region
  $region10: #{bidaf_forward.21} parent=0 // pred_check
    _
  $region11: #{bidaf_forward.21} parent=0 // pred_check_branch
    %20 = sbr.rel (0) target = $region13
  $region12: #{bidaf_forward.21} parent=0 // pred_region
    _
  $region13: #{bidaf_forward.21} parent=0 // pred_fallthru
    _
  // Predicated region
  $region14: #{bidaf_forward.21} parent=0 // pred_check
    _
  $region15: #{bidaf_forward.21} parent=0 // pred_check_branch
    %22 = sbr.rel (0) target = $region17
  $region16: #{bidaf_forward.21} parent=0 // pred_region
    _
  $region17: #{bidaf_forward.21} parent=0 // pred_fallthru
    _
  // Predicated region
  $region18: #{bidaf_forward.21} parent=0 // pred_check
    _
  $region19: #{bidaf_forward.21} parent=0 // pred_check_branch
    %24 = sbr.rel (0) target = $region21
  $region20: #{bidaf_forward.21} parent=0 // pred_region
    _
  $region21: #{bidaf_forward.21} parent=0 // pred_fallthru
    _
  // Predicated region
  $region22: #{bidaf_forward.21} parent=0 // pred_check
    _
  $region23: #{bidaf_forward.21} parent=0 // pred_check_branch
    %26 = sbr.rel (0) target = $region25
  $region24: #{bidaf_forward.21} parent=0 // pred_region
    _
  $region25: #{bidaf_forward.21} parent=0 // pred_fallthru
    _
  // Predicated region
  $region26: #{bidaf_forward.21} parent=0 // pred_check
    _
  $region27: #{bidaf_forward.21} parent=0 // pred_check_branch
    %28 = sbr.rel (0) target = $region29
  $region28: #{bidaf_forward.21} parent=0 // pred_region
    _
  $region29: #{bidaf_forward.21} parent=0 // pred_fallthru
    _
  // Predicated region
  $region30: #{bidaf_forward.21} parent=0 // pred_check
    _
  $region31: #{bidaf_forward.21} parent=0 // pred_check_branch
    %30 = sbr.rel (0) target = $region33
  $region32: #{bidaf_forward.21} parent=0 // pred_region
    _
  $region33: #{bidaf_forward.21} parent=0 // pred_fallthru
    _
  %v32 = vld [vmem:[%s0] sm:$0xff]
  %v33 = vld [vmem:[%s0 + $0x8] sm:$0xf]
  %v34 = vld [vmem:[%s0 + $0x10] sm:$0xff]
  %v35 = vld [vmem:[%s0 + $0x18] sm:$0xf]
  %v36 = vld [vmem:[%s1] sm:$0xff]
  %v37 = vld [vmem:[%s1 + $0x8] sm:$0xff]
  %v38 = vld [vmem:[%s2] sm:$0xff]
  %v39 = vld [vmem:[%s2 + $0x8] sm:$0xf]
  %v40 = vld [vmem:[%s2 + $0x10] sm:$0xff]
  %v41 = vld [vmem:[%s2 + $0x18] sm:$0xf]
  %v42 = vld [vmem:[%s3] sm:$0x1]
  %v43 = vld [vmem:[%s3 + $0x1] sm:$0x1]
  %v44 = vpack.c.bf16 %v33, %v32
  %v45 = vpack.c.bf16 %v35, %v34
  %v46 = vpack.c.bf16 %v36, %v36
  %v47 = vpack.c.bf16 %v37, %v37
  %v48 = vld [vmem:[%s4] sm:$0x1]
  %v50 = vlaneseq
  %v51 = vshrl.u32 %v50, 7
  %v52 = vsub.s32 0, %v51
  %v53 = vrot.slane %v48, %v52
  %v55 = vmul.f32 %v32, %v53
  %v56 = vmul.f32 %v33, %v53
  %v57 = vmul.f32 %v34, %v53
  %v58 = vmul.f32 %v35, %v53
  %vm59 = vcmask 261120
  %v60 = vsel %vm59, %v55, 0.0
  %61 = vadd.xlane.f32.xlu0 %v60
  %v62 = vpop.xlane.xlu0 %61
  %vm63 = vcmask 257024
  %v64 = vsel %vm63, %v56, 0.0
  %65 = vadd.xlane.f32.xlu0 %v64
  %v66 = vpop.xlane.xlu0 %65
  %v67 = vsel %vm59, %v57, 0.0
  %68 = vadd.xlane.f32.xlu0 %v67
  %v69 = vpop.xlane.xlu0 %68
  %v70 = vsel %vm63, %v58, 0.0
  %71 = vadd.xlane.f32.xlu0 %v70
  %v72 = vpop.xlane.xlu0 %71
  %v73 = vld [vmem:[%s5] sm:$0x1]
  %v75 = vlaneseq
  %v76 = vshrl.u32 %v75, 7
  %v77 = vsub.s32 0, %v76
  %v78 = vrot.slane %v73, %v77
  %v80 = vmul.f32 %v36, %v78
  %v81 = vmul.f32 %v37, %v78
  %v82 = vsel %vm59, %v80, 0.0
  %83 = vadd.xlane.f32.xlu0 %v82
  %v84 = vpop.xlane.xlu0 %83
  %v85 = vsel %vm59, %v81, 0.0
  %86 = vadd.xlane.f32.xlu0 %v85
  %v87 = vpop.xlane.xlu0 %86
  %v88 = vld [vmem:[%s6] sm:$0x1]
  %v90 = vlaneseq
  %v91 = vshrl.u32 %v90, 7
  %v92 = vsub.s32 0, %v91
  %v93 = vrot.slane %v88, %v92
  %v95 = vmul.f32 %v32, %v93
  %v96 = vmul.f32 %v33, %v93
  %v97 = vmul.f32 %v34, %v93
  %v98 = vmul.f32 %v35, %v93
  %v99 = vpack.c.bf16 %v96, %v95
  %v100 = vpack.c.bf16 %v98, %v97
  %v102 = vsel %vm59, %v99, 0
  %v105 = vsel %vm59, %v46, 0
  %107 = vmatprep.subr.bf16.mxu0 0
  %108 = vmatpush1.bf16.xpose.msra.mxu0 %v105
  %109 = vmatprep.subr.bf16.mxu0 0
  %110 = vmatpush1.bf16.xpose.msra.mxu0 0
  %111 = vmatprep.subr.bf16.mxu0 0
  %112 = vmatpush1.bf16.xpose.msra.mxu0 0
  %113 = vmatprep.subr.bf16.mxu0 0
  %114 = vmatpush1.bf16.xpose.msra.mxu0 0
  %115 = vmatprep.subr.bf16.mxu0 0
  %116 = vmatpush1.bf16.xpose.msra.mxu0 0
  %117 = vmatprep.subr.bf16.mxu0 0
  %118 = vmatpush1.bf16.xpose.msra.mxu0 0
  %119 = vmatprep.subr.bf16.mxu0 0
  %120 = vmatpush1.bf16.xpose.msra.mxu0 0
  %121 = vmatprep.subr.bf16.mxu0 0
  %122 = vmatpush1.bf16.xpose.msra.mxu0 0
  %123 = vmatprep.subr.bf16.mxu0 0
  %124 = vmatpush1.bf16.xpose.msra.mxu0 0
  %125 = vmatprep.subr.bf16.mxu0 0
  %126 = vmatpush1.bf16.xpose.msra.mxu0 0
  %127 = vmatprep.subr.bf16.mxu0 0
  %128 = vmatpush1.bf16.xpose.msra.mxu0 0
  %129 = vmatprep.subr.bf16.mxu0 0
  %130 = vmatpush1.bf16.xpose.msra.mxu0 0
  %131 = vmatprep.subr.bf16.mxu0 0
  %132 = vmatpush1.bf16.xpose.msra.mxu0 0
  %133 = vmatprep.subr.bf16.mxu0 0
  %134 = vmatpush1.bf16.xpose.msra.mxu0 0
  %135 = vmatprep.subr.bf16.mxu0 0
  %136 = vmatpush1.bf16.xpose.msra.mxu0 0
  %137 = vmatprep.subr.bf16.mxu0 0
  %138 = vmatpush1.bf16.xpose.msra.mxu0 0
  %139 = vmatprep.mubr.bf16.mxu0 0
  %140 = vmatmul.mubr.bf16.gmra.mrb[0].mxu0 %v102
  %v141 = vpop.f32.mrb[0].mxu0
  %v142 = vadd.f32 0.0, %v141
  %v143 = vpop.f32.mrb[0].mxu0
  %v144 = vpop.f32.mrb[0].mxu0
  %v145 = vadd.f32 0.0, %v144
  %v146 = vpop.f32.mrb[0].mxu0
  %147 = vdwg.mxu0
  %v149 = vsel %vm59, %v100, 0
  %v152 = vsel %vm59, %v47, 0
  %154 = vmatprep.subr.bf16.mxu0 0
  %155 = vmatpush1.bf16.xpose.msra.mxu0 %v152
  %156 = vmatprep.subr.bf16.mxu0 0
  %157 = vmatpush1.bf16.xpose.msra.mxu0 0
  %158 = vmatprep.subr.bf16.mxu0 0
  %159 = vmatpush1.bf16.xpose.msra.mxu0 0
  %160 = vmatprep.subr.bf16.mxu0 0
  %161 = vmatpush1.bf16.xpose.msra.mxu0 0
  %162 = vmatprep.subr.bf16.mxu0 0
  %163 = vmatpush1.bf16.xpose.msra.mxu0 0
  %164 = vmatprep.subr.bf16.mxu0 0
  %165 = vmatpush1.bf16.xpose.msra.mxu0 0
  %166 = vmatprep.subr.bf16.mxu0 0
  %167 = vmatpush1.bf16.xpose.msra.mxu0 0
  %168 = vmatprep.subr.bf16.mxu0 0
  %169 = vmatpush1.bf16.xpose.msra.mxu0 0
  %170 = vmatprep.subr.bf16.mxu0 0
  %171 = vmatpush1.bf16.xpose.msra.mxu0 0
  %172 = vmatprep.subr.bf16.mxu0 0
  %173 = vmatpush1.bf16.xpose.msra.mxu0 0
  %174 = vmatprep.subr.bf16.mxu0 0
  %175 = vmatpush1.bf16.xpose.msra.mxu0 0
  %176 = vmatprep.subr.bf16.mxu0 0
  %177 = vmatpush1.bf16.xpose.msra.mxu0 0
  %178 = vmatprep.subr.bf16.mxu0 0
  %179 = vmatpush1.bf16.xpose.msra.mxu0 0
  %180 = vmatprep.subr.bf16.mxu0 0
  %181 = vmatpush1.bf16.xpose.msra.mxu0 0
  %182 = vmatprep.subr.bf16.mxu0 0
  %183 = vmatpush1.bf16.xpose.msra.mxu0 0
  %184 = vmatprep.subr.bf16.mxu0 0
  %185 = vmatpush1.bf16.xpose.msra.mxu0 0
  %186 = vmatprep.mubr.bf16.mxu0 0
  %187 = vmatmul.mubr.bf16.gmra.mrb[0].mxu0 %v149
  %v188 = vpop.f32.mrb[0].mxu0
  %v189 = vadd.f32 0.0, %v188
  %v190 = vpop.f32.mrb[0].mxu0
  %v191 = vpop.f32.mrb[0].mxu0
  %v192 = vadd.f32 0.0, %v191
  %v193 = vpop.f32.mrb[0].mxu0
  %194 = vdwg.mxu0
  %v197 = vlaneseq
  %v198 = vand.u32 %v197, 127
  %v199 = vlaneseq
  %v200 = vshrl.u32 %v199, 7
  %v201 = vsub.s32 %v198, %v200
  %v202 = vrot.slane %v84, %v201
  %v203 = vlaneseq
  %v204 = vshrl.u32 %v203, 7
  %v205 = vsub.s32 %v198, %v204
  %v206 = vrot.slane %v87, %v205
  %vm207 = vcmask 1042434
  %v208 = vsel %vm207, %v202, %v202
  %vm209 = vcmask 1043459
  %v210 = vsel %vm209, %v202, %v208
  %vm211 = vcmask 1044484
  %v212 = vsel %vm211, %v202, %v210
  %vm213 = vcmask 1045509
  %v214 = vsel %vm213, %v202, %v212
  %vm215 = vcmask 1046534
  %v216 = vsel %vm215, %v202, %v214
  %vm217 = vcmask 1047559
  %v218 = vsel %vm217, %v202, %v216
  %v219 = vsel %vm207, %v206, %v206
  %v220 = vsel %vm209, %v206, %v219
  %v221 = vsel %vm211, %v206, %v220
  %v222 = vsel %vm213, %v206, %v221
  %v223 = vsel %vm215, %v206, %v222
  %v224 = vsel %vm217, %v206, %v223
  %v229 = vadd.f32 %v62, %v218
  %v230 = vadd.f32 %v66, %v210
  %v231 = vadd.f32 %v69, %v224
  %v232 = vadd.f32 %v72, %v220
  %v233 = vadd.f32 %v229, %v142
  %v234 = vadd.f32 %v230, %v145
  %v235 = vadd.f32 %v231, %v189
  %v236 = vadd.f32 %v232, %v192
  %v237 = vld [vmem:[#allocation2] sm:$0x1]
  %v239 = vlaneseq
  %v240 = vshrl.u32 %v239, 7
  %v241 = vsub.s32 0, %v240
  %v242 = vrot.slane %v237, %v241
  %243 = vset.pattern.permute.xlu0 0
  %244 = vperm.xlu0 %243, %v242
  %v245 = vpop.permute.xlu0 %244
  %v247 = vadd.f32 %v233, %v245
  %v248 = vadd.f32 %v234, %v245
  %v249 = vadd.f32 %v235, %v245
  %v250 = vadd.f32 %v236, %v245
  %v253 = vlaneseq
  %v254 = vshrl.u32 %v253, 7
  %v255 = vsub.s32 0, %v254
  %v256 = vrot.slane %v42, %v255
  %v257 = vlaneseq
  %v258 = vshrl.u32 %v257, 7
  %v259 = vsub.s32 0, %v258
  %v260 = vrot.slane %v43, %v259
  %v263 = vmul.f32 %v256, %v247
  %v264 = vmul.f32 %v256, %v248
  %v265 = vmul.f32 %v260, %v249
  %v266 = vmul.f32 %v260, %v250
  %v267 = vsub.f32 1.0, %v42
  %v268 = vsub.f32 1.0, %v43
  %v269 = vmul.f32 %v267, -1e+30
  %v270 = vmul.f32 %v268, -1e+30
  %v273 = vlaneseq
  %v274 = vshrl.u32 %v273, 7
  %v275 = vsub.s32 0, %v274
  %v276 = vrot.slane %v269, %v275
  %v277 = vlaneseq
  %v278 = vshrl.u32 %v277, 7
  %v279 = vsub.s32 0, %v278
  %v280 = vrot.slane %v270, %v279
  %v283 = vadd.f32 %v263, %v276
  %v284 = vadd.f32 %v264, %v276
  %v285 = vadd.f32 %v265, %v280
  %v286 = vadd.f32 %v266, %v280
  %vm287 = vcmask 64512
  %v288 = vsel %vm287, %v283, -inf
  %289 = vmax.xlane.f32.xlu0 %v288
  %v290 = vpop.xlane.xlu0 %289
  %vm291 = vcmask 60416
  %v292 = vsel %vm291, %v284, -inf
  %293 = vmax.xlane.f32.xlu0 %v292
  %v294 = vpop.xlane.xlu0 %293
  %v295 = vsel %vm287, %v285, -inf
  %296 = vmax.xlane.f32.xlu0 %v295
  %v297 = vpop.xlane.xlu0 %296
  %v298 = vsel %vm291, %v286, -inf
  %299 = vmax.xlane.f32.xlu0 %v298
  %v300 = vpop.xlane.xlu0 %299
  %v301 = vsub.f32 %v283, %v290
  %v302 = vsub.f32 %v284, %v294
  %v303 = vsub.f32 %v285, %v297
  %v304 = vsub.f32 %v286, %v300
  %v305 = vmul.f32 %v301, 1.442695
  %v306 = vpow.pop %v305
  %v307 = vmul.f32 %v302, 1.442695
  %v308 = vpow.pop %v307
  %v309 = vmul.f32 %v303, 1.442695
  %v310 = vpow.pop %v309
  %v311 = vmul.f32 %v304, 1.442695
  %v312 = vpow.pop %v311
  %v313 = vsel %vm287, %v306, 0.0
  %314 = vadd.xlane.f32.xlu0 %v313
  %v315 = vpop.xlane.xlu0 %314
  %v316 = vsel %vm291, %v308, 0.0
  %317 = vadd.xlane.f32.xlu0 %v316
  %v318 = vpop.xlane.xlu0 %317
  %v319 = vsel %vm287, %v310, 0.0
  %320 = vadd.xlane.f32.xlu0 %v319
  %v321 = vpop.xlane.xlu0 %320
  %v322 = vsel %vm291, %v312, 0.0
  %323 = vadd.xlane.f32.xlu0 %v322
  %v324 = vpop.xlane.xlu0 %323
  %v325 = vrcp.pop %v315
  %v326 = vrcp.pop %v318
  %v327 = vrcp.pop %v321
  %v328 = vrcp.pop %v324
  %v329 = vmul.f32 %v306, %v325
  %v330 = vmul.f32 %v308, %v326
  %v331 = vmul.f32 %v310, %v327
  %v332 = vmul.f32 %v312, %v328
  %334 = vset.pattern.permute.xlu0 0
  %335 = vperm.xlu0 %334, %v38
  %v336 = vpop.permute.xlu0 %335
  %339 = vset.pattern.permute.xlu0 0
  %340 = vperm.xlu0 %339, %v39
  %v341 = vpop.permute.xlu0 %340
  %344 = vset.pattern.permute.xlu0 0
  %345 = vperm.xlu0 %344, %v40
  %v346 = vpop.permute.xlu0 %345
  %349 = vset.pattern.permute.xlu0 0
  %350 = vperm.xlu0 %349, %v41
  %v351 = vpop.permute.xlu0 %350
  %v353 = vmul.f32 %v336, %v247
  %v354 = vmul.f32 %v341, %v248
  %v355 = vmul.f32 %v346, %v249
  %v356 = vmul.f32 %v351, %v250
  %v357 = vsub.f32 1.0, %v38
  %v358 = vsub.f32 1.0, %v39
  %v359 = vsub.f32 1.0, %v40
  %v360 = vsub.f32 1.0, %v41
  %v361 = vmul.f32 %v357, -1e+30
  %v362 = vmul.f32 %v358, -1e+30
  %v363 = vmul.f32 %v359, -1e+30
  %v364 = vmul.f32 %v360, -1e+30
  %366 = vset.pattern.permute.xlu0 0
  %367 = vperm.xlu0 %366, %v361
  %v368 = vpop.permute.xlu0 %367
  %371 = vset.pattern.permute.xlu0 0
  %372 = vperm.xlu0 %371, %v362
  %v373 = vpop.permute.xlu0 %372
  %376 = vset.pattern.permute.xlu0 0
  %377 = vperm.xlu0 %376, %v363
  %v378 = vpop.permute.xlu0 %377
  %381 = vset.pattern.permute.xlu0 0
  %382 = vperm.xlu0 %381, %v364
  %v383 = vpop.permute.xlu0 %382
  %v385 = vadd.f32 %v353, %v368
  %v386 = vadd.f32 %v354, %v373
  %v387 = vadd.f32 %v355, %v378
  %v388 = vadd.f32 %v356, %v383
  %v389 = vsel %vm287, %v385, -inf
  %v390 = vsel %vm291, %v386, -inf
  %v391 = vmax.f32 %v389, %v390
  %v392 = vrot.slane %v391, 4
  %v393 = vmax.f32 %v391, %v392
  %v394 = vrot.slane %v393, 2
  %v395 = vmax.f32 %v393, %v394
  %v396 = vrot.slane %v395, 1
  %v397 = vmax.f32 %v395, %v396
  %v398 = vsel %vm287, %v387, -inf
  %v399 = vsel %vm291, %v388, -inf
  %v400 = vmax.f32 %v398, %v399
  %v401 = vrot.slane %v400, 4
  %v402 = vmax.f32 %v400, %v401
  %v403 = vrot.slane %v402, 2
  %v404 = vmax.f32 %v402, %v403
  %v405 = vrot.slane %v404, 1
  %v406 = vmax.f32 %v404, %v405
  %v407 = vsub.f32 %v385, %v397
  %v408 = vsub.f32 %v386, %v397
  %v409 = vsub.f32 %v387, %v406
  %v410 = vsub.f32 %v388, %v406
  %v411 = vmul.f32 %v407, 1.442695
  %v412 = vpow.pop %v411
  %v413 = vmul.f32 %v408, 1.442695
  %v414 = vpow.pop %v413
  %v415 = vmul.f32 %v409, 1.442695
  %v416 = vpow.pop %v415
  %v417 = vmul.f32 %v410, 1.442695
  %v418 = vpow.pop %v417
  %v419 = vsel %vm287, %v412, 0.0
  %v420 = vsel %vm291, %v414, 0.0
  %v421 = vadd.f32 %v419, %v420
  %v422 = vrot.slane %v421, 4
  %v423 = vadd.f32 %v421, %v422
  %v424 = vrot.slane %v423, 2
  %v425 = vadd.f32 %v423, %v424
  %v426 = vrot.slane %v425, 1
  %v427 = vadd.f32 %v425, %v426
  %v428 = vsel %vm287, %v416, 0.0
  %v429 = vsel %vm291, %v418, 0.0
  %v430 = vadd.f32 %v428, %v429
  %v431 = vrot.slane %v430, 4
  %v432 = vadd.f32 %v430, %v431
  %v433 = vrot.slane %v432, 2
  %v434 = vadd.f32 %v432, %v433
  %v435 = vrot.slane %v434, 1
  %v436 = vadd.f32 %v434, %v435
  %v437 = vrcp.pop %v427
  %v438 = vrcp.pop %v436
  %v439 = vmul.f32 %v412, %v437
  %v440 = vmul.f32 %v414, %v437
  %v441 = vmul.f32 %v416, %v438
  %v442 = vmul.f32 %v418, %v438
  %v443 = vpack.c.bf16 %v330, %v329
  %v444 = vpack.c.bf16 %v332, %v331
  %v446 = vsel %vm287, %v443, 0
  %vm448 = vcmask 1043456
  %v449 = vsel %vm448, %v46, 0
  %451 = vmatprep.subr.bf16.mxu0 0
  %452 = vmatpush1.bf16.msra.mxu0 %v449
  %453 = vmatprep.subr.bf16.mxu0 0
  %454 = vmatpush1.bf16.msra.mxu0 0
  %455 = vmatprep.subr.bf16.mxu0 0
  %456 = vmatpush1.bf16.msra.mxu0 0
  %457 = vmatprep.subr.bf16.mxu0 0
  %458 = vmatpush1.bf16.msra.mxu0 0
  %459 = vmatprep.subr.bf16.mxu0 0
  %460 = vmatpush1.bf16.msra.mxu0 0
  %461 = vmatprep.subr.bf16.mxu0 0
  %462 = vmatpush1.bf16.msra.mxu0 0
  %463 = vmatprep.subr.bf16.mxu0 0
  %464 = vmatpush1.bf16.msra.mxu0 0
  %465 = vmatprep.subr.bf16.mxu0 0
  %466 = vmatpush1.bf16.msra.mxu0 0
  %467 = vmatprep.subr.bf16.mxu0 0
  %468 = vmatpush1.bf16.msra.mxu0 0
  %469 = vmatprep.subr.bf16.mxu0 0
  %470 = vmatpush1.bf16.msra.mxu0 0
  %471 = vmatprep.subr.bf16.mxu0 0
  %472 = vmatpush1.bf16.msra.mxu0 0
  %473 = vmatprep.subr.bf16.mxu0 0
  %474 = vmatpush1.bf16.msra.mxu0 0
  %475 = vmatprep.subr.bf16.mxu0 0
  %476 = vmatpush1.bf16.msra.mxu0 0
  %477 = vmatprep.subr.bf16.mxu0 0
  %478 = vmatpush1.bf16.msra.mxu0 0
  %479 = vmatprep.subr.bf16.mxu0 0
  %480 = vmatpush1.bf16.msra.mxu0 0
  %481 = vmatprep.subr.bf16.mxu0 0
  %482 = vmatpush1.bf16.msra.mxu0 0
  %483 = vmatprep.mubr.bf16.mxu0 0
  %484 = vmatmul.mubr.bf16.gmra.mrb[0].mxu0 %v446
  %v485 = vpop.f32.mrb[0].mxu0
  %v486 = vadd.f32 0.0, %v485
  %v487 = vpop.f32.mrb[0].mxu0
  %v488 = vpop.f32.mrb[0].mxu0
  %v489 = vadd.f32 0.0, %v488
  %v490 = vpop.f32.mrb[0].mxu0
  %491 = vdwg.mxu0
  %v493 = vsel %vm287, %v444, 0
  %v495 = vsel %vm448, %v47, 0
  %497 = vmatprep.subr.bf16.mxu0 0
  %498 = vmatpush1.bf16.msra.mxu0 %v495
  %499 = vmatprep.subr.bf16.mxu0 0
  %500 = vmatpush1.bf16.msra.mxu0 0
  %501 = vmatprep.subr.bf16.mxu0 0
  %502 = vmatpush1.bf16.msra.mxu0 0
  %503 = vmatprep.subr.bf16.mxu0 0
  %504 = vmatpush1.bf16.msra.mxu0 0
  %505 = vmatprep.subr.bf16.mxu0 0
  %506 = vmatpush1.bf16.msra.mxu0 0
  %507 = vmatprep.subr.bf16.mxu0 0
  %508 = vmatpush1.bf16.msra.mxu0 0
  %509 = vmatprep.subr.bf16.mxu0 0
  %510 = vmatpush1.bf16.msra.mxu0 0
  %511 = vmatprep.subr.bf16.mxu0 0
  %512 = vmatpush1.bf16.msra.mxu0 0
  %513 = vmatprep.subr.bf16.mxu0 0
  %514 = vmatpush1.bf16.msra.mxu0 0
  %515 = vmatprep.subr.bf16.mxu0 0
  %516 = vmatpush1.bf16.msra.mxu0 0
  %517 = vmatprep.subr.bf16.mxu0 0
  %518 = vmatpush1.bf16.msra.mxu0 0
  %519 = vmatprep.subr.bf16.mxu0 0
  %520 = vmatpush1.bf16.msra.mxu0 0
  %521 = vmatprep.subr.bf16.mxu0 0
  %522 = vmatpush1.bf16.msra.mxu0 0
  %523 = vmatprep.subr.bf16.mxu0 0
  %524 = vmatpush1.bf16.msra.mxu0 0
  %525 = vmatprep.subr.bf16.mxu0 0
  %526 = vmatpush1.bf16.msra.mxu0 0
  %527 = vmatprep.subr.bf16.mxu0 0
  %528 = vmatpush1.bf16.msra.mxu0 0
  %529 = vmatprep.mubr.bf16.mxu0 0
  %530 = vmatmul.mubr.bf16.gmra.mrb[0].mxu0 %v493
  %v531 = vpop.f32.mrb[0].mxu0
  %v532 = vadd.f32 0.0, %v531
  %v533 = vpop.f32.mrb[0].mxu0
  %v534 = vpop.f32.mrb[0].mxu0
  %v535 = vadd.f32 0.0, %v534
  %v536 = vpop.f32.mrb[0].mxu0
  %537 = vdwg.mxu0
  %v538 = vpack.c.bf16 %v440, %v439
  %v539 = vpack.c.bf16 %v442, %v441
  %v541 = vsel %vm287, %v538, 0
  %543 = vmatprep.subr.bf16.mxu0 0
  %544 = vmatpush1.bf16.xpose.msra.mxu0 %v541
  %545 = vmatprep.subr.bf16.mxu0 0
  %546 = vmatpush1.bf16.xpose.msra.mxu0 0
  %547 = vmatprep.subr.bf16.mxu0 0
  %548 = vmatpush1.bf16.xpose.msra.mxu0 0
  %549 = vmatprep.subr.bf16.mxu0 0
  %550 = vmatpush1.bf16.xpose.msra.mxu0 0
  %551 = vmatprep.subr.bf16.mxu0 0
  %552 = vmatpush1.bf16.xpose.msra.mxu0 0
  %553 = vmatprep.subr.bf16.mxu0 0
  %554 = vmatpush1.bf16.xpose.msra.mxu0 0
  %555 = vmatprep.subr.bf16.mxu0 0
  %556 = vmatpush1.bf16.xpose.msra.mxu0 0
  %557 = vmatprep.subr.bf16.mxu0 0
  %558 = vmatpush1.bf16.xpose.msra.mxu0 0
  %559 = vmatprep.subr.bf16.mxu0 0
  %560 = vmatpush1.bf16.xpose.msra.mxu0 0
  %561 = vmatprep.subr.bf16.mxu0 0
  %562 = vmatpush1.bf16.xpose.msra.mxu0 0
  %563 = vmatprep.subr.bf16.mxu0 0
  %564 = vmatpush1.bf16.xpose.msra.mxu0 0
  %565 = vmatprep.subr.bf16.mxu0 0
  %566 = vmatpush1.bf16.xpose.msra.mxu0 0
  %567 = vmatprep.subr.bf16.mxu0 0
  %568 = vmatpush1.bf16.xpose.msra.mxu0 0
  %569 = vmatprep.subr.bf16.mxu0 0
  %570 = vmatpush1.bf16.xpose.msra.mxu0 0
  %571 = vmatprep.subr.bf16.mxu0 0
  %572 = vmatpush1.bf16.xpose.msra.mxu0 0
  %573 = vmatprep.subr.bf16.mxu0 0
  %574 = vmatpush1.bf16.xpose.msra.mxu0 0
  %575 = vmatprep.mubr.bf16.mxu0 0
  %576 = vmatmul.mubr.bf16.gmra.mrb[0].mxu0 %v446
  %v577 = vpop.f32.mrb[0].mxu0
  %v578 = vadd.f32 0.0, %v577
  %v579 = vpop.f32.mrb[0].mxu0
  %v580 = vpop.f32.mrb[0].mxu0
  %v581 = vadd.f32 0.0, %v580
  %v582 = vpop.f32.mrb[0].mxu0
  %583 = vdwg.mxu0
  %v585 = vsel %vm287, %v539, 0
  %587 = vmatprep.subr.bf16.mxu0 0
  %588 = vmatpush1.bf16.xpose.msra.mxu0 %v585
  %589 = vmatprep.subr.bf16.mxu0 0
  %590 = vmatpush1.bf16.xpose.msra.mxu0 0
  %591 = vmatprep.subr.bf16.mxu0 0
  %592 = vmatpush1.bf16.xpose.msra.mxu0 0
  %593 = vmatprep.subr.bf16.mxu0 0
  %594 = vmatpush1.bf16.xpose.msra.mxu0 0
  %595 = vmatprep.subr.bf16.mxu0 0
  %596 = vmatpush1.bf16.xpose.msra.mxu0 0
  %597 = vmatprep.subr.bf16.mxu0 0
  %598 = vmatpush1.bf16.xpose.msra.mxu0 0
  %599 = vmatprep.subr.bf16.mxu0 0
  %600 = vmatpush1.bf16.xpose.msra.mxu0 0
  %601 = vmatprep.subr.bf16.mxu0 0
  %602 = vmatpush1.bf16.xpose.msra.mxu0 0
  %603 = vmatprep.subr.bf16.mxu0 0
  %604 = vmatpush1.bf16.xpose.msra.mxu0 0
  %605 = vmatprep.subr.bf16.mxu0 0
  %606 = vmatpush1.bf16.xpose.msra.mxu0 0
  %607 = vmatprep.subr.bf16.mxu0 0
  %608 = vmatpush1.bf16.xpose.msra.mxu0 0
  %609 = vmatprep.subr.bf16.mxu0 0
  %610 = vmatpush1.bf16.xpose.msra.mxu0 0
  %611 = vmatprep.subr.bf16.mxu0 0
  %612 = vmatpush1.bf16.xpose.msra.mxu0 0
  %613 = vmatprep.subr.bf16.mxu0 0
  %614 = vmatpush1.bf16.xpose.msra.mxu0 0
  %615 = vmatprep.subr.bf16.mxu0 0
  %616 = vmatpush1.bf16.xpose.msra.mxu0 0
  %617 = vmatprep.subr.bf16.mxu0 0
  %618 = vmatpush1.bf16.xpose.msra.mxu0 0
  %619 = vmatprep.mubr.bf16.mxu0 0
  %620 = vmatmul.mubr.bf16.gmra.mrb[0].mxu0 %v493
  %v621 = vpop.f32.mrb[0].mxu0
  %v622 = vadd.f32 0.0, %v621
  %v623 = vpop.f32.mrb[0].mxu0
  %v624 = vpop.f32.mrb[0].mxu0
  %v625 = vadd.f32 0.0, %v624
  %v626 = vpop.f32.mrb[0].mxu0
  %627 = vdwg.mxu0
  %v628 = vpack.c.bf16 %v581, %v578
  %v629 = vpack.c.bf16 %v625, %v622
  %vm630 = vcmask 97280
  %v632 = vsel %vm630, %v628, 0
  %vm634 = vcmask 1045504
  %v636 = vsel %vm634, %v44, 0
  %638 = vmatprep.subr.bf16.mxu0 0
  %639 = vmatpush1.bf16.msra.mxu0 %v636
  %640 = vmatprep.subr.bf16.mxu0 0
  %641 = vmatpush1.bf16.msra.mxu0 0
  %642 = vmatprep.subr.bf16.mxu0 0
  %643 = vmatpush1.bf16.msra.mxu0 0
  %644 = vmatprep.subr.bf16.mxu0 0
  %645 = vmatpush1.bf16.msra.mxu0 0
  %646 = vmatprep.subr.bf16.mxu0 0
  %647 = vmatpush1.bf16.msra.mxu0 0
  %648 = vmatprep.subr.bf16.mxu0 0
  %649 = vmatpush1.bf16.msra.mxu0 0
  %650 = vmatprep.subr.bf16.mxu0 0
  %651 = vmatpush1.bf16.msra.mxu0 0
  %652 = vmatprep.subr.bf16.mxu0 0
  %653 = vmatpush1.bf16.msra.mxu0 0
  %654 = vmatprep.subr.bf16.mxu0 0
  %655 = vmatpush1.bf16.msra.mxu0 0
  %656 = vmatprep.subr.bf16.mxu0 0
  %657 = vmatpush1.bf16.msra.mxu0 0
  %658 = vmatprep.subr.bf16.mxu0 0
  %659 = vmatpush1.bf16.msra.mxu0 0
  %660 = vmatprep.subr.bf16.mxu0 0
  %661 = vmatpush1.bf16.msra.mxu0 0
  %662 = vmatprep.subr.bf16.mxu0 0
  %663 = vmatpush1.bf16.msra.mxu0 0
  %664 = vmatprep.subr.bf16.mxu0 0
  %665 = vmatpush1.bf16.msra.mxu0 0
  %666 = vmatprep.subr.bf16.mxu0 0
  %667 = vmatpush1.bf16.msra.mxu0 0
  %668 = vmatprep.subr.bf16.mxu0 0
  %669 = vmatpush1.bf16.msra.mxu0 0
  %670 = vmatprep.mubr.bf16.mxu0 0
  %671 = vmatmul.mubr.bf16.gmra.mrb[0].mxu0 %v632
  %v672 = vpop.f32.mrb[0].mxu0
  %v673 = vadd.f32 0.0, %v672
  %v674 = vpop.f32.mrb[0].mxu0
  %v675 = vpop.f32.mrb[0].mxu0
  %v676 = vadd.f32 0.0, %v675
  %v677 = vpop.f32.mrb[0].mxu0
  %678 = vdwg.mxu0
  %v680 = vsel %vm630, %v629, 0
  %v683 = vsel %vm634, %v45, 0
  %685 = vmatprep.subr.bf16.mxu0 0
  %686 = vmatpush1.bf16.msra.mxu0 %v683
  %687 = vmatprep.subr.bf16.mxu0 0
  %688 = vmatpush1.bf16.msra.mxu0 0
  %689 = vmatprep.subr.bf16.mxu0 0
  %690 = vmatpush1.bf16.msra.mxu0 0
  %691 = vmatprep.subr.bf16.mxu0 0
  %692 = vmatpush1.bf16.msra.mxu0 0
  %693 = vmatprep.subr.bf16.mxu0 0
  %694 = vmatpush1.bf16.msra.mxu0 0
  %695 = vmatprep.subr.bf16.mxu0 0
  %696 = vmatpush1.bf16.msra.mxu0 0
  %697 = vmatprep.subr.bf16.mxu0 0
  %698 = vmatpush1.bf16.msra.mxu0 0
  %699 = vmatprep.subr.bf16.mxu0 0
  %700 = vmatpush1.bf16.msra.mxu0 0
  %701 = vmatprep.subr.bf16.mxu0 0
  %702 = vmatpush1.bf16.msra.mxu0 0
  %703 = vmatprep.subr.bf16.mxu0 0
  %704 = vmatpush1.bf16.msra.mxu0 0
  %705 = vmatprep.subr.bf16.mxu0 0
  %706 = vmatpush1.bf16.msra.mxu0 0
  %707 = vmatprep.subr.bf16.mxu0 0
  %708 = vmatpush1.bf16.msra.mxu0 0
  %709 = vmatprep.subr.bf16.mxu0 0
  %710 = vmatpush1.bf16.msra.mxu0 0
  %711 = vmatprep.subr.bf16.mxu0 0
  %712 = vmatpush1.bf16.msra.mxu0 0
  %713 = vmatprep.subr.bf16.mxu0 0
  %714 = vmatpush1.bf16.msra.mxu0 0
  %715 = vmatprep.subr.bf16.mxu0 0
  %716 = vmatpush1.bf16.msra.mxu0 0
  %717 = vmatprep.mubr.bf16.mxu0 0
  %718 = vmatmul.mubr.bf16.gmra.mrb[0].mxu0 %v680
  %v719 = vpop.f32.mrb[0].mxu0
  %v720 = vadd.f32 0.0, %v719
  %v721 = vpop.f32.mrb[0].mxu0
  %v722 = vpop.f32.mrb[0].mxu0
  %v723 = vadd.f32 0.0, %v722
  %v724 = vpop.f32.mrb[0].mxu0
  %725 = vdwg.mxu0
  %726 = vst.msk [vmem:[%s8] sm:$0xff] %vm59, %v32
  %727 = vst.msk [vmem:[%s8 + $0x8] sm:$0xf] %vm63, %v33
  %728 = vst.msk [vmem:[%s8 + $0x10] sm:$0xff] %vm59, %v34
  %729 = vst.msk [vmem:[%s8 + $0x18] sm:$0xf] %vm63, %v35
  %734 = vrot.lane.b32.xlu0 %v486, 32
  %v735 = vpop.permute.xlu0 %734
  %736 = vrot.lane.b32.xlu0 %v489, 32
  %v737 = vpop.permute.xlu0 %736
  %738 = vrot.lane.b32.xlu0 %v532, 32
  %v739 = vpop.permute.xlu0 %738
  %740 = vrot.lane.b32.xlu0 %v535, 32
  %v741 = vpop.permute.xlu0 %740
  %vm746 = vcmask 523520
  %747 = vst.msk [vmem:[%s8] sm:$0xff] %vm746, %v735
  %vm748 = vcmask 519424
  %749 = vst.msk [vmem:[%s8 + $0x8] sm:$0xf] %vm748, %v737
  %750 = vst.msk [vmem:[%s8 + $0x10] sm:$0xff] %vm746, %v739
  %751 = vst.msk [vmem:[%s8 + $0x18] sm:$0xf] %vm748, %v741
  %v752 = vmul.f32 %v32, %v486
  %v753 = vmul.f32 %v33, %v489
  %v754 = vmul.f32 %v34, %v532
  %v755 = vmul.f32 %v35, %v535
  %760 = vrot.lane.b32.xlu0 %v752, 64
  %v761 = vpop.permute.xlu0 %760
  %762 = vrot.lane.b32.xlu0 %v753, 64
  %v763 = vpop.permute.xlu0 %762
  %764 = vrot.lane.b32.xlu0 %v754, 64
  %v765 = vpop.permute.xlu0 %764
  %766 = vrot.lane.b32.xlu0 %v755, 64
  %v767 = vpop.permute.xlu0 %766
  %vm772 = vcmask 785920
  %773 = vst.msk [vmem:[%s8] sm:$0xff] %vm772, %v761
  %vm774 = vcmask 781824
  %775 = vst.msk [vmem:[%s8 + $0x8] sm:$0xf] %vm774, %v763
  %776 = vst.msk [vmem:[%s8 + $0x10] sm:$0xff] %vm772, %v765
  %777 = vst.msk [vmem:[%s8 + $0x18] sm:$0xf] %vm774, %v767
  %v778 = vmul.f32 %v32, %v673
  %v779 = vmul.f32 %v33, %v676
  %v780 = vmul.f32 %v34, %v720
  %v781 = vmul.f32 %v35, %v723
  %786 = vrot.lane.b32.xlu0 %v778, 96
  %v787 = vpop.permute.xlu0 %786
  %788 = vrot.lane.b32.xlu0 %v779, 96
  %v789 = vpop.permute.xlu0 %788
  %790 = vrot.lane.b32.xlu0 %v780, 96
  %v791 = vpop.permute.xlu0 %790
  %792 = vrot.lane.b32.xlu0 %v781, 96
  %v793 = vpop.permute.xlu0 %792
  %vm798 = vcmask 1048320
  %799 = vst.msk [vmem:[%s8] sm:$0xff] %vm798, %v787
  %vm800 = vcmask 1044224
  %801 = vst.msk [vmem:[%s8 + $0x8] sm:$0xf] %vm800, %v789
  %802 = vst.msk [vmem:[%s8 + $0x10] sm:$0xff] %vm798, %v791
  %803 = vst.msk [vmem:[%s8 + $0x18] sm:$0xf] %vm800, %v793
  // Predicated region
  $region34: #{bidaf_forward.21} parent=0 // pred_check
    _
  $region35: #{bidaf_forward.21} parent=0 // pred_check_branch
    %805 = sbr.rel (0) target = $region37
  $region36: #{bidaf_forward.21} parent=0 // pred_region
    _
  $region37: #{bidaf_forward.21} parent=0 // pred_fallthru
    _
  // Predicated region
  $region38: #{bidaf_forward.21} parent=0 // pred_check
    _
  $region39: #{bidaf_forward.21} parent=0 // pred_check_branch
    %807 = sbr.rel (0) target = $region41
  $region40: #{bidaf_forward.21} parent=0 // pred_region
    _
  $region41: #{bidaf_forward.21} parent=0 // pred_fallthru
    _

// kernel: bidaf_forward.26
$region0: #{bidaf_forward.26}
  #allocation0 [shape = 'u32[]', space=smem, size = 0x4, offset = 0x4, fixed_abs, tag = 'smem constant byte address 0x4 - core index']
  #allocation1 [shape = 'u32[144,128]{1,0:T(1,128)}', space=vmem, size = 0x12000, scoped, tag = 'internal scratch']
  #allocation2 [shape = 'f32[1,1]{1,0:T(1,128)S(1)}', space=vmem, size = 0x200, scoped, tag = 'scoped memory for bidaf_forward.26']
  %s0 = inlined_call_operand.vmem [shape: f32[2,12,128], index: 0, kind: input, shape index: {}]
  %s1 = inlined_call_operand.vmem [shape: f32[2,12,32], index: 1, kind: input, shape index: {}]
  %s2 = inlined_call_operand.vmem [shape: f32[1,128], index: 2, kind: input, shape index: {}]
  %s3 = inlined_call_operand.vmem [shape: f32[1,32], index: 3, kind: input, shape index: {}]
  %s4 = inlined_call_operand.<no memory space> [shape: f32[1,1], index: 4, kind: input, shape index: {}]
  %s5 = inlined_call_operand.vmem [shape: f32[2,12], index: 5, kind: input, shape index: {}]
  %s6 = inlined_call_operand.hbm [shape: f32[2,12], index: 6, kind: output, shape index: {}]
  %s7 = sld [smem:[#allocation0]]
  $region34: #{bidaf_forward.26} parent=0
    _
  %s9 = ssub.s32 1, %s7
  %s10 = scalar_select 0, %s9, %s7
  %v11 = vstv %s4
  %12 = vst [vmem:[#allocation2] sm:$0x1] %v11
  $region1: #{bidaf_forward.26} parent=0
    #allocation3 [shape = 'u8[1024]{0}', space=vmem, size = 0x400, scoped, tag = 'output window, operand 0, single buffered']
    #allocation4 [shape = 's32[1]{0}', space=sflag, size = 0x4, scoped, tag = 'scoped memory for bidaf_forward.26']
    %13 = vsyncpa [#allocation4], 0
    // Predicated region
    $region2: #{bidaf_forward.26} parent=1 // pred_check
      _
    $region3: #{bidaf_forward.26} parent=1 // pred_check_branch
      %15 = sbr.rel (0) target = $region5
    $region4: #{bidaf_forward.26} parent=1 // pred_region
      _
    $region5: #{bidaf_forward.26} parent=1 // pred_fallthru
      _
    // Predicated region
    $region6: #{bidaf_forward.26} parent=1 // pred_check
      _
    $region7: #{bidaf_forward.26} parent=1 // pred_check_branch
      %17 = sbr.rel (0) target = $region9
    $region8: #{bidaf_forward.26} parent=1 // pred_region
      _
    $region9: #{bidaf_forward.26} parent=1 // pred_fallthru
      _
    // Predicated region
    $region10: #{bidaf_forward.26} parent=1 // pred_check
      _
    $region11: #{bidaf_forward.26} parent=1 // pred_check_branch
      %19 = sbr.rel (0) target = $region13
    $region12: #{bidaf_forward.26} parent=1 // pred_region
      _
    $region13: #{bidaf_forward.26} parent=1 // pred_fallthru
      _
    // Predicated region
    $region14: #{bidaf_forward.26} parent=1 // pred_check
      _
    $region15: #{bidaf_forward.26} parent=1 // pred_check_branch
      %21 = sbr.rel (0) target = $region17
    $region16: #{bidaf_forward.26} parent=1 // pred_region
      _
    $region17: #{bidaf_forward.26} parent=1 // pred_fallthru
      _
    // Predicated region
    $region18: #{bidaf_forward.26} parent=1 // pred_check
      _
    $region19: #{bidaf_forward.26} parent=1 // pred_check_branch
      %23 = sbr.rel (0) target = $region21
    $region20: #{bidaf_forward.26} parent=1 // pred_region
      _
    $region21: #{bidaf_forward.26} parent=1 // pred_fallthru
      _
    // Predicated region
    $region22: #{bidaf_forward.26} parent=1 // pred_check
      _
    $region23: #{bidaf_forward.26} parent=1 // pred_check_branch
      %25 = sbr.rel (0) target = $region25
    $region24: #{bidaf_forward.26} parent=1 // pred_region
      _
    $region25: #{bidaf_forward.26} parent=1 // pred_fallthru
      _
    %v26 = vld [vmem:[%s0] sm:$0xff]
    %v27 = vld [vmem:[%s0 + $0x8] sm:$0xf]
    %v28 = vld [vmem:[%s0 + $0x10] sm:$0xff]
    %v29 = vld [vmem:[%s0 + $0x18] sm:$0xf]
    %v30 = vld [vmem:[%s2] sm:$0x1]
    %v32 = vlaneseq
    %v33 = vshrl.u32 %v32, 7
    %v34 = vsub.s32 0, %v33
    %v35 = vrot.slane %v30, %v34
    %v37 = vmul.f32 %v26, %v35
    %v38 = vmul.f32 %v27, %v35
    %v39 = vmul.f32 %v28, %v35
    %v40 = vmul.f32 %v29, %v35
    %41 = vadd.xlane.f32.xlu0 %v37
    %v42 = vpop.xlane.xlu0 %41
    %vm43 = vcmask 1043456
    %v44 = vsel %vm43, %v38, 0.0
    %45 = vadd.xlane.f32.xlu0 %v44
    %v46 = vpop.xlane.xlu0 %45
    %47 = vadd.xlane.f32.xlu0 %v39
    %v48 = vpop.xlane.xlu0 %47
    %v49 = vsel %vm43, %v40, 0.0
    %50 = vadd.xlane.f32.xlu0 %v49
    %v51 = vpop.xlane.xlu0 %50
    %v52 = vld [vmem:[%s1] sm:$0xff]
    %v53 = vld [vmem:[%s1 + $0x8] sm:$0xf]
    %v54 = vld [vmem:[%s1 + $0x10] sm:$0xff]
    %v55 = vld [vmem:[%s1 + $0x18] sm:$0xf]
    %v56 = vld [vmem:[%s3] sm:$0x1]
    %v58 = vlaneseq
    %v59 = vshrl.u32 %v58, 7
    %v60 = vsub.s32 0, %v59
    %v61 = vrot.slane %v56, %v60
    %v63 = vmul.f32 %v52, %v61
    %v64 = vmul.f32 %v53, %v61
    %v65 = vmul.f32 %v54, %v61
    %v66 = vmul.f32 %v55, %v61
    %vm67 = vcmask 261120
    %v68 = vsel %vm67, %v63, 0.0
    %69 = vadd.xlane.f32.xlu0 %v68
    %v70 = vpop.xlane.xlu0 %69
    %vm71 = vcmask 257024
    %v72 = vsel %vm71, %v64, 0.0
    %73 = vadd.xlane.f32.xlu0 %v72
    %v74 = vpop.xlane.xlu0 %73
    %v75 = vsel %vm67, %v65, 0.0
    %76 = vadd.xlane.f32.xlu0 %v75
    %v77 = vpop.xlane.xlu0 %76
    %v78 = vsel %vm71, %v66, 0.0
    %79 = vadd.xlane.f32.xlu0 %v78
    %v80 = vpop.xlane.xlu0 %79
    %v81 = vadd.f32 %v42, %v70
    %v82 = vadd.f32 %v46, %v74
    %v83 = vadd.f32 %v48, %v77
    %v84 = vadd.f32 %v51, %v80
    %v85 = vld [vmem:[#allocation2] sm:$0x1]
    %v87 = vlaneseq
    %v88 = vshrl.u32 %v87, 7
    %v89 = vsub.s32 0, %v88
    %v90 = vrot.slane %v85, %v89
    %91 = vset.pattern.permute.xlu0 0
    %92 = vperm.xlu0 %91, %v90
    %v93 = vpop.permute.xlu0 %92
    %v95 = vadd.f32 %v81, %v93
    %v96 = vadd.f32 %v82, %v93
    %v97 = vadd.f32 %v83, %v93
    %v98 = vadd.f32 %v84, %v93
    %v99 = vld [vmem:[%s5] sm:$0x3]
    %v104 = vlaneseq
    %v105 = vand.u32 %v104, 127
    %v106 = vlaneseq
    %v107 = vshrl.u32 %v106, 7
    %v108 = vsub.s32 %v105, %v107
    %v109 = vrot.slane %v95, %v108
    %v110 = vadd.s32 %v105, 4294967288
    %v111 = vlaneseq
    %v112 = vshrl.u32 %v111, 7
    %v113 = vsub.s32 %v110, %v112
    %v114 = vrot.slane %v96, %v113
    %vm115 = vcmask 130112
    %v116 = vsel %vm115, %v114, %v109
    %v117 = vlaneseq
    %v118 = vshrl.u32 %v117, 7
    %v119 = vsub.s32 %v105, %v118
    %v120 = vrot.slane %v97, %v119
    %v121 = vlaneseq
    %v122 = vshrl.u32 %v121, 7
    %v123 = vsub.s32 %v110, %v122
    %v124 = vrot.slane %v98, %v123
    %v125 = vsel %vm115, %v124, %v120
    %vm126 = vcmask 1041409
    %v127 = vsel %vm126, %v125, %v116
    %v129 = vmul.f32 %v99, %v127
    %v130 = vsub.f32 1.0, %v99
    %v131 = vmul.f32 %v130, -1e+30
    %v132 = vadd.f32 %v129, %v131
    %vm133 = vcmask 91136
    %v134 = vsel %vm133, %v132, -inf
    %135 = vmax.xlane.f32.xlu0 %v134
    %v136 = vpop.xlane.xlu0 %135
    %v137 = vsub.f32 %v132, %v136
    %v138 = vmul.f32 %v137, 1.442695
    %v139 = vpow.pop %v138
    %v140 = vsel %vm133, %v139, 0.0
    %141 = vadd.xlane.f32.xlu0 %v140
    %v142 = vpop.xlane.xlu0 %141
    %v143 = vlog2.pop %v142
    %v144 = vmul.f32 %v143, 0.6931472
    %v145 = vadd.f32 %v144, %v136
    %v146 = vsub.f32 %v132, %v145
    %147 = vst.msk [vmem:[#allocation3] sm:$0x3] %vm133, %v146
    // Predicated region
    $region26: #{bidaf_forward.26} parent=1 // pred_check
      _
    $region27: #{bidaf_forward.26} parent=1 // pred_check_branch
      %149 = sbr.rel (0) target = $region29
    $region28: #{bidaf_forward.26} parent=1 // pred_region
      %s151 = ssub.s32 32, 32
      %152 = vsyncadd [#allocation4], %s151
      %s154 = sshll.u32 [#allocation3], 4
      %s155 = int_to_ptr.vmem [resolvable:$true] %s154
      %157 = dma.vmem_to_hbm [thread:$0]  %s155, 32, %s6, [#allocation4]
    $region29: #{bidaf_forward.26} parent=1 // pred_fallthru
      _
    // Predicated region
    $region30: #{bidaf_forward.26} parent=1 // pred_check
      _
    $region31: #{bidaf_forward.26} parent=1 // pred_check_branch
      %159 = sbr.rel (0) target = $region33
    $region32: #{bidaf_forward.26} parent=1 // pred_region
      %160 = dma.done [#allocation4], 32
    $region33: #{bidaf_forward.26} parent=1 // pred_fallthru
      _
    %161 = vsyncpa [#allocation4], 1

</llo_original>
